<compile_context>
chip_gen: v5e
topology: v5e:2x2
jax: 0.10.0
libtpu: 0.0.40
codegen_flags: <defaults>
</compile_context>

<pallas_src>
import numpy as np
import jax
import jax.numpy as jnp
from jax import lax
from jax.experimental import pallas as pl
from jax.experimental.pallas import tpu as pltpu


# ---------------------------------------------------------------------------
# Fused residual-block kernel (one batch tile per grid step)
# ---------------------------------------------------------------------------
def _make_block_kernel(stride, B, Ho, Wo, Cin, Fp, sc_off, n_x):
    M = B * Ho * Wo

    def kernel(*refs):
        x_refs = refs[:n_x]
        w1_ref, b1_ref, w2_ref, b2_ref, o_ref, o1_ref = refs[n_x:]

        # ---- conv1 (3x3, stride) as ONE im2col matmul + bn1(folded) + relu1 ----
        taps = []
        for kh in range(3):
            for kw in range(3):
                if stride == 1:
                    t = x_refs[0][:, kh:kh + Ho, kw:kw + Wo, :]
                else:  # stride == 2: parity phases -> unit-stride static windows
                    ph = x_refs[(kh % 2) * 2 + (kw % 2)]
                    t = ph[:, kh // 2:kh // 2 + Ho, kw // 2:kw // 2 + Wo, :]
                taps.append(t.reshape(M, Cin))
        cols1 = jnp.concatenate(taps, axis=-1)                       # (M, 9*Cin) bf16
        acc1 = jnp.dot(cols1, w1_ref[...], preferred_element_type=jnp.float32)
        out1 = jnp.maximum(acc1 + b1_ref[...], 0.0).astype(jnp.bfloat16)

        # ---- keep conv1 activation on-chip; zero ONLY the 1-pixel halo border ----
        zrow = jnp.zeros((B, 1, Wo + 2, Fp), jnp.bfloat16)
        zcol = jnp.zeros((B, Ho, 1, Fp), jnp.bfloat16)
        o1_ref[:, 0:1, :, :] = zrow
        o1_ref[:, Ho + 1:Ho + 2, :, :] = zrow
        o1_ref[:, 1:Ho + 1, 0:1, :] = zcol
        o1_ref[:, 1:Ho + 1, Wo + 1:Wo + 2, :] = zcol
        o1_ref[:, 1:Ho + 1, 1:Wo + 1, :] = out1.reshape(B, Ho, Wo, Fp)

        # ---- conv2 (3x3, stride 1) as ONE im2col matmul + bn2(folded) ----
        taps2 = [o1_ref[:, kh:kh + Ho, kw:kw + Wo, :].reshape(M, Fp)
                 for kh in range(3) for kw in range(3)]
        cols2 = jnp.concatenate(taps2, axis=-1)                      # (M, 9*Fp) bf16
        acc2 = jnp.dot(cols2, w2_ref[...], preferred_element_type=jnp.float32)
        acc2 = acc2 + b2_ref[...]

        # ---- shortcut derived from VMEM-resident input (no extra HBM stream) ----
        if stride == 1:
            sc = x_refs[0][:, 1:Ho + 1, 1:Wo + 1, :]                 # identity
        else:
            sc = x_refs[3][:, 0:Ho, 0:Wo, :]                         # phase (1,1) == x[::2, ::2]
        sc = sc.reshape(M, Cin).astype(jnp.float32)
        parts = []
        if sc_off > 0:
            parts.append(jnp.zeros((M, sc_off), jnp.float32))
        parts.append(sc)
        tail = Fp - sc_off - Cin
        if tail > 0:
            parts.append(jnp.zeros((M, tail), jnp.float32))
        sc_full = parts[0] if len(parts) == 1 else jnp.concatenate(parts, axis=-1)

        res = jnp.maximum(acc2 + sc_full, 0.0)
        o_ref[...] = res.reshape(B, Ho, Wo, Fp).astype(o_ref.dtype)

    return kernel


# ---------------------------------------------------------------------------
# Wrapper: BN folding, stride handling, batch tiling, pallas_call plumbing
# ---------------------------------------------------------------------------
def _fold_bn(gamma, beta, mean, var, eps=1e-5):
    scale = gamma / jnp.sqrt(var + eps)
    return scale, beta - mean * scale


def _round_up(v, m):
    return (v + m - 1) // m * m


def _pick_batch_tile(n, ho, wo, m_cap=2048):
    """Largest divisor of n keeping per-step output pixels <= m_cap (VMEM budget)."""
    best = 1
    for bt in range(1, n + 1):
        if n % bt == 0 and bt * ho * wo <= m_cap:
            best = bt
    return best


def res_basic_block_forward(params, x_nchw, inplanes, planes, stride):
    """Pallas implementation of ResBasicBlock.forward (NCHW in / NCHW out, f32)."""
    if stride not in (1, 2):
        raise NotImplementedError("ResNet-56 basic blocks use stride 1 or 2")
    if stride == 1 and inplanes != planes:
        raise NotImplementedError("stride-1 blocks assume identity shortcut (inplanes == planes)")

    N, Cin, H, W = x_nchw.shape
    assert Cin == inplanes
    Ho = (H + 2 - 3) // stride + 1
    Wo = (W + 2 - 3) // stride + 1
    Fp = _round_up(max(planes, 128), 128)             # lane-dense output channels

    # fold BN (inference / running stats) into conv weights + a single bias
    s1, b1 = _fold_bn(params["bn1_gamma"], params["bn1_beta"],
                      params["bn1_mean"], params["bn1_var"])
    s2, b2 = _fold_bn(params["bn2_gamma"], params["bn2_beta"],
                      params["bn2_mean"], params["bn2_var"])
    w1 = jnp.transpose(params["conv1_w"], (2, 3, 1, 0)) * s1          # (3,3,Cin,planes)
    w2 = jnp.transpose(params["conv2_w"], (2, 3, 1, 0)) * s2          # (3,3,planes,planes)
    w1 = jnp.pad(w1, ((0, 0), (0, 0), (0, 0), (0, Fp - planes)))
    w2 = jnp.pad(w2, ((0, 0), (0, 0), (0, Fp - planes), (0, Fp - planes)))
    w1 = w1.reshape(9 * Cin, Fp).astype(jnp.bfloat16)                 # im2col weight, conv1
    w2 = w2.reshape(9 * Fp, Fp).astype(jnp.bfloat16)                  # im2col weight, conv2
    b1 = jnp.pad(b1, (0, Fp - planes)).reshape(1, Fp).astype(jnp.float32)
    b2 = jnp.pad(b2, (0, Fp - planes)).reshape(1, Fp).astype(jnp.float32)

    # input preprocessing: bf16 FIRST, then NHWC transpose + 1-pixel spatial pad
    x = jnp.transpose(x_nchw.astype(jnp.bfloat16), (0, 2, 3, 1))      # (N,H,W,Cin) bf16
    xb = jnp.pad(x, ((0, 0), (1, 1), (1, 1), (0, 0)))
    if stride == 1:
        x_inputs = [xb]                                               # (N, H+2, W+2, Cin)
        sc_off = 0
    else:
        assert H % 2 == 0 and W % 2 == 0, "stride-2 path assumes even spatial dims"
        # 4 parity phases -> every in-kernel tap is a contiguous unit-stride window
        x_inputs = [xb[:, a::2, b::2, :] for a in (0, 1) for b in (0, 1)]
        sc_off = planes // 4
        assert planes - inplanes - sc_off >= 0, "shortcut channel padding would be negative"
    Hx, Wx = x_inputs[0].shape[1], x_inputs[0].shape[2]

    B_tile = _pick_batch_tile(N, Ho, Wo)
    kernel = _make_block_kernel(stride, B_tile, Ho, Wo, Cin, Fp, sc_off, len(x_inputs))

    in_specs = ([pl.BlockSpec((B_tile, Hx, Wx, Cin), lambda b: (b, 0, 0, 0))
                 for _ in x_inputs] +
                [pl.BlockSpec((9 * Cin, Fp), lambda b: (0, 0)),        # w1 (VMEM resident)
                 pl.BlockSpec((1, Fp), lambda b: (0, 0)),              # b1 (VMEM resident)
                 pl.BlockSpec((9 * Fp, Fp), lambda b: (0, 0)),         # w2 (VMEM resident)
                 pl.BlockSpec((1, Fp), lambda b: (0, 0))])             # b2 (VMEM resident)

    out = pl.pallas_call(
        kernel,
        out_shape=jax.ShapeDtypeStruct((N, Ho, Wo, Fp), jnp.bfloat16),
        grid_spec=pltpu.PrefetchScalarGridSpec(
            num_scalar_prefetch=0,
            grid=(N // B_tile,),
            in_specs=in_specs,
            out_specs=pl.BlockSpec((B_tile, Ho, Wo, Fp), lambda b: (b, 0, 0, 0)),
            scratch_shapes=[pltpu.VMEM((B_tile, Ho + 2, Wo + 2, Fp), jnp.bfloat16)],
        ),
        compiler_params=pltpu.CompilerParams(
            dimension_semantics=("parallel",),        # batch tiles are independent
            vmem_limit_bytes=32 * 1024 * 1024,
        ),
    )(*x_inputs, w1, b1, w2, b2)

    # single fused XLA epilogue: drop lane padding, cast, back to NCHW (module layout)
    out = out[..., :planes].astype(jnp.float32)
    return jnp.transpose(out, (0, 3, 1, 2))


# ---------------------------------------------------------------------------
# Pure-JAX reference (lax.conv, f32) for correctness checking
# ---------------------------------------------------------------------------
def ref_forward(params, x_nchw, inplanes, planes, stride):
    def conv(x, w, s):
        return lax.conv_general_dilated(
            x, w, (s, s), ((1, 1), (1, 1)),
            dimension_numbers=("NCHW", "OIHW", "NCHW"))

    def bn(x, gamma, beta, mean, var, eps=1e-5):
        sh = (1, -1, 1, 1)
        return (x - mean.reshape(sh)) / jnp.sqrt(var.reshape(sh) + eps) \
               * gamma.reshape(sh) + beta.reshape(sh)

    out = conv(x_nchw, params["conv1_w"], stride)
    out = jnp.maximum(bn(out, params["bn1_gamma"], params["bn1_beta"],
                         params["bn1_mean"], params["bn1_var"]), 0.0)
    out = conv(out, params["conv2_w"], 1)
    out = bn(out, params["bn2_gamma"], params["bn2_beta"],
             params["bn2_mean"], params["bn2_var"])
    if stride != 1 or inplanes != planes:
        sc = x_nchw[:, :, ::2, ::2]
        sc = jnp.pad(sc, ((0, 0),
                          (planes // 4, planes - inplanes - planes // 4),
                          (0, 0), (0, 0)))
    else:
        sc = x_nchw
    return jnp.maximum(out + sc, 0.0)


# ---------------------------------------------------------------------------
# Deterministic synthetic parameters (matches module __init__ shapes)
# ---------------------------------------------------------------------------
def init_params(key, inplanes, planes):
    ks = jax.random.split(key, 10)
    return {
        "conv1_w": 0.1 * jax.random.normal(ks[0], (planes, inplanes, 3, 3), jnp.float32),
        "bn1_gamma": 1.0 + 0.1 * jax.random.normal(ks[1], (planes,), jnp.float32),
        "bn1_beta": 0.1 * jax.random.normal(ks[2], (planes,), jnp.float32),
        "bn1_mean": 0.1 * jax.random.normal(ks[3], (planes,), jnp.float32),
        "bn1_var": jax.random.uniform(ks[4], (planes,), jnp.float32, 0.5, 1.5),
        "conv2_w": 0.1 * jax.random.normal(ks[5], (planes, planes, 3, 3), jnp.float32),
        "bn2_gamma": 1.0 + 0.1 * jax.random.normal(ks[6], (planes,), jnp.float32),
        "bn2_beta": 0.1 * jax.random.normal(ks[7], (planes,), jnp.float32),
        "bn2_mean": 0.1 * jax.random.normal(ks[8], (planes,), jnp.float32),
        "bn2_var": jax.random.uniform(ks[9], (planes,), jnp.float32, 0.5, 1.5),
    }


if __name__ == "__main__":
    key = jax.random.PRNGKey(0)
    k1, k2, k3, k4 = jax.random.split(key, 4)

    # Config A: projection/padded shortcut (stride 2, channel expansion).
    inplanes, planes, stride = 4, 8, 2
    params = init_params(k1, inplanes, planes)
    x = jax.random.normal(k2, (2, inplanes, 16, 16), jnp.float32)        # NCHW
    out = jax.block_until_ready(
        res_basic_block_forward(params, x, inplanes, planes, stride))
    ref = jax.block_until_ready(ref_forward(params, x, inplanes, planes, stride))
    assert out.shape == (2, planes, 8, 8), out.shape
    np.testing.assert_allclose(np.asarray(out), np.asarray(ref), atol=5e-2, rtol=5e-2)

    # Config B: identity shortcut (stride 1, same channel count).
    inplanes2, planes2, stride2 = 8, 8, 1
    params2 = init_params(k3, inplanes2, planes2)
    x2 = jax.random.normal(k4, (2, inplanes2, 16, 16), jnp.float32)
    out2 = jax.block_until_ready(
        res_basic_block_forward(params2, x2, inplanes2, planes2, stride2))
    ref2 = jax.block_until_ready(ref_forward(params2, x2, inplanes2, planes2, stride2))
    assert out2.shape == (2, planes2, 16, 16), out2.shape
    np.testing.assert_allclose(np.asarray(out2), np.asarray(ref2), atol=5e-2, rtol=5e-2)

    print("KERNEL_OK")
</pallas_src>

<mosaic_0001>
module attributes {stable_mosaic.version = 11 : i64} {
  func.func @kernel(%arg0: i32, %arg1: memref<2x9x9x4xbf16, #tpu.memory_space<vmem>>, %arg2: memref<2x9x9x4xbf16, #tpu.memory_space<vmem>>, %arg3: memref<2x9x9x4xbf16, #tpu.memory_space<vmem>>, %arg4: memref<2x9x9x4xbf16, #tpu.memory_space<vmem>>, %arg5: memref<36x128xbf16, #tpu.memory_space<vmem>>, %arg6: memref<1x128xf32, #tpu.memory_space<vmem>>, %arg7: memref<1152x128xbf16, #tpu.memory_space<vmem>>, %arg8: memref<1x128xf32, #tpu.memory_space<vmem>>, %arg9: memref<2x8x8x128xbf16, #tpu.memory_space<vmem>>, %arg10: memref<2x10x10x128xbf16, #tpu.memory_space<vmem>>) attributes {dimension_semantics = [#tpu.dimension_semantics<parallel>], iteration_bounds = array<i64: 1>, scalar_prefetch = 0 : i64, scratch_operands = 1 : i64, tpu.core_type = #tpu.core_type<tc>, window_params = [{transform_indices = @transform_0, window_bounds = array<i64: 2, 9, 9, 4>}, {transform_indices = @transform_1, window_bounds = array<i64: 2, 9, 9, 4>}, {transform_indices = @transform_2, window_bounds = array<i64: 2, 9, 9, 4>}, {transform_indices = @transform_3, window_bounds = array<i64: 2, 9, 9, 4>}, {pipeline_mode = #tpu.pipeline_mode<synchronous>, transform_indices = @transform_4, window_bounds = array<i64: 36, 128>}, {pipeline_mode = #tpu.pipeline_mode<synchronous>, transform_indices = @transform_5, window_bounds = array<i64: 1, 128>}, {pipeline_mode = #tpu.pipeline_mode<synchronous>, transform_indices = @transform_6, window_bounds = array<i64: 1152, 128>}, {pipeline_mode = #tpu.pipeline_mode<synchronous>, transform_indices = @transform_7, window_bounds = array<i64: 1, 128>}, {transform_indices = @transform_8, window_bounds = array<i64: 2, 8, 8, 128>}]} {
    %c0 = arith.constant 0 : index
    %c0_0 = arith.constant 0 : index
    %c0_1 = arith.constant 0 : index
    %c0_2 = arith.constant 0 : index
    %0 = vector.load %arg1[%c0, %c0_0, %c0_1, %c0_2] : memref<2x9x9x4xbf16, #tpu.memory_space<vmem>>, vector<2x8x8x4xbf16>
    %1 = vector.shape_cast %0 : vector<2x8x8x4xbf16> to vector<128x4xbf16>
    %c0_3 = arith.constant 0 : index
    %c0_4 = arith.constant 0 : index
    %c0_5 = arith.constant 0 : index
    %c0_6 = arith.constant 0 : index
    %2 = vector.load %arg2[%c0_3, %c0_4, %c0_5, %c0_6] : memref<2x9x9x4xbf16, #tpu.memory_space<vmem>>, vector<2x8x8x4xbf16>
    %3 = vector.shape_cast %2 : vector<2x8x8x4xbf16> to vector<128x4xbf16>
    %c0_7 = arith.constant 0 : index
    %c0_8 = arith.constant 0 : index
    %c1 = arith.constant 1 : index
    %c0_9 = arith.constant 0 : index
    %4 = vector.load %arg1[%c0_7, %c0_8, %c1, %c0_9] : memref<2x9x9x4xbf16, #tpu.memory_space<vmem>>, vector<2x8x8x4xbf16>
    %5 = vector.shape_cast %4 : vector<2x8x8x4xbf16> to vector<128x4xbf16>
    %c0_10 = arith.constant 0 : index
    %c0_11 = arith.constant 0 : index
    %c0_12 = arith.constant 0 : index
    %c0_13 = arith.constant 0 : index
    %6 = vector.load %arg3[%c0_10, %c0_11, %c0_12, %c0_13] : memref<2x9x9x4xbf16, #tpu.memory_space<vmem>>, vector<2x8x8x4xbf16>
    %7 = vector.shape_cast %6 : vector<2x8x8x4xbf16> to vector<128x4xbf16>
    %c0_14 = arith.constant 0 : index
    %c0_15 = arith.constant 0 : index
    %c0_16 = arith.constant 0 : index
    %c0_17 = arith.constant 0 : index
    %8 = vector.load %arg4[%c0_14, %c0_15, %c0_16, %c0_17] : memref<2x9x9x4xbf16, #tpu.memory_space<vmem>>, vector<2x8x8x4xbf16>
    %9 = vector.shape_cast %8 : vector<2x8x8x4xbf16> to vector<128x4xbf16>
    %c0_18 = arith.constant 0 : index
    %c0_19 = arith.constant 0 : index
    %c1_20 = arith.constant 1 : index
    %c0_21 = arith.constant 0 : index
    %10 = vector.load %arg3[%c0_18, %c0_19, %c1_20, %c0_21] : memref<2x9x9x4xbf16, #tpu.memory_space<vmem>>, vector<2x8x8x4xbf16>
    %11 = vector.shape_cast %10 : vector<2x8x8x4xbf16> to vector<128x4xbf16>
    %c0_22 = arith.constant 0 : index
    %c1_23 = arith.constant 1 : index
    %c0_24 = arith.constant 0 : index
    %c0_25 = arith.constant 0 : index
    %12 = vector.load %arg1[%c0_22, %c1_23, %c0_24, %c0_25] : memref<2x9x9x4xbf16, #tpu.memory_space<vmem>>, vector<2x8x8x4xbf16>
    %13 = vector.shape_cast %12 : vector<2x8x8x4xbf16> to vector<128x4xbf16>
    %c0_26 = arith.constant 0 : index
    %c1_27 = arith.constant 1 : index
    %c0_28 = arith.constant 0 : index
    %c0_29 = arith.constant 0 : index
    %14 = vector.load %arg2[%c0_26, %c1_27, %c0_28, %c0_29] : memref<2x9x9x4xbf16, #tpu.memory_space<vmem>>, vector<2x8x8x4xbf16>
    %15 = vector.shape_cast %14 : vector<2x8x8x4xbf16> to vector<128x4xbf16>
    %c0_30 = arith.constant 0 : index
    %c1_31 = arith.constant 1 : index
    %c1_32 = arith.constant 1 : index
    %c0_33 = arith.constant 0 : index
    %16 = vector.load %arg1[%c0_30, %c1_31, %c1_32, %c0_33] : memref<2x9x9x4xbf16, #tpu.memory_space<vmem>>, vector<2x8x8x4xbf16>
    %17 = vector.shape_cast %16 : vector<2x8x8x4xbf16> to vector<128x4xbf16>
    %18 = tpu.concatenate %1, %3, %5, %7, %9, %11, %13, %15, %17 in 1 : vector<128x4xbf16>, vector<128x4xbf16>, vector<128x4xbf16>, vector<128x4xbf16>, vector<128x4xbf16>, vector<128x4xbf16>, vector<128x4xbf16>, vector<128x4xbf16>, vector<128x4xbf16> -> vector<128x36xbf16>
    %c0_34 = arith.constant 0 : index
    %c0_35 = arith.constant 0 : index
    %19 = vector.load %arg5[%c0_34, %c0_35] : memref<36x128xbf16, #tpu.memory_space<vmem>>, vector<36x128xbf16>
    %cst = arith.constant dense<0.000000e+00> : vector<128x128xf32>
    %20 = tpu.matmul %18, %19, %cst {dimension_numbers = #tpu.dot_dimension_numbers<[1], [0], [0], [1], [0, 0, 1, 1], [], []>} : vector<128x36xbf16>, vector<36x128xbf16>, vector<128x128xf32> -> vector<128x128xf32>
    %c0_36 = arith.constant 0 : index
    %c0_37 = arith.constant 0 : index
    %21 = vector.load %arg6[%c0_36, %c0_37] : memref<1x128xf32, #tpu.memory_space<vmem>>, vector<1x128xf32>
    %22 = vector.broadcast %21 : vector<1x128xf32> to vector<128x128xf32>
    %23 = arith.addf %20, %22 : vector<128x128xf32>
    %cst_38 = arith.constant 0.000000e+00 : f32
    %24 = vector.broadcast %cst_38 : f32 to vector<128x128xf32>
    %25 = arith.maximumf %23, %24 : vector<128x128xf32>
    %26 = arith.truncf %25 : vector<128x128xf32> to vector<128x128xbf16>
    %cst_39 = arith.constant 0.000000e+00 : bf16
    %27 = vector.broadcast %cst_39 : bf16 to vector<2x1x10x128xbf16>
    %cst_40 = arith.constant 0.000000e+00 : bf16
    %28 = vector.broadcast %cst_40 : bf16 to vector<2x8x1x128xbf16>
    %c0_41 = arith.constant 0 : index
    %c0_42 = arith.constant 0 : index
    %c0_43 = arith.constant 0 : index
    %c0_44 = arith.constant 0 : index
    %29 = vector.load %arg10[%c0_41, %c0_42, %c0_43, %c0_44] : memref<2x10x10x128xbf16, #tpu.memory_space<vmem>>, vector<2x1x10x128xbf16>
    tpu.vector_store %arg10[%c0_41, %c0_42, %c0_43, %c0_44], %27 {strides = array<i32>} : memref<2x10x10x128xbf16, #tpu.memory_space<vmem>>, vector<2x1x10x128xbf16>,
    %c0_45 = arith.constant 0 : index
    %c9 = arith.constant 9 : index
    %c0_46 = arith.constant 0 : index
    %c0_47 = arith.constant 0 : index
    %30 = vector.load %arg10[%c0_45, %c9, %c0_46, %c0_47] : memref<2x10x10x128xbf16, #tpu.memory_space<vmem>>, vector<2x1x10x128xbf16>
    tpu.vector_store %arg10[%c0_45, %c9, %c0_46, %c0_47], %27 {strides = array<i32>} : memref<2x10x10x128xbf16, #tpu.memory_space<vmem>>, vector<2x1x10x128xbf16>,
    %c0_48 = arith.constant 0 : index
    %c1_49 = arith.constant 1 : index
    %c0_50 = arith.constant 0 : index
    %c0_51 = arith.constant 0 : index
    %31 = vector.load %arg10[%c0_48, %c1_49, %c0_50, %c0_51] : memref<2x10x10x128xbf16, #tpu.memory_space<vmem>>, vector<2x8x1x128xbf16>
    tpu.vector_store %arg10[%c0_48, %c1_49, %c0_50, %c0_51], %28 {strides = array<i32>} : memref<2x10x10x128xbf16, #tpu.memory_space<vmem>>, vector<2x8x1x128xbf16>,
    %c0_52 = arith.constant 0 : index
    %c1_53 = arith.constant 1 : index
    %c9_54 = arith.constant 9 : index
    %c0_55 = arith.constant 0 : index
    %32 = vector.load %arg10[%c0_52, %c1_53, %c9_54, %c0_55] : memref<2x10x10x128xbf16, #tpu.memory_space<vmem>>, vector<2x8x1x128xbf16>
    tpu.vector_store %arg10[%c0_52, %c1_53, %c9_54, %c0_55], %28 {strides = array<i32>} : memref<2x10x10x128xbf16, #tpu.memory_space<vmem>>, vector<2x8x1x128xbf16>,
    %33 = vector.shape_cast %26 : vector<128x128xbf16> to vector<2x8x8x128xbf16>
    %c0_56 = arith.constant 0 : index
    %c1_57 = arith.constant 1 : index
    %c1_58 = arith.constant 1 : index
    %c0_59 = arith.constant 0 : index
    %34 = vector.load %arg10[%c0_56, %c1_57, %c1_58, %c0_59] : memref<2x10x10x128xbf16, #tpu.memory_space<vmem>>, vector<2x8x8x128xbf16>
    tpu.vector_store %arg10[%c0_56, %c1_57, %c1_58, %c0_59], %33 {strides = array<i32>} : memref<2x10x10x128xbf16, #tpu.memory_space<vmem>>, vector<2x8x8x128xbf16>,
    %c0_60 = arith.constant 0 : index
    %c0_61 = arith.constant 0 : index
    %c0_62 = arith.constant 0 : index
    %c0_63 = arith.constant 0 : index
    %35 = vector.load %arg10[%c0_60, %c0_61, %c0_62, %c0_63] : memref<2x10x10x128xbf16, #tpu.memory_space<vmem>>, vector<2x8x8x128xbf16>
    %36 = vector.shape_cast %35 : vector<2x8x8x128xbf16> to vector<128x128xbf16>
    %c0_64 = arith.constant 0 : index
    %c0_65 = arith.constant 0 : index
    %c1_66 = arith.constant 1 : index
    %c0_67 = arith.constant 0 : index
    %37 = vector.load %arg10[%c0_64, %c0_65, %c1_66, %c0_67] : memref<2x10x10x128xbf16, #tpu.memory_space<vmem>>, vector<2x8x8x128xbf16>
    %38 = vector.shape_cast %37 : vector<2x8x8x128xbf16> to vector<128x128xbf16>
    %c0_68 = arith.constant 0 : index
    %c0_69 = arith.constant 0 : index
    %c2 = arith.constant 2 : index
    %c0_70 = arith.constant 0 : index
    %39 = vector.load %arg10[%c0_68, %c0_69, %c2, %c0_70] : memref<2x10x10x128xbf16, #tpu.memory_space<vmem>>, vector<2x8x8x128xbf16>
    %40 = vector.shape_cast %39 : vector<2x8x8x128xbf16> to vector<128x128xbf16>
    %c0_71 = arith.constant 0 : index
    %c1_72 = arith.constant 1 : index
    %c0_73 = arith.constant 0 : index
    %c0_74 = arith.constant 0 : index
    %41 = vector.load %arg10[%c0_71, %c1_72, %c0_73, %c0_74] : memref<2x10x10x128xbf16, #tpu.memory_space<vmem>>, vector<2x8x8x128xbf16>
    %42 = vector.shape_cast %41 : vector<2x8x8x128xbf16> to vector<128x128xbf16>
    %c0_75 = arith.constant 0 : index
    %c1_76 = arith.constant 1 : index
    %c1_77 = arith.constant 1 : index
    %c0_78 = arith.constant 0 : index
    %43 = vector.load %arg10[%c0_75, %c1_76, %c1_77, %c0_78] : memref<2x10x10x128xbf16, #tpu.memory_space<vmem>>, vector<2x8x8x128xbf16>
    %44 = vector.shape_cast %43 : vector<2x8x8x128xbf16> to vector<128x128xbf16>
    %c0_79 = arith.constant 0 : index
    %c1_80 = arith.constant 1 : index
    %c2_81 = arith.constant 2 : index
    %c0_82 = arith.constant 0 : index
    %45 = vector.load %arg10[%c0_79, %c1_80, %c2_81, %c0_82] : memref<2x10x10x128xbf16, #tpu.memory_space<vmem>>, vector<2x8x8x128xbf16>
    %46 = vector.shape_cast %45 : vector<2x8x8x128xbf16> to vector<128x128xbf16>
    %c0_83 = arith.constant 0 : index
    %c2_84 = arith.constant 2 : index
    %c0_85 = arith.constant 0 : index
    %c0_86 = arith.constant 0 : index
    %47 = vector.load %arg10[%c0_83, %c2_84, %c0_85, %c0_86] : memref<2x10x10x128xbf16, #tpu.memory_space<vmem>>, vector<2x8x8x128xbf16>
    %48 = vector.shape_cast %47 : vector<2x8x8x128xbf16> to vector<128x128xbf16>
    %c0_87 = arith.constant 0 : index
    %c2_88 = arith.constant 2 : index
    %c1_89 = arith.constant 1 : index
    %c0_90 = arith.constant 0 : index
    %49 = vector.load %arg10[%c0_87, %c2_88, %c1_89, %c0_90] : memref<2x10x10x128xbf16, #tpu.memory_space<vmem>>, vector<2x8x8x128xbf16>
    %50 = vector.shape_cast %49 : vector<2x8x8x128xbf16> to vector<128x128xbf16>
    %c0_91 = arith.constant 0 : index
    %c2_92 = arith.constant 2 : index
    %c2_93 = arith.constant 2 : index
    %c0_94 = arith.constant 0 : index
    %51 = vector.load %arg10[%c0_91, %c2_92, %c2_93, %c0_94] : memref<2x10x10x128xbf16, #tpu.memory_space<vmem>>, vector<2x8x8x128xbf16>
    %52 = vector.shape_cast %51 : vector<2x8x8x128xbf16> to vector<128x128xbf16>
    %53 = tpu.concatenate %36, %38, %40, %42, %44, %46, %48, %50, %52 in 1 : vector<128x128xbf16>, vector<128x128xbf16>, vector<128x128xbf16>, vector<128x128xbf16>, vector<128x128xbf16>, vector<128x128xbf16>, vector<128x128xbf16>, vector<128x128xbf16>, vector<128x128xbf16> -> vector<128x1152xbf16>
    %c0_95 = arith.constant 0 : index
    %c0_96 = arith.constant 0 : index
    %54 = vector.load %arg7[%c0_95, %c0_96] : memref<1152x128xbf16, #tpu.memory_space<vmem>>, vector<1152x128xbf16>
    %cst_97 = arith.constant dense<0.000000e+00> : vector<128x128xf32>
    %55 = tpu.matmul %53, %54, %cst_97 {dimension_numbers = #tpu.dot_dimension_numbers<[1], [0], [0], [1], [0, 0, 1, 1], [], []>} : vector<128x1152xbf16>, vector<1152x128xbf16>, vector<128x128xf32> -> vector<128x128xf32>
    %c0_98 = arith.constant 0 : index
    %c0_99 = arith.constant 0 : index
    %56 = vector.load %arg8[%c0_98, %c0_99] : memref<1x128xf32, #tpu.memory_space<vmem>>, vector<1x128xf32>
    %57 = vector.broadcast %56 : vector<1x128xf32> to vector<128x128xf32>
    %58 = arith.addf %55, %57 : vector<128x128xf32>
    %c0_100 = arith.constant 0 : index
    %c0_101 = arith.constant 0 : index
    %c0_102 = arith.constant 0 : index
    %c0_103 = arith.constant 0 : index
    %59 = vector.load %arg4[%c0_100, %c0_101, %c0_102, %c0_103] : memref<2x9x9x4xbf16, #tpu.memory_space<vmem>>, vector<2x8x8x4xbf16>
    %60 = vector.shape_cast %59 : vector<2x8x8x4xbf16> to vector<128x4xbf16>
    %61 = arith.extf %60 : vector<128x4xbf16> to vector<128x4xf32>
    %cst_104 = arith.constant 0.000000e+00 : f32
    %62 = vector.broadcast %cst_104 : f32 to vector<128x2xf32>
    %cst_105 = arith.constant 0.000000e+00 : f32
    %63 = vector.broadcast %cst_105 : f32 to vector<128x122xf32>
    %64 = tpu.concatenate %62, %61, %63 in 1 : vector<128x2xf32>, vector<128x4xf32>, vector<128x122xf32> -> vector<128x128xf32>
    %65 = arith.addf %58, %64 : vector<128x128xf32>
    %cst_106 = arith.constant 0.000000e+00 : f32
    %66 = vector.broadcast %cst_106 : f32 to vector<128x128xf32>
    %67 = arith.maximumf %65, %66 : vector<128x128xf32>
    %68 = vector.shape_cast %67 : vector<128x128xf32> to vector<2x8x8x128xf32>
    %69 = arith.truncf %68 : vector<2x8x8x128xf32> to vector<2x8x8x128xbf16>
    %c0_107 = arith.constant 0 : index
    %c0_108 = arith.constant 0 : index
    %c0_109 = arith.constant 0 : index
    %c0_110 = arith.constant 0 : index
    %70 = vector.load %arg9[%c0_107, %c0_108, %c0_109, %c0_110] : memref<2x8x8x128xbf16, #tpu.memory_space<vmem>>, vector<2x8x8x128xbf16>
    tpu.vector_store %arg9[%c0_107, %c0_108, %c0_109, %c0_110], %69 {strides = array<i32>} : memref<2x8x8x128xbf16, #tpu.memory_space<vmem>>, vector<2x8x8x128xbf16>,
    return
  }
  func.func @transform_0(%arg0: i32) -> (i32, i32, i32, i32) {
    %c0_i32 = arith.constant 0 : i32
    %c0_i32_0 = arith.constant 0 : i32
    %c0_i32_1 = arith.constant 0 : i32
    %c0_i32_2 = arith.constant 0 : i32
    return %arg0, %c0_i32, %c0_i32_0, %c0_i32_1 : i32, i32, i32, i32
  }
  func.func @transform_1(%arg0: i32) -> (i32, i32, i32, i32) {
    %c0_i32 = arith.constant 0 : i32
    %c0_i32_0 = arith.constant 0 : i32
    %c0_i32_1 = arith.constant 0 : i32
    %c0_i32_2 = arith.constant 0 : i32
    return %arg0, %c0_i32, %c0_i32_0, %c0_i32_1 : i32, i32, i32, i32
  }
  func.func @transform_2(%arg0: i32) -> (i32, i32, i32, i32) {
    %c0_i32 = arith.constant 0 : i32
    %c0_i32_0 = arith.constant 0 : i32
    %c0_i32_1 = arith.constant 0 : i32
    %c0_i32_2 = arith.constant 0 : i32
    return %arg0, %c0_i32, %c0_i32_0, %c0_i32_1 : i32, i32, i32, i32
  }
  func.func @transform_3(%arg0: i32) -> (i32, i32, i32, i32) {
    %c0_i32 = arith.constant 0 : i32
    %c0_i32_0 = arith.constant 0 : i32
    %c0_i32_1 = arith.constant 0 : i32
    %c0_i32_2 = arith.constant 0 : i32
    return %arg0, %c0_i32, %c0_i32_0, %c0_i32_1 : i32, i32, i32, i32
  }
  func.func @transform_4(%arg0: i32) -> (i32, i32) {
    %c0_i32 = arith.constant 0 : i32
    %c0_i32_0 = arith.constant 0 : i32
    %c0_i32_1 = arith.constant 0 : i32
    return %c0_i32, %c0_i32_0 : i32, i32
  }
  func.func @transform_5(%arg0: i32) -> (i32, i32) {
    %c0_i32 = arith.constant 0 : i32
    %c0_i32_0 = arith.constant 0 : i32
    %c0_i32_1 = arith.constant 0 : i32
    return %c0_i32, %c0_i32_0 : i32, i32
  }
  func.func @transform_6(%arg0: i32) -> (i32, i32) {
    %c0_i32 = arith.constant 0 : i32
    %c0_i32_0 = arith.constant 0 : i32
    %c0_i32_1 = arith.constant 0 : i32
    return %c0_i32, %c0_i32_0 : i32, i32
  }
  func.func @transform_7(%arg0: i32) -> (i32, i32) {
    %c0_i32 = arith.constant 0 : i32
    %c0_i32_0 = arith.constant 0 : i32
    %c0_i32_1 = arith.constant 0 : i32
    return %c0_i32, %c0_i32_0 : i32, i32
  }
  func.func @transform_8(%arg0: i32) -> (i32, i32, i32, i32) {
    %c0_i32 = arith.constant 0 : i32
    %c0_i32_0 = arith.constant 0 : i32
    %c0_i32_1 = arith.constant 0 : i32
    %c0_i32_2 = arith.constant 0 : i32
    return %arg0, %c0_i32, %c0_i32_0, %c0_i32_1 : i32, i32, i32, i32
  }
}

</mosaic_0001>

<llo_original>
// kernel: tpu_custom_call.1
$region0: #{tpu_custom_call.1}
  #allocation0 [shape = 'u32[]', space=smem, size = 0x4, offset = 0x4, fixed_abs, tag = 'smem constant byte address 0x4 - core index']
  #allocation1 [shape = 'u32[72,128]{1,0:T(1,128)}', space=vmem, size = 0x9000, scoped, tag = 'internal scratch']
  #allocation2 [shape = 'bf16[2,10,10,128]{3,2,1,0:T(8,128)(2,1)}', space=vmem, size = 0x14000, scoped, tag = 'scratch operand']
  %s0 = inlined_call_operand.vmem [shape: bf16[2,9,9,4], index: 0, kind: input, shape index: {}]
  %s1 = inlined_call_operand.vmem [shape: bf16[2,9,9,4], index: 1, kind: input, shape index: {}]
  %s2 = inlined_call_operand.vmem [shape: bf16[2,9,9,4], index: 2, kind: input, shape index: {}]
  %s3 = inlined_call_operand.vmem [shape: bf16[2,9,9,4], index: 3, kind: input, shape index: {}]
  %s4 = inlined_call_operand.vmem [shape: bf16[36,128], index: 4, kind: input, shape index: {}]
  %s5 = inlined_call_operand.vmem [shape: f32[1,128], index: 5, kind: input, shape index: {}]
  %s6 = inlined_call_operand.hbm [shape: bf16[1152,128], index: 6, kind: input, shape index: {}]
  %s7 = inlined_call_operand.vmem [shape: f32[1,128], index: 7, kind: input, shape index: {}]
  %s8 = inlined_call_operand.hbm [shape: bf16[2,8,8,128], index: 8, kind: output, shape index: {}]
  %s9 = sld [smem:[#allocation0]]
  $region46: #{tpu_custom_call.1} parent=0
    _
  %s11 = ssub.s32 1, %s9
  %s12 = scalar_select 0, %s11, %s9
  $region1: #{tpu_custom_call.1} parent=0
    #allocation3 [shape = 'u8[294912]{0}', space=vmem, size = 0x48000, scoped, tag = 'input window, operand 6, single buffered']
    #allocation4 [shape = 's32[1]{0}', space=sflag, size = 0x4, scoped, tag = 'scoped memory for tpu_custom_call.1']
    #allocation5 [shape = 's32[1]{0}', space=sflag, size = 0x4, scoped, tag = 'scoped memory for tpu_custom_call.1']
    #allocation6 [shape = 'u8[32768]{0}', space=vmem, size = 0x8000, scoped, tag = 'output window, operand 0, single buffered']
    %13 = vsyncpa [#allocation4], 0
    %14 = vsyncpa [#allocation5], 0
    // Predicated region
    $region2: #{tpu_custom_call.1} parent=1 // pred_check
      _
    $region3: #{tpu_custom_call.1} parent=1 // pred_check_branch
      %16 = sbr.rel (0) target = $region5
    $region4: #{tpu_custom_call.1} parent=1 // pred_region
      _
    $region5: #{tpu_custom_call.1} parent=1 // pred_fallthru
      _
    // Predicated region
    $region6: #{tpu_custom_call.1} parent=1 // pred_check
      _
    $region7: #{tpu_custom_call.1} parent=1 // pred_check_branch
      %18 = sbr.rel (0) target = $region9
    $region8: #{tpu_custom_call.1} parent=1 // pred_region
      _
    $region9: #{tpu_custom_call.1} parent=1 // pred_fallthru
      _
    // Predicated region
    $region10: #{tpu_custom_call.1} parent=1 // pred_check
      _
    $region11: #{tpu_custom_call.1} parent=1 // pred_check_branch
      %20 = sbr.rel (0) target = $region13
    $region12: #{tpu_custom_call.1} parent=1 // pred_region
      _
    $region13: #{tpu_custom_call.1} parent=1 // pred_fallthru
      _
    // Predicated region
    $region14: #{tpu_custom_call.1} parent=1 // pred_check
      _
    $region15: #{tpu_custom_call.1} parent=1 // pred_check_branch
      %22 = sbr.rel (0) target = $region17
    $region16: #{tpu_custom_call.1} parent=1 // pred_region
      _
    $region17: #{tpu_custom_call.1} parent=1 // pred_fallthru
      _
    // Predicated region
    $region18: #{tpu_custom_call.1} parent=1 // pred_check
      _
    $region19: #{tpu_custom_call.1} parent=1 // pred_check_branch
      %24 = sbr.rel (0) target = $region21
    $region20: #{tpu_custom_call.1} parent=1 // pred_region
      _
    $region21: #{tpu_custom_call.1} parent=1 // pred_fallthru
      _
    // Predicated region
    $region22: #{tpu_custom_call.1} parent=1 // pred_check
      _
    $region23: #{tpu_custom_call.1} parent=1 // pred_check_branch
      %26 = sbr.rel (0) target = $region25
    $region24: #{tpu_custom_call.1} parent=1 // pred_region
      _
    $region25: #{tpu_custom_call.1} parent=1 // pred_fallthru
      _
    // Predicated region
    $region26: #{tpu_custom_call.1} parent=1 // pred_check
      _
    $region27: #{tpu_custom_call.1} parent=1 // pred_check_branch
      %28 = sbr.rel (0) target = $region29
    $region28: #{tpu_custom_call.1} parent=1 // pred_region
      %30 = vsyncadd [#allocation4], 0
      %s31 = sshll.u32 %s6, 4
      %s32 = int_to_ptr.hbm [resolvable:$true] %s31
      %s33 = sshll.u32 [#allocation3], 4
      %s34 = int_to_ptr.vmem [resolvable:$true] %s33
      %39 = dma.hbm_to_vmem [thread:$0]  %s32, 9216, %s34, [#allocation4], 64, 64, 4
    $region29: #{tpu_custom_call.1} parent=1 // pred_fallthru
      _
    // Predicated region
    $region30: #{tpu_custom_call.1} parent=1 // pred_check
      _
    $region31: #{tpu_custom_call.1} parent=1 // pred_check_branch
      %41 = sbr.rel (0) target = $region33
    $region32: #{tpu_custom_call.1} parent=1 // pred_region
      _
    $region33: #{tpu_custom_call.1} parent=1 // pred_fallthru
      _
    // Predicated region
    $region34: #{tpu_custom_call.1} parent=1 // pred_check
      _
    $region35: #{tpu_custom_call.1} parent=1 // pred_check_branch
      %43 = sbr.rel (0) target = $region37
    $region36: #{tpu_custom_call.1} parent=1 // pred_region
      %45 = dma.done [#allocation4], 9216
    $region37: #{tpu_custom_call.1} parent=1 // pred_fallthru
      _
    %v47 = vld [vmem:[%s0] sm:$0xf]
    %v48 = vld [vmem:[%s0 + $0x8] sm:$0xf]
    %v49 = vld [vmem:[%s0 + $0x10] sm:$0xf]
    %v50 = vld [vmem:[%s0 + $0x18] sm:$0xf]
    %v51 = vld [vmem:[%s0 + $0x20] sm:$0xf]
    %v52 = vld [vmem:[%s0 + $0x28] sm:$0xf]
    %v53 = vld [vmem:[%s0 + $0x30] sm:$0xf]
    %v54 = vld [vmem:[%s0 + $0x38] sm:$0xf]
    %v55 = vld [vmem:[%s0 + $0x48] sm:$0xf]
    %v56 = vld [vmem:[%s0 + $0x50] sm:$0xf]
    %v57 = vld [vmem:[%s0 + $0x58] sm:$0xf]
    %v58 = vld [vmem:[%s0 + $0x60] sm:$0xf]
    %v59 = vld [vmem:[%s0 + $0x68] sm:$0xf]
    %v60 = vld [vmem:[%s0 + $0x70] sm:$0xf]
    %v61 = vld [vmem:[%s0 + $0x78] sm:$0xf]
    %v62 = vld [vmem:[%s0 + $0x80] sm:$0xf]
    %v63 = vld [vmem:[%s1] sm:$0xf]
    %v64 = vld [vmem:[%s1 + $0x8] sm:$0xf]
    %v65 = vld [vmem:[%s1 + $0x10] sm:$0xf]
    %v66 = vld [vmem:[%s1 + $0x18] sm:$0xf]
    %v67 = vld [vmem:[%s1 + $0x20] sm:$0xf]
    %v68 = vld [vmem:[%s1 + $0x28] sm:$0xf]
    %v69 = vld [vmem:[%s1 + $0x30] sm:$0xf]
    %v70 = vld [vmem:[%s1 + $0x38] sm:$0xf]
    %v71 = vld [vmem:[%s1 + $0x48] sm:$0xf]
    %v72 = vld [vmem:[%s1 + $0x50] sm:$0xf]
    %v73 = vld [vmem:[%s1 + $0x58] sm:$0xf]
    %v74 = vld [vmem:[%s1 + $0x60] sm:$0xf]
    %v75 = vld [vmem:[%s1 + $0x68] sm:$0xf]
    %v76 = vld [vmem:[%s1 + $0x70] sm:$0xf]
    %v77 = vld [vmem:[%s1 + $0x78] sm:$0xf]
    %v78 = vld [vmem:[%s1 + $0x80] sm:$0xf]
    %v79 = vld [vmem:[%s0 + $0x4] sm:$0x1]
    %v80 = vld [vmem:[%s0 + $0xc] sm:$0x1]
    %v81 = vld [vmem:[%s0 + $0x14] sm:$0x1]
    %v82 = vld [vmem:[%s0 + $0x1c] sm:$0x1]
    %v83 = vld [vmem:[%s0 + $0x24] sm:$0x1]
    %v84 = vld [vmem:[%s0 + $0x2c] sm:$0x1]
    %v85 = vld [vmem:[%s0 + $0x34] sm:$0x1]
    %v86 = vld [vmem:[%s0 + $0x3c] sm:$0x1]
    %v87 = vld [vmem:[%s0 + $0x4c] sm:$0x1]
    %v88 = vld [vmem:[%s0 + $0x54] sm:$0x1]
    %v89 = vld [vmem:[%s0 + $0x5c] sm:$0x1]
    %v90 = vld [vmem:[%s0 + $0x64] sm:$0x1]
    %v91 = vld [vmem:[%s0 + $0x6c] sm:$0x1]
    %v92 = vld [vmem:[%s0 + $0x74] sm:$0x1]
    %v93 = vld [vmem:[%s0 + $0x7c] sm:$0x1]
    %v94 = vld [vmem:[%s0 + $0x84] sm:$0x1]
    %vm95 = vsmask.f32 3328
    %vm96 = vsmask.f32 7440
    %vm97 = vmor %vm95, %vm96
    %v99 = vshrl.u32 %v47, 16
    %v101 = vrot.slane %v99, 4
    %v102 = vshll.u32 %v47, 16
    %v104 = vrot.slane %v102, 5
    %v105 = vor.u32 %v101, %v104
    %v106 = vrot.slane %v105, 4
    %v108 = vshll.u32 %v79, 16
    %v110 = vrot.slane %v108, 5
    %v111 = vsel %vm97, %v106, %v110
    %v113 = vshrl.u32 %v48, 16
    %v115 = vrot.slane %v113, 4
    %v116 = vshll.u32 %v48, 16
    %v118 = vrot.slane %v116, 5
    %v119 = vor.u32 %v115, %v118
    %v120 = vrot.slane %v119, 4
    %v122 = vshll.u32 %v80, 16
    %v124 = vrot.slane %v122, 5
    %v125 = vsel %vm97, %v120, %v124
    %v127 = vshrl.u32 %v49, 16
    %v129 = vrot.slane %v127, 4
    %v130 = vshll.u32 %v49, 16
    %v132 = vrot.slane %v130, 5
    %v133 = vor.u32 %v129, %v132
    %v134 = vrot.slane %v133, 4
    %v136 = vshll.u32 %v81, 16
    %v138 = vrot.slane %v136, 5
    %v139 = vsel %vm97, %v134, %v138
    %v141 = vshrl.u32 %v50, 16
    %v143 = vrot.slane %v141, 4
    %v144 = vshll.u32 %v50, 16
    %v146 = vrot.slane %v144, 5
    %v147 = vor.u32 %v143, %v146
    %v148 = vrot.slane %v147, 4
    %v150 = vshll.u32 %v82, 16
    %v152 = vrot.slane %v150, 5
    %v153 = vsel %vm97, %v148, %v152
    %v155 = vshrl.u32 %v51, 16
    %v157 = vrot.slane %v155, 4
    %v158 = vshll.u32 %v51, 16
    %v160 = vrot.slane %v158, 5
    %v161 = vor.u32 %v157, %v160
    %v162 = vrot.slane %v161, 4
    %v164 = vshll.u32 %v83, 16
    %v166 = vrot.slane %v164, 5
    %v167 = vsel %vm97, %v162, %v166
    %v169 = vshrl.u32 %v52, 16
    %v171 = vrot.slane %v169, 4
    %v172 = vshll.u32 %v52, 16
    %v174 = vrot.slane %v172, 5
    %v175 = vor.u32 %v171, %v174
    %v176 = vrot.slane %v175, 4
    %v178 = vshll.u32 %v84, 16
    %v180 = vrot.slane %v178, 5
    %v181 = vsel %vm97, %v176, %v180
    %v183 = vshrl.u32 %v53, 16
    %v185 = vrot.slane %v183, 4
    %v186 = vshll.u32 %v53, 16
    %v188 = vrot.slane %v186, 5
    %v189 = vor.u32 %v185, %v188
    %v190 = vrot.slane %v189, 4
    %v192 = vshll.u32 %v85, 16
    %v194 = vrot.slane %v192, 5
    %v195 = vsel %vm97, %v190, %v194
    %v197 = vshrl.u32 %v54, 16
    %v199 = vrot.slane %v197, 4
    %v200 = vshll.u32 %v54, 16
    %v202 = vrot.slane %v200, 5
    %v203 = vor.u32 %v199, %v202
    %v204 = vrot.slane %v203, 4
    %v206 = vshll.u32 %v86, 16
    %v208 = vrot.slane %v206, 5
    %v209 = vsel %vm97, %v204, %v208
    %v211 = vshrl.u32 %v55, 16
    %v213 = vrot.slane %v211, 4
    %v214 = vshll.u32 %v55, 16
    %v216 = vrot.slane %v214, 5
    %v217 = vor.u32 %v213, %v216
    %v218 = vrot.slane %v217, 4
    %v220 = vshll.u32 %v87, 16
    %v222 = vrot.slane %v220, 5
    %v223 = vsel %vm97, %v218, %v222
    %v225 = vshrl.u32 %v56, 16
    %v227 = vrot.slane %v225, 4
    %v228 = vshll.u32 %v56, 16
    %v230 = vrot.slane %v228, 5
    %v231 = vor.u32 %v227, %v230
    %v232 = vrot.slane %v231, 4
    %v234 = vshll.u32 %v88, 16
    %v236 = vrot.slane %v234, 5
    %v237 = vsel %vm97, %v232, %v236
    %v239 = vshrl.u32 %v57, 16
    %v241 = vrot.slane %v239, 4
    %v242 = vshll.u32 %v57, 16
    %v244 = vrot.slane %v242, 5
    %v245 = vor.u32 %v241, %v244
    %v246 = vrot.slane %v245, 4
    %v248 = vshll.u32 %v89, 16
    %v250 = vrot.slane %v248, 5
    %v251 = vsel %vm97, %v246, %v250
    %v253 = vshrl.u32 %v58, 16
    %v255 = vrot.slane %v253, 4
    %v256 = vshll.u32 %v58, 16
    %v258 = vrot.slane %v256, 5
    %v259 = vor.u32 %v255, %v258
    %v260 = vrot.slane %v259, 4
    %v262 = vshll.u32 %v90, 16
    %v264 = vrot.slane %v262, 5
    %v265 = vsel %vm97, %v260, %v264
    %v267 = vshrl.u32 %v59, 16
    %v269 = vrot.slane %v267, 4
    %v270 = vshll.u32 %v59, 16
    %v272 = vrot.slane %v270, 5
    %v273 = vor.u32 %v269, %v272
    %v274 = vrot.slane %v273, 4
    %v276 = vshll.u32 %v91, 16
    %v278 = vrot.slane %v276, 5
    %v279 = vsel %vm97, %v274, %v278
    %v281 = vshrl.u32 %v60, 16
    %v283 = vrot.slane %v281, 4
    %v284 = vshll.u32 %v60, 16
    %v286 = vrot.slane %v284, 5
    %v287 = vor.u32 %v283, %v286
    %v288 = vrot.slane %v287, 4
    %v290 = vshll.u32 %v92, 16
    %v292 = vrot.slane %v290, 5
    %v293 = vsel %vm97, %v288, %v292
    %v295 = vshrl.u32 %v61, 16
    %v297 = vrot.slane %v295, 4
    %v298 = vshll.u32 %v61, 16
    %v300 = vrot.slane %v298, 5
    %v301 = vor.u32 %v297, %v300
    %v302 = vrot.slane %v301, 4
    %v304 = vshll.u32 %v93, 16
    %v306 = vrot.slane %v304, 5
    %v307 = vsel %vm97, %v302, %v306
    %v309 = vshrl.u32 %v62, 16
    %v311 = vrot.slane %v309, 4
    %v312 = vshll.u32 %v62, 16
    %v314 = vrot.slane %v312, 5
    %v315 = vor.u32 %v311, %v314
    %v316 = vrot.slane %v315, 4
    %v318 = vshll.u32 %v94, 16
    %v320 = vrot.slane %v318, 5
    %v321 = vsel %vm97, %v316, %v320
    %v322 = vld [vmem:[%s2] sm:$0xf]
    %v323 = vld [vmem:[%s2 + $0x8] sm:$0xf]
    %v324 = vld [vmem:[%s2 + $0x10] sm:$0xf]
    %v325 = vld [vmem:[%s2 + $0x18] sm:$0xf]
    %v326 = vld [vmem:[%s2 + $0x20] sm:$0xf]
    %v327 = vld [vmem:[%s2 + $0x28] sm:$0xf]
    %v328 = vld [vmem:[%s2 + $0x30] sm:$0xf]
    %v329 = vld [vmem:[%s2 + $0x38] sm:$0xf]
    %v330 = vld [vmem:[%s2 + $0x48] sm:$0xf]
    %v331 = vld [vmem:[%s2 + $0x50] sm:$0xf]
    %v332 = vld [vmem:[%s2 + $0x58] sm:$0xf]
    %v333 = vld [vmem:[%s2 + $0x60] sm:$0xf]
    %v334 = vld [vmem:[%s2 + $0x68] sm:$0xf]
    %v335 = vld [vmem:[%s2 + $0x70] sm:$0xf]
    %v336 = vld [vmem:[%s2 + $0x78] sm:$0xf]
    %v337 = vld [vmem:[%s2 + $0x80] sm:$0xf]
    %v338 = vld [vmem:[%s3] sm:$0xf]
    %v339 = vld [vmem:[%s3 + $0x8] sm:$0xf]
    %v340 = vld [vmem:[%s3 + $0x10] sm:$0xf]
    %v341 = vld [vmem:[%s3 + $0x18] sm:$0xf]
    %v342 = vld [vmem:[%s3 + $0x20] sm:$0xf]
    %v343 = vld [vmem:[%s3 + $0x28] sm:$0xf]
    %v344 = vld [vmem:[%s3 + $0x30] sm:$0xf]
    %v345 = vld [vmem:[%s3 + $0x38] sm:$0xf]
    %v346 = vld [vmem:[%s3 + $0x48] sm:$0xf]
    %v347 = vld [vmem:[%s3 + $0x50] sm:$0xf]
    %v348 = vld [vmem:[%s3 + $0x58] sm:$0xf]
    %v349 = vld [vmem:[%s3 + $0x60] sm:$0xf]
    %v350 = vld [vmem:[%s3 + $0x68] sm:$0xf]
    %v351 = vld [vmem:[%s3 + $0x70] sm:$0xf]
    %v352 = vld [vmem:[%s3 + $0x78] sm:$0xf]
    %v353 = vld [vmem:[%s3 + $0x80] sm:$0xf]
    %v354 = vld [vmem:[%s2 + $0x4] sm:$0x1]
    %v355 = vld [vmem:[%s2 + $0xc] sm:$0x1]
    %v356 = vld [vmem:[%s2 + $0x14] sm:$0x1]
    %v357 = vld [vmem:[%s2 + $0x1c] sm:$0x1]
    %v358 = vld [vmem:[%s2 + $0x24] sm:$0x1]
    %v359 = vld [vmem:[%s2 + $0x2c] sm:$0x1]
    %v360 = vld [vmem:[%s2 + $0x34] sm:$0x1]
    %v361 = vld [vmem:[%s2 + $0x3c] sm:$0x1]
    %v362 = vld [vmem:[%s2 + $0x4c] sm:$0x1]
    %v363 = vld [vmem:[%s2 + $0x54] sm:$0x1]
    %v364 = vld [vmem:[%s2 + $0x5c] sm:$0x1]
    %v365 = vld [vmem:[%s2 + $0x64] sm:$0x1]
    %v366 = vld [vmem:[%s2 + $0x6c] sm:$0x1]
    %v367 = vld [vmem:[%s2 + $0x74] sm:$0x1]
    %v368 = vld [vmem:[%s2 + $0x7c] sm:$0x1]
    %v369 = vld [vmem:[%s2 + $0x84] sm:$0x1]
    %v371 = vshrl.u32 %v322, 16
    %v373 = vrot.slane %v371, 4
    %v374 = vshll.u32 %v322, 16
    %v376 = vrot.slane %v374, 5
    %v377 = vor.u32 %v373, %v376
    %v378 = vrot.slane %v377, 4
    %v380 = vshll.u32 %v354, 16
    %v382 = vrot.slane %v380, 5
    %v383 = vsel %vm97, %v378, %v382
    %v385 = vshrl.u32 %v323, 16
    %v387 = vrot.slane %v385, 4
    %v388 = vshll.u32 %v323, 16
    %v390 = vrot.slane %v388, 5
    %v391 = vor.u32 %v387, %v390
    %v392 = vrot.slane %v391, 4
    %v394 = vshll.u32 %v355, 16
    %v396 = vrot.slane %v394, 5
    %v397 = vsel %vm97, %v392, %v396
    %v399 = vshrl.u32 %v324, 16
    %v401 = vrot.slane %v399, 4
    %v402 = vshll.u32 %v324, 16
    %v404 = vrot.slane %v402, 5
    %v405 = vor.u32 %v401, %v404
    %v406 = vrot.slane %v405, 4
    %v408 = vshll.u32 %v356, 16
    %v410 = vrot.slane %v408, 5
    %v411 = vsel %vm97, %v406, %v410
    %v413 = vshrl.u32 %v325, 16
    %v415 = vrot.slane %v413, 4
    %v416 = vshll.u32 %v325, 16
    %v418 = vrot.slane %v416, 5
    %v419 = vor.u32 %v415, %v418
    %v420 = vrot.slane %v419, 4
    %v422 = vshll.u32 %v357, 16
    %v424 = vrot.slane %v422, 5
    %v425 = vsel %vm97, %v420, %v424
    %v427 = vshrl.u32 %v326, 16
    %v429 = vrot.slane %v427, 4
    %v430 = vshll.u32 %v326, 16
    %v432 = vrot.slane %v430, 5
    %v433 = vor.u32 %v429, %v432
    %v434 = vrot.slane %v433, 4
    %v436 = vshll.u32 %v358, 16
    %v438 = vrot.slane %v436, 5
    %v439 = vsel %vm97, %v434, %v438
    %v441 = vshrl.u32 %v327, 16
    %v443 = vrot.slane %v441, 4
    %v444 = vshll.u32 %v327, 16
    %v446 = vrot.slane %v444, 5
    %v447 = vor.u32 %v443, %v446
    %v448 = vrot.slane %v447, 4
    %v450 = vshll.u32 %v359, 16
    %v452 = vrot.slane %v450, 5
    %v453 = vsel %vm97, %v448, %v452
    %v455 = vshrl.u32 %v328, 16
    %v457 = vrot.slane %v455, 4
    %v458 = vshll.u32 %v328, 16
    %v460 = vrot.slane %v458, 5
    %v461 = vor.u32 %v457, %v460
    %v462 = vrot.slane %v461, 4
    %v464 = vshll.u32 %v360, 16
    %v466 = vrot.slane %v464, 5
    %v467 = vsel %vm97, %v462, %v466
    %v469 = vshrl.u32 %v329, 16
    %v471 = vrot.slane %v469, 4
    %v472 = vshll.u32 %v329, 16
    %v474 = vrot.slane %v472, 5
    %v475 = vor.u32 %v471, %v474
    %v476 = vrot.slane %v475, 4
    %v478 = vshll.u32 %v361, 16
    %v480 = vrot.slane %v478, 5
    %v481 = vsel %vm97, %v476, %v480
    %v483 = vshrl.u32 %v330, 16
    %v485 = vrot.slane %v483, 4
    %v486 = vshll.u32 %v330, 16
    %v488 = vrot.slane %v486, 5
    %v489 = vor.u32 %v485, %v488
    %v490 = vrot.slane %v489, 4
    %v492 = vshll.u32 %v362, 16
    %v494 = vrot.slane %v492, 5
    %v495 = vsel %vm97, %v490, %v494
    %v497 = vshrl.u32 %v331, 16
    %v499 = vrot.slane %v497, 4
    %v500 = vshll.u32 %v331, 16
    %v502 = vrot.slane %v500, 5
    %v503 = vor.u32 %v499, %v502
    %v504 = vrot.slane %v503, 4
    %v506 = vshll.u32 %v363, 16
    %v508 = vrot.slane %v506, 5
    %v509 = vsel %vm97, %v504, %v508
    %v511 = vshrl.u32 %v332, 16
    %v513 = vrot.slane %v511, 4
    %v514 = vshll.u32 %v332, 16
    %v516 = vrot.slane %v514, 5
    %v517 = vor.u32 %v513, %v516
    %v518 = vrot.slane %v517, 4
    %v520 = vshll.u32 %v364, 16
    %v522 = vrot.slane %v520, 5
    %v523 = vsel %vm97, %v518, %v522
    %v525 = vshrl.u32 %v333, 16
    %v527 = vrot.slane %v525, 4
    %v528 = vshll.u32 %v333, 16
    %v530 = vrot.slane %v528, 5
    %v531 = vor.u32 %v527, %v530
    %v532 = vrot.slane %v531, 4
    %v534 = vshll.u32 %v365, 16
    %v536 = vrot.slane %v534, 5
    %v537 = vsel %vm97, %v532, %v536
    %v539 = vshrl.u32 %v334, 16
    %v541 = vrot.slane %v539, 4
    %v542 = vshll.u32 %v334, 16
    %v544 = vrot.slane %v542, 5
    %v545 = vor.u32 %v541, %v544
    %v546 = vrot.slane %v545, 4
    %v548 = vshll.u32 %v366, 16
    %v550 = vrot.slane %v548, 5
    %v551 = vsel %vm97, %v546, %v550
    %v553 = vshrl.u32 %v335, 16
    %v555 = vrot.slane %v553, 4
    %v556 = vshll.u32 %v335, 16
    %v558 = vrot.slane %v556, 5
    %v559 = vor.u32 %v555, %v558
    %v560 = vrot.slane %v559, 4
    %v562 = vshll.u32 %v367, 16
    %v564 = vrot.slane %v562, 5
    %v565 = vsel %vm97, %v560, %v564
    %v567 = vshrl.u32 %v336, 16
    %v569 = vrot.slane %v567, 4
    %v570 = vshll.u32 %v336, 16
    %v572 = vrot.slane %v570, 5
    %v573 = vor.u32 %v569, %v572
    %v574 = vrot.slane %v573, 4
    %v576 = vshll.u32 %v368, 16
    %v578 = vrot.slane %v576, 5
    %v579 = vsel %vm97, %v574, %v578
    %v581 = vshrl.u32 %v337, 16
    %v583 = vrot.slane %v581, 4
    %v584 = vshll.u32 %v337, 16
    %v586 = vrot.slane %v584, 5
    %v587 = vor.u32 %v583, %v586
    %v588 = vrot.slane %v587, 4
    %v590 = vshll.u32 %v369, 16
    %v592 = vrot.slane %v590, 5
    %v593 = vsel %vm97, %v588, %v592
    %s594 = scalar_lea.vmem %s0, 8
    %v595 = vld [vmem:[%s594] sm:$0xf]
    %v596 = vld [vmem:[%s594 + $0x8] sm:$0xf]
    %v597 = vld [vmem:[%s594 + $0x10] sm:$0xf]
    %v598 = vld [vmem:[%s594 + $0x18] sm:$0xf]
    %v599 = vld [vmem:[%s594 + $0x20] sm:$0xf]
    %v600 = vld [vmem:[%s594 + $0x28] sm:$0xf]
    %v601 = vld [vmem:[%s594 + $0x30] sm:$0xf]
    %v602 = vld [vmem:[%s594 + $0x38] sm:$0xf]
    %v603 = vld [vmem:[%s594 + $0x48] sm:$0xf]
    %v604 = vld [vmem:[%s594 + $0x50] sm:$0xf]
    %v605 = vld [vmem:[%s594 + $0x58] sm:$0xf]
    %v606 = vld [vmem:[%s594 + $0x60] sm:$0xf]
    %v607 = vld [vmem:[%s594 + $0x68] sm:$0xf]
    %v608 = vld [vmem:[%s594 + $0x70] sm:$0xf]
    %v609 = vld [vmem:[%s594 + $0x78] sm:$0xf]
    %v610 = vld [vmem:[%s594 + $0x80] sm:$0xf]
    %s611 = scalar_lea.vmem %s1, 8
    %v612 = vld [vmem:[%s611] sm:$0xf]
    %v613 = vld [vmem:[%s611 + $0x8] sm:$0xf]
    %v614 = vld [vmem:[%s611 + $0x10] sm:$0xf]
    %v615 = vld [vmem:[%s611 + $0x18] sm:$0xf]
    %v616 = vld [vmem:[%s611 + $0x20] sm:$0xf]
    %v617 = vld [vmem:[%s611 + $0x28] sm:$0xf]
    %v618 = vld [vmem:[%s611 + $0x30] sm:$0xf]
    %v619 = vld [vmem:[%s611 + $0x38] sm:$0xf]
    %v620 = vld [vmem:[%s611 + $0x48] sm:$0xf]
    %v621 = vld [vmem:[%s611 + $0x50] sm:$0xf]
    %v622 = vld [vmem:[%s611 + $0x58] sm:$0xf]
    %v623 = vld [vmem:[%s611 + $0x60] sm:$0xf]
    %v624 = vld [vmem:[%s611 + $0x68] sm:$0xf]
    %v625 = vld [vmem:[%s611 + $0x70] sm:$0xf]
    %v626 = vld [vmem:[%s611 + $0x78] sm:$0xf]
    %v627 = vld [vmem:[%s611 + $0x80] sm:$0xf]
    %v628 = vld [vmem:[%s594 + $0x4] sm:$0x1]
    %v629 = vld [vmem:[%s594 + $0xc] sm:$0x1]
    %v630 = vld [vmem:[%s594 + $0x14] sm:$0x1]
    %v631 = vld [vmem:[%s594 + $0x1c] sm:$0x1]
    %v632 = vld [vmem:[%s594 + $0x24] sm:$0x1]
    %v633 = vld [vmem:[%s594 + $0x2c] sm:$0x1]
    %v634 = vld [vmem:[%s594 + $0x34] sm:$0x1]
    %v635 = vld [vmem:[%s594 + $0x3c] sm:$0x1]
    %v636 = vld [vmem:[%s594 + $0x4c] sm:$0x1]
    %v637 = vld [vmem:[%s594 + $0x54] sm:$0x1]
    %v638 = vld [vmem:[%s594 + $0x5c] sm:$0x1]
    %v639 = vld [vmem:[%s594 + $0x64] sm:$0x1]
    %v640 = vld [vmem:[%s594 + $0x6c] sm:$0x1]
    %v641 = vld [vmem:[%s594 + $0x74] sm:$0x1]
    %v642 = vld [vmem:[%s594 + $0x7c] sm:$0x1]
    %v643 = vld [vmem:[%s594 + $0x84] sm:$0x1]
    %v645 = vshrl.u32 %v595, 16
    %v647 = vrot.slane %v645, 4
    %v648 = vshll.u32 %v595, 16
    %v650 = vrot.slane %v648, 5
    %v651 = vor.u32 %v647, %v650
    %v652 = vrot.slane %v651, 4
    %v654 = vshll.u32 %v628, 16
    %v656 = vrot.slane %v654, 5
    %v657 = vsel %vm97, %v652, %v656
    %v659 = vshrl.u32 %v596, 16
    %v661 = vrot.slane %v659, 4
    %v662 = vshll.u32 %v596, 16
    %v664 = vrot.slane %v662, 5
    %v665 = vor.u32 %v661, %v664
    %v666 = vrot.slane %v665, 4
    %v668 = vshll.u32 %v629, 16
    %v670 = vrot.slane %v668, 5
    %v671 = vsel %vm97, %v666, %v670
    %v673 = vshrl.u32 %v597, 16
    %v675 = vrot.slane %v673, 4
    %v676 = vshll.u32 %v597, 16
    %v678 = vrot.slane %v676, 5
    %v679 = vor.u32 %v675, %v678
    %v680 = vrot.slane %v679, 4
    %v682 = vshll.u32 %v630, 16
    %v684 = vrot.slane %v682, 5
    %v685 = vsel %vm97, %v680, %v684
    %v687 = vshrl.u32 %v598, 16
    %v689 = vrot.slane %v687, 4
    %v690 = vshll.u32 %v598, 16
    %v692 = vrot.slane %v690, 5
    %v693 = vor.u32 %v689, %v692
    %v694 = vrot.slane %v693, 4
    %v696 = vshll.u32 %v631, 16
    %v698 = vrot.slane %v696, 5
    %v699 = vsel %vm97, %v694, %v698
    %v701 = vshrl.u32 %v599, 16
    %v703 = vrot.slane %v701, 4
    %v704 = vshll.u32 %v599, 16
    %v706 = vrot.slane %v704, 5
    %v707 = vor.u32 %v703, %v706
    %v708 = vrot.slane %v707, 4
    %v710 = vshll.u32 %v632, 16
    %v712 = vrot.slane %v710, 5
    %v713 = vsel %vm97, %v708, %v712
    %v715 = vshrl.u32 %v600, 16
    %v717 = vrot.slane %v715, 4
    %v718 = vshll.u32 %v600, 16
    %v720 = vrot.slane %v718, 5
    %v721 = vor.u32 %v717, %v720
    %v722 = vrot.slane %v721, 4
    %v724 = vshll.u32 %v633, 16
    %v726 = vrot.slane %v724, 5
    %v727 = vsel %vm97, %v722, %v726
    %v729 = vshrl.u32 %v601, 16
    %v731 = vrot.slane %v729, 4
    %v732 = vshll.u32 %v601, 16
    %v734 = vrot.slane %v732, 5
    %v735 = vor.u32 %v731, %v734
    %v736 = vrot.slane %v735, 4
    %v738 = vshll.u32 %v634, 16
    %v740 = vrot.slane %v738, 5
    %v741 = vsel %vm97, %v736, %v740
    %v743 = vshrl.u32 %v602, 16
    %v745 = vrot.slane %v743, 4
    %v746 = vshll.u32 %v602, 16
    %v748 = vrot.slane %v746, 5
    %v749 = vor.u32 %v745, %v748
    %v750 = vrot.slane %v749, 4
    %v752 = vshll.u32 %v635, 16
    %v754 = vrot.slane %v752, 5
    %v755 = vsel %vm97, %v750, %v754
    %v757 = vshrl.u32 %v603, 16
    %v759 = vrot.slane %v757, 4
    %v760 = vshll.u32 %v603, 16
    %v762 = vrot.slane %v760, 5
    %v763 = vor.u32 %v759, %v762
    %v764 = vrot.slane %v763, 4
    %v766 = vshll.u32 %v636, 16
    %v768 = vrot.slane %v766, 5
    %v769 = vsel %vm97, %v764, %v768
    %v771 = vshrl.u32 %v604, 16
    %v773 = vrot.slane %v771, 4
    %v774 = vshll.u32 %v604, 16
    %v776 = vrot.slane %v774, 5
    %v777 = vor.u32 %v773, %v776
    %v778 = vrot.slane %v777, 4
    %v780 = vshll.u32 %v637, 16
    %v782 = vrot.slane %v780, 5
    %v783 = vsel %vm97, %v778, %v782
    %v785 = vshrl.u32 %v605, 16
    %v787 = vrot.slane %v785, 4
    %v788 = vshll.u32 %v605, 16
    %v790 = vrot.slane %v788, 5
    %v791 = vor.u32 %v787, %v790
    %v792 = vrot.slane %v791, 4
    %v794 = vshll.u32 %v638, 16
    %v796 = vrot.slane %v794, 5
    %v797 = vsel %vm97, %v792, %v796
    %v799 = vshrl.u32 %v606, 16
    %v801 = vrot.slane %v799, 4
    %v802 = vshll.u32 %v606, 16
    %v804 = vrot.slane %v802, 5
    %v805 = vor.u32 %v801, %v804
    %v806 = vrot.slane %v805, 4
    %v808 = vshll.u32 %v639, 16
    %v810 = vrot.slane %v808, 5
    %v811 = vsel %vm97, %v806, %v810
    %v813 = vshrl.u32 %v607, 16
    %v815 = vrot.slane %v813, 4
    %v816 = vshll.u32 %v607, 16
    %v818 = vrot.slane %v816, 5
    %v819 = vor.u32 %v815, %v818
    %v820 = vrot.slane %v819, 4
    %v822 = vshll.u32 %v640, 16
    %v824 = vrot.slane %v822, 5
    %v825 = vsel %vm97, %v820, %v824
    %v827 = vshrl.u32 %v608, 16
    %v829 = vrot.slane %v827, 4
    %v830 = vshll.u32 %v608, 16
    %v832 = vrot.slane %v830, 5
    %v833 = vor.u32 %v829, %v832
    %v834 = vrot.slane %v833, 4
    %v836 = vshll.u32 %v641, 16
    %v838 = vrot.slane %v836, 5
    %v839 = vsel %vm97, %v834, %v838
    %v841 = vshrl.u32 %v609, 16
    %v843 = vrot.slane %v841, 4
    %v844 = vshll.u32 %v609, 16
    %v846 = vrot.slane %v844, 5
    %v847 = vor.u32 %v843, %v846
    %v848 = vrot.slane %v847, 4
    %v850 = vshll.u32 %v642, 16
    %v852 = vrot.slane %v850, 5
    %v853 = vsel %vm97, %v848, %v852
    %v855 = vshrl.u32 %v610, 16
    %v857 = vrot.slane %v855, 4
    %v858 = vshll.u32 %v610, 16
    %v860 = vrot.slane %v858, 5
    %v861 = vor.u32 %v857, %v860
    %v862 = vrot.slane %v861, 4
    %v864 = vshll.u32 %v643, 16
    %v866 = vrot.slane %v864, 5
    %v867 = vsel %vm97, %v862, %v866
    %v884 = vunpack.c.l.b16 %v47
    %v885 = vunpack.c.l.b16 %v48
    %v886 = vunpack.c.l.b16 %v49
    %v887 = vunpack.c.l.b16 %v50
    %v888 = vunpack.c.l.b16 %v51
    %v889 = vunpack.c.l.b16 %v52
    %v890 = vunpack.c.l.b16 %v53
    %v891 = vunpack.c.l.b16 %v54
    %v892 = vunpack.c.l.b16 %v55
    %v893 = vunpack.c.l.b16 %v56
    %v894 = vunpack.c.l.b16 %v57
    %v895 = vunpack.c.l.b16 %v58
    %v896 = vunpack.c.l.b16 %v59
    %v897 = vunpack.c.l.b16 %v60
    %v898 = vunpack.c.l.b16 %v61
    %v899 = vunpack.c.l.b16 %v62
    %v900 = vpack.c.b16 %v885, %v884
    %v901 = vpack.c.b16 %v887, %v886
    %v902 = vpack.c.b16 %v889, %v888
    %v903 = vpack.c.b16 %v891, %v890
    %v904 = vpack.c.b16 %v893, %v892
    %v905 = vpack.c.b16 %v895, %v894
    %v906 = vpack.c.b16 %v897, %v896
    %v907 = vpack.c.b16 %v899, %v898
    %v924 = vunpack.c.l.b16 %v63
    %v925 = vunpack.c.l.b16 %v64
    %v926 = vunpack.c.l.b16 %v65
    %v927 = vunpack.c.l.b16 %v66
    %v928 = vunpack.c.l.b16 %v67
    %v929 = vunpack.c.l.b16 %v68
    %v930 = vunpack.c.l.b16 %v69
    %v931 = vunpack.c.l.b16 %v70
    %v932 = vunpack.c.l.b16 %v71
    %v933 = vunpack.c.l.b16 %v72
    %v934 = vunpack.c.l.b16 %v73
    %v935 = vunpack.c.l.b16 %v74
    %v936 = vunpack.c.l.b16 %v75
    %v937 = vunpack.c.l.b16 %v76
    %v938 = vunpack.c.l.b16 %v77
    %v939 = vunpack.c.l.b16 %v78
    %v940 = vpack.c.b16 %v925, %v924
    %v941 = vpack.c.b16 %v927, %v926
    %v942 = vpack.c.b16 %v929, %v928
    %v943 = vpack.c.b16 %v931, %v930
    %v944 = vpack.c.b16 %v933, %v932
    %v945 = vpack.c.b16 %v935, %v934
    %v946 = vpack.c.b16 %v937, %v936
    %v947 = vpack.c.b16 %v939, %v938
    %948 = vrot.lane.b32.xlu0 %v940, 4
    %v949 = vpop.permute.xlu0 %948
    %950 = vrot.lane.b32.xlu0 %v941, 4
    %v951 = vpop.permute.xlu0 %950
    %952 = vrot.lane.b32.xlu0 %v942, 4
    %v953 = vpop.permute.xlu0 %952
    %954 = vrot.lane.b32.xlu0 %v943, 4
    %v955 = vpop.permute.xlu0 %954
    %956 = vrot.lane.b32.xlu0 %v944, 4
    %v957 = vpop.permute.xlu0 %956
    %958 = vrot.lane.b32.xlu0 %v945, 4
    %v959 = vpop.permute.xlu0 %958
    %960 = vrot.lane.b32.xlu0 %v946, 4
    %v961 = vpop.permute.xlu0 %960
    %962 = vrot.lane.b32.xlu0 %v947, 4
    %v963 = vpop.permute.xlu0 %962
    %v964 = vunpack.c.l.b16 %v111
    %v965 = vunpack.c.l.b16 %v125
    %v966 = vunpack.c.l.b16 %v139
    %v967 = vunpack.c.l.b16 %v153
    %v968 = vunpack.c.l.b16 %v167
    %v969 = vunpack.c.l.b16 %v181
    %v970 = vunpack.c.l.b16 %v195
    %v971 = vunpack.c.l.b16 %v209
    %v972 = vunpack.c.l.b16 %v223
    %v973 = vunpack.c.l.b16 %v237
    %v974 = vunpack.c.l.b16 %v251
    %v975 = vunpack.c.l.b16 %v265
    %v976 = vunpack.c.l.b16 %v279
    %v977 = vunpack.c.l.b16 %v293
    %v978 = vunpack.c.l.b16 %v307
    %v979 = vunpack.c.l.b16 %v321
    %v980 = vpack.c.b16 %v965, %v964
    %v981 = vpack.c.b16 %v967, %v966
    %v982 = vpack.c.b16 %v969, %v968
    %v983 = vpack.c.b16 %v971, %v970
    %v984 = vpack.c.b16 %v973, %v972
    %v985 = vpack.c.b16 %v975, %v974
    %v986 = vpack.c.b16 %v977, %v976
    %v987 = vpack.c.b16 %v979, %v978
    %988 = vrot.lane.b32.xlu0 %v980, 8
    %v989 = vpop.permute.xlu0 %988
    %990 = vrot.lane.b32.xlu0 %v981, 8
    %v991 = vpop.permute.xlu0 %990
    %992 = vrot.lane.b32.xlu0 %v982, 8
    %v993 = vpop.permute.xlu0 %992
    %994 = vrot.lane.b32.xlu0 %v983, 8
    %v995 = vpop.permute.xlu0 %994
    %996 = vrot.lane.b32.xlu0 %v984, 8
    %v997 = vpop.permute.xlu0 %996
    %998 = vrot.lane.b32.xlu0 %v985, 8
    %v999 = vpop.permute.xlu0 %998
    %1000 = vrot.lane.b32.xlu0 %v986, 8
    %v1001 = vpop.permute.xlu0 %1000
    %1002 = vrot.lane.b32.xlu0 %v987, 8
    %v1003 = vpop.permute.xlu0 %1002
    %v1020 = vunpack.c.l.b16 %v322
    %v1021 = vunpack.c.l.b16 %v323
    %v1022 = vunpack.c.l.b16 %v324
    %v1023 = vunpack.c.l.b16 %v325
    %v1024 = vunpack.c.l.b16 %v326
    %v1025 = vunpack.c.l.b16 %v327
    %v1026 = vunpack.c.l.b16 %v328
    %v1027 = vunpack.c.l.b16 %v329
    %v1028 = vunpack.c.l.b16 %v330
    %v1029 = vunpack.c.l.b16 %v331
    %v1030 = vunpack.c.l.b16 %v332
    %v1031 = vunpack.c.l.b16 %v333
    %v1032 = vunpack.c.l.b16 %v334
    %v1033 = vunpack.c.l.b16 %v335
    %v1034 = vunpack.c.l.b16 %v336
    %v1035 = vunpack.c.l.b16 %v337
    %v1036 = vpack.c.b16 %v1021, %v1020
    %v1037 = vpack.c.b16 %v1023, %v1022
    %v1038 = vpack.c.b16 %v1025, %v1024
    %v1039 = vpack.c.b16 %v1027, %v1026
    %v1040 = vpack.c.b16 %v1029, %v1028
    %v1041 = vpack.c.b16 %v1031, %v1030
    %v1042 = vpack.c.b16 %v1033, %v1032
    %v1043 = vpack.c.b16 %v1035, %v1034
    %1044 = vrot.lane.b32.xlu0 %v1036, 12
    %v1045 = vpop.permute.xlu0 %1044
    %1046 = vrot.lane.b32.xlu0 %v1037, 12
    %v1047 = vpop.permute.xlu0 %1046
    %1048 = vrot.lane.b32.xlu0 %v1038, 12
    %v1049 = vpop.permute.xlu0 %1048
    %1050 = vrot.lane.b32.xlu0 %v1039, 12
    %v1051 = vpop.permute.xlu0 %1050
    %1052 = vrot.lane.b32.xlu0 %v1040, 12
    %v1053 = vpop.permute.xlu0 %1052
    %1054 = vrot.lane.b32.xlu0 %v1041, 12
    %v1055 = vpop.permute.xlu0 %1054
    %1056 = vrot.lane.b32.xlu0 %v1042, 12
    %v1057 = vpop.permute.xlu0 %1056
    %1058 = vrot.lane.b32.xlu0 %v1043, 12
    %v1059 = vpop.permute.xlu0 %1058
    %v1076 = vunpack.c.l.b16 %v338
    %v1077 = vunpack.c.l.b16 %v339
    %v1078 = vunpack.c.l.b16 %v340
    %v1079 = vunpack.c.l.b16 %v341
    %v1080 = vunpack.c.l.b16 %v342
    %v1081 = vunpack.c.l.b16 %v343
    %v1082 = vunpack.c.l.b16 %v344
    %v1083 = vunpack.c.l.b16 %v345
    %v1084 = vunpack.c.l.b16 %v346
    %v1085 = vunpack.c.l.b16 %v347
    %v1086 = vunpack.c.l.b16 %v348
    %v1087 = vunpack.c.l.b16 %v349
    %v1088 = vunpack.c.l.b16 %v350
    %v1089 = vunpack.c.l.b16 %v351
    %v1090 = vunpack.c.l.b16 %v352
    %v1091 = vunpack.c.l.b16 %v353
    %v1092 = vpack.c.b16 %v1077, %v1076
    %v1093 = vpack.c.b16 %v1079, %v1078
    %v1094 = vpack.c.b16 %v1081, %v1080
    %v1095 = vpack.c.b16 %v1083, %v1082
    %v1096 = vpack.c.b16 %v1085, %v1084
    %v1097 = vpack.c.b16 %v1087, %v1086
    %v1098 = vpack.c.b16 %v1089, %v1088
    %v1099 = vpack.c.b16 %v1091, %v1090
    %1100 = vrot.lane.b32.xlu0 %v1092, 16
    %v1101 = vpop.permute.xlu0 %1100
    %1102 = vrot.lane.b32.xlu0 %v1093, 16
    %v1103 = vpop.permute.xlu0 %1102
    %1104 = vrot.lane.b32.xlu0 %v1094, 16
    %v1105 = vpop.permute.xlu0 %1104
    %1106 = vrot.lane.b32.xlu0 %v1095, 16
    %v1107 = vpop.permute.xlu0 %1106
    %1108 = vrot.lane.b32.xlu0 %v1096, 16
    %v1109 = vpop.permute.xlu0 %1108
    %1110 = vrot.lane.b32.xlu0 %v1097, 16
    %v1111 = vpop.permute.xlu0 %1110
    %1112 = vrot.lane.b32.xlu0 %v1098, 16
    %v1113 = vpop.permute.xlu0 %1112
    %1114 = vrot.lane.b32.xlu0 %v1099, 16
    %v1115 = vpop.permute.xlu0 %1114
    %v1116 = vunpack.c.l.b16 %v383
    %v1117 = vunpack.c.l.b16 %v397
    %v1118 = vunpack.c.l.b16 %v411
    %v1119 = vunpack.c.l.b16 %v425
    %v1120 = vunpack.c.l.b16 %v439
    %v1121 = vunpack.c.l.b16 %v453
    %v1122 = vunpack.c.l.b16 %v467
    %v1123 = vunpack.c.l.b16 %v481
    %v1124 = vunpack.c.l.b16 %v495
    %v1125 = vunpack.c.l.b16 %v509
    %v1126 = vunpack.c.l.b16 %v523
    %v1127 = vunpack.c.l.b16 %v537
    %v1128 = vunpack.c.l.b16 %v551
    %v1129 = vunpack.c.l.b16 %v565
    %v1130 = vunpack.c.l.b16 %v579
    %v1131 = vunpack.c.l.b16 %v593
    %v1132 = vpack.c.b16 %v1117, %v1116
    %v1133 = vpack.c.b16 %v1119, %v1118
    %v1134 = vpack.c.b16 %v1121, %v1120
    %v1135 = vpack.c.b16 %v1123, %v1122
    %v1136 = vpack.c.b16 %v1125, %v1124
    %v1137 = vpack.c.b16 %v1127, %v1126
    %v1138 = vpack.c.b16 %v1129, %v1128
    %v1139 = vpack.c.b16 %v1131, %v1130
    %1140 = vrot.lane.b32.xlu0 %v1132, 20
    %v1141 = vpop.permute.xlu0 %1140
    %1142 = vrot.lane.b32.xlu0 %v1133, 20
    %v1143 = vpop.permute.xlu0 %1142
    %1144 = vrot.lane.b32.xlu0 %v1134, 20
    %v1145 = vpop.permute.xlu0 %1144
    %1146 = vrot.lane.b32.xlu0 %v1135, 20
    %v1147 = vpop.permute.xlu0 %1146
    %1148 = vrot.lane.b32.xlu0 %v1136, 20
    %v1149 = vpop.permute.xlu0 %1148
    %1150 = vrot.lane.b32.xlu0 %v1137, 20
    %v1151 = vpop.permute.xlu0 %1150
    %1152 = vrot.lane.b32.xlu0 %v1138, 20
    %v1153 = vpop.permute.xlu0 %1152
    %1154 = vrot.lane.b32.xlu0 %v1139, 20
    %v1155 = vpop.permute.xlu0 %1154
    %v1172 = vunpack.c.l.b16 %v595
    %v1173 = vunpack.c.l.b16 %v596
    %v1174 = vunpack.c.l.b16 %v597
    %v1175 = vunpack.c.l.b16 %v598
    %v1176 = vunpack.c.l.b16 %v599
    %v1177 = vunpack.c.l.b16 %v600
    %v1178 = vunpack.c.l.b16 %v601
    %v1179 = vunpack.c.l.b16 %v602
    %v1180 = vunpack.c.l.b16 %v603
    %v1181 = vunpack.c.l.b16 %v604
    %v1182 = vunpack.c.l.b16 %v605
    %v1183 = vunpack.c.l.b16 %v606
    %v1184 = vunpack.c.l.b16 %v607
    %v1185 = vunpack.c.l.b16 %v608
    %v1186 = vunpack.c.l.b16 %v609
    %v1187 = vunpack.c.l.b16 %v610
    %v1188 = vpack.c.b16 %v1173, %v1172
    %v1189 = vpack.c.b16 %v1175, %v1174
    %v1190 = vpack.c.b16 %v1177, %v1176
    %v1191 = vpack.c.b16 %v1179, %v1178
    %v1192 = vpack.c.b16 %v1181, %v1180
    %v1193 = vpack.c.b16 %v1183, %v1182
    %v1194 = vpack.c.b16 %v1185, %v1184
    %v1195 = vpack.c.b16 %v1187, %v1186
    %1196 = vrot.lane.b32.xlu0 %v1188, 24
    %v1197 = vpop.permute.xlu0 %1196
    %1198 = vrot.lane.b32.xlu0 %v1189, 24
    %v1199 = vpop.permute.xlu0 %1198
    %1200 = vrot.lane.b32.xlu0 %v1190, 24
    %v1201 = vpop.permute.xlu0 %1200
    %1202 = vrot.lane.b32.xlu0 %v1191, 24
    %v1203 = vpop.permute.xlu0 %1202
    %1204 = vrot.lane.b32.xlu0 %v1192, 24
    %v1205 = vpop.permute.xlu0 %1204
    %1206 = vrot.lane.b32.xlu0 %v1193, 24
    %v1207 = vpop.permute.xlu0 %1206
    %1208 = vrot.lane.b32.xlu0 %v1194, 24
    %v1209 = vpop.permute.xlu0 %1208
    %1210 = vrot.lane.b32.xlu0 %v1195, 24
    %v1211 = vpop.permute.xlu0 %1210
    %v1228 = vunpack.c.l.b16 %v612
    %v1229 = vunpack.c.l.b16 %v613
    %v1230 = vunpack.c.l.b16 %v614
    %v1231 = vunpack.c.l.b16 %v615
    %v1232 = vunpack.c.l.b16 %v616
    %v1233 = vunpack.c.l.b16 %v617
    %v1234 = vunpack.c.l.b16 %v618
    %v1235 = vunpack.c.l.b16 %v619
    %v1236 = vunpack.c.l.b16 %v620
    %v1237 = vunpack.c.l.b16 %v621
    %v1238 = vunpack.c.l.b16 %v622
    %v1239 = vunpack.c.l.b16 %v623
    %v1240 = vunpack.c.l.b16 %v624
    %v1241 = vunpack.c.l.b16 %v625
    %v1242 = vunpack.c.l.b16 %v626
    %v1243 = vunpack.c.l.b16 %v627
    %v1244 = vpack.c.b16 %v1229, %v1228
    %v1245 = vpack.c.b16 %v1231, %v1230
    %v1246 = vpack.c.b16 %v1233, %v1232
    %v1247 = vpack.c.b16 %v1235, %v1234
    %v1248 = vpack.c.b16 %v1237, %v1236
    %v1249 = vpack.c.b16 %v1239, %v1238
    %v1250 = vpack.c.b16 %v1241, %v1240
    %v1251 = vpack.c.b16 %v1243, %v1242
    %1252 = vrot.lane.b32.xlu0 %v1244, 28
    %v1253 = vpop.permute.xlu0 %1252
    %1254 = vrot.lane.b32.xlu0 %v1245, 28
    %v1255 = vpop.permute.xlu0 %1254
    %1256 = vrot.lane.b32.xlu0 %v1246, 28
    %v1257 = vpop.permute.xlu0 %1256
    %1258 = vrot.lane.b32.xlu0 %v1247, 28
    %v1259 = vpop.permute.xlu0 %1258
    %1260 = vrot.lane.b32.xlu0 %v1248, 28
    %v1261 = vpop.permute.xlu0 %1260
    %1262 = vrot.lane.b32.xlu0 %v1249, 28
    %v1263 = vpop.permute.xlu0 %1262
    %1264 = vrot.lane.b32.xlu0 %v1250, 28
    %v1265 = vpop.permute.xlu0 %1264
    %1266 = vrot.lane.b32.xlu0 %v1251, 28
    %v1267 = vpop.permute.xlu0 %1266
    %v1268 = vunpack.c.l.b16 %v657
    %v1269 = vunpack.c.l.b16 %v671
    %v1270 = vunpack.c.l.b16 %v685
    %v1271 = vunpack.c.l.b16 %v699
    %v1272 = vunpack.c.l.b16 %v713
    %v1273 = vunpack.c.l.b16 %v727
    %v1274 = vunpack.c.l.b16 %v741
    %v1275 = vunpack.c.l.b16 %v755
    %v1276 = vunpack.c.l.b16 %v769
    %v1277 = vunpack.c.l.b16 %v783
    %v1278 = vunpack.c.l.b16 %v797
    %v1279 = vunpack.c.l.b16 %v811
    %v1280 = vunpack.c.l.b16 %v825
    %v1281 = vunpack.c.l.b16 %v839
    %v1282 = vunpack.c.l.b16 %v853
    %v1283 = vunpack.c.l.b16 %v867
    %v1284 = vpack.c.b16 %v1269, %v1268
    %v1285 = vpack.c.b16 %v1271, %v1270
    %v1286 = vpack.c.b16 %v1273, %v1272
    %v1287 = vpack.c.b16 %v1275, %v1274
    %v1288 = vpack.c.b16 %v1277, %v1276
    %v1289 = vpack.c.b16 %v1279, %v1278
    %v1290 = vpack.c.b16 %v1281, %v1280
    %v1291 = vpack.c.b16 %v1283, %v1282
    %1292 = vrot.lane.b32.xlu0 %v1284, 32
    %v1293 = vpop.permute.xlu0 %1292
    %1294 = vrot.lane.b32.xlu0 %v1285, 32
    %v1295 = vpop.permute.xlu0 %1294
    %1296 = vrot.lane.b32.xlu0 %v1286, 32
    %v1297 = vpop.permute.xlu0 %1296
    %1298 = vrot.lane.b32.xlu0 %v1287, 32
    %v1299 = vpop.permute.xlu0 %1298
    %1300 = vrot.lane.b32.xlu0 %v1288, 32
    %v1301 = vpop.permute.xlu0 %1300
    %1302 = vrot.lane.b32.xlu0 %v1289, 32
    %v1303 = vpop.permute.xlu0 %1302
    %1304 = vrot.lane.b32.xlu0 %v1290, 32
    %v1305 = vpop.permute.xlu0 %1304
    %1306 = vrot.lane.b32.xlu0 %v1291, 32
    %v1307 = vpop.permute.xlu0 %1306
    %vm1308 = vcmask 31744
    %v1311 = vsel %vm1308, %v900, %v949
    %v1314 = vsel %vm1308, %v901, %v951
    %v1317 = vsel %vm1308, %v902, %v953
    %v1320 = vsel %vm1308, %v903, %v955
    %v1323 = vsel %vm1308, %v904, %v957
    %v1326 = vsel %vm1308, %v905, %v959
    %v1329 = vsel %vm1308, %v906, %v961
    %v1332 = vsel %vm1308, %v907, %v963
    %vm1333 = vcmask 64512
    %v1335 = vsel %vm1333, %v1311, %v989
    %v1337 = vsel %vm1333, %v1314, %v991
    %v1339 = vsel %vm1333, %v1317, %v993
    %v1341 = vsel %vm1333, %v1320, %v995
    %v1343 = vsel %vm1333, %v1323, %v997
    %v1345 = vsel %vm1333, %v1326, %v999
    %v1347 = vsel %vm1333, %v1329, %v1001
    %v1349 = vsel %vm1333, %v1332, %v1003
    %vm1350 = vcmask 97280
    %v1352 = vsel %vm1350, %v1335, %v1045
    %v1354 = vsel %vm1350, %v1337, %v1047
    %v1356 = vsel %vm1350, %v1339, %v1049
    %v1358 = vsel %vm1350, %v1341, %v1051
    %v1360 = vsel %vm1350, %v1343, %v1053
    %v1362 = vsel %vm1350, %v1345, %v1055
    %v1364 = vsel %vm1350, %v1347, %v1057
    %v1366 = vsel %vm1350, %v1349, %v1059
    %vm1367 = vcmask 130048
    %v1369 = vsel %vm1367, %v1352, %v1101
    %v1371 = vsel %vm1367, %v1354, %v1103
    %v1373 = vsel %vm1367, %v1356, %v1105
    %v1375 = vsel %vm1367, %v1358, %v1107
    %v1377 = vsel %vm1367, %v1360, %v1109
    %v1379 = vsel %vm1367, %v1362, %v1111
    %v1381 = vsel %vm1367, %v1364, %v1113
    %v1383 = vsel %vm1367, %v1366, %v1115
    %vm1384 = vcmask 162816
    %v1386 = vsel %vm1384, %v1369, %v1141
    %v1388 = vsel %vm1384, %v1371, %v1143
    %v1390 = vsel %vm1384, %v1373, %v1145
    %v1392 = vsel %vm1384, %v1375, %v1147
    %v1394 = vsel %vm1384, %v1377, %v1149
    %v1396 = vsel %vm1384, %v1379, %v1151
    %v1398 = vsel %vm1384, %v1381, %v1153
    %v1400 = vsel %vm1384, %v1383, %v1155
    %vm1401 = vcmask 195584
    %v1403 = vsel %vm1401, %v1386, %v1197
    %v1405 = vsel %vm1401, %v1388, %v1199
    %v1407 = vsel %vm1401, %v1390, %v1201
    %v1409 = vsel %vm1401, %v1392, %v1203
    %v1411 = vsel %vm1401, %v1394, %v1205
    %v1413 = vsel %vm1401, %v1396, %v1207
    %v1415 = vsel %vm1401, %v1398, %v1209
    %v1417 = vsel %vm1401, %v1400, %v1211
    %vm1418 = vcmask 228352
    %v1420 = vsel %vm1418, %v1403, %v1253
    %v1422 = vsel %vm1418, %v1405, %v1255
    %v1424 = vsel %vm1418, %v1407, %v1257
    %v1426 = vsel %vm1418, %v1409, %v1259
    %v1428 = vsel %vm1418, %v1411, %v1261
    %v1430 = vsel %vm1418, %v1413, %v1263
    %v1432 = vsel %vm1418, %v1415, %v1265
    %v1434 = vsel %vm1418, %v1417, %v1267
    %vm1435 = vcmask 261120
    %v1437 = vsel %vm1435, %v1420, %v1293
    %v1439 = vsel %vm1435, %v1422, %v1295
    %v1441 = vsel %vm1435, %v1424, %v1297
    %v1443 = vsel %vm1435, %v1426, %v1299
    %v1445 = vsel %vm1435, %v1428, %v1301
    %v1447 = vsel %vm1435, %v1430, %v1303
    %v1449 = vsel %vm1435, %v1432, %v1305
    %v1451 = vsel %vm1435, %v1434, %v1307
    %v1452 = vld [vmem:[%s4] sm:$0xf]
    %v1453 = vld [vmem:[%s4 + $0x4] sm:$0xf]
    %v1454 = vld [vmem:[%s4 + $0x8] sm:$0xf]
    %v1455 = vld [vmem:[%s4 + $0xc] sm:$0xf]
    %v1456 = vld [vmem:[%s4 + $0x10] sm:$0x3]
    %v1457 = vld [vmem:[%s5] sm:$0x1]
    %v1459 = vperm.slane %v1457, 0
    %v1466 = vunpack.c.l.b16 %v1452
    %v1467 = vunpack.c.l.b16 %v1453
    %v1468 = vunpack.c.l.b16 %v1454
    %v1469 = vunpack.c.l.b16 %v1455
    %v1470 = vunpack.c.l.b16 %v1456
    %v1471 = vpack.c.b16 %v1467, %v1466
    %v1472 = vpack.c.b16 %v1469, %v1468
    %v1473 = vpack.c.b16 %v1470, %v1470
    %vm1476 = vcmask 293888
    %v1477 = vsel %vm1476, %v1437, 0
    %v1479 = vsel %vm1476, %v1439, 0
    %v1481 = vsel %vm1476, %v1441, 0
    %v1483 = vsel %vm1476, %v1443, 0
    %v1485 = vsel %vm1476, %v1445, 0
    %v1487 = vsel %vm1476, %v1447, 0
    %v1489 = vsel %vm1476, %v1449, 0
    %v1491 = vsel %vm1476, %v1451, 0
    %vm1493 = vcmask 1041408
    %v1495 = vsel %vm1493, %v1473, 0
    %1497 = vmatpush.bf16.msra.mxu0 0
    %1498 = vmatpush.bf16.msra.mxu0 0
    %1499 = vmatpush.bf16.msra.mxu0 0
    %1500 = vmatpush.bf16.msra.mxu0 0
    %1501 = vmatpush.bf16.msra.mxu0 0
    %1502 = vmatpush.bf16.msra.mxu0 %v1495
    %1503 = vmatpush.bf16.msra.mxu0 %v1472
    %1504 = vmatpush.bf16.msra.mxu0 %v1471
    %1505 = vmatmul.bf16.gmra.mxu0 %v1477
    %v1506 = vpop.f32.mrf.mxu0
    %v1507 = vadd.f32 %v1459, %v1506
    %v1508 = vpop.f32.mrf.mxu0
    %v1509 = vadd.f32 %v1459, %v1508
    %1510 = vmatmul.bf16.gmra.mxu0 %v1479
    %v1511 = vpop.f32.mrf.mxu0
    %v1512 = vadd.f32 %v1459, %v1511
    %v1513 = vpop.f32.mrf.mxu0
    %v1514 = vadd.f32 %v1459, %v1513
    %1515 = vmatmul.bf16.gmra.mxu0 %v1481
    %v1516 = vpop.f32.mrf.mxu0
    %v1517 = vadd.f32 %v1459, %v1516
    %v1518 = vpop.f32.mrf.mxu0
    %v1519 = vadd.f32 %v1459, %v1518
    %1520 = vmatmul.bf16.gmra.mxu0 %v1483
    %v1521 = vpop.f32.mrf.mxu0
    %v1522 = vadd.f32 %v1459, %v1521
    %v1523 = vpop.f32.mrf.mxu0
    %v1524 = vadd.f32 %v1459, %v1523
    %1525 = vmatmul.bf16.gmra.mxu0 %v1485
    %v1526 = vpop.f32.mrf.mxu0
    %v1527 = vadd.f32 %v1459, %v1526
    %v1528 = vpop.f32.mrf.mxu0
    %v1529 = vadd.f32 %v1459, %v1528
    %1530 = vmatmul.bf16.gmra.mxu0 %v1487
    %v1531 = vpop.f32.mrf.mxu0
    %v1532 = vadd.f32 %v1459, %v1531
    %v1533 = vpop.f32.mrf.mxu0
    %v1534 = vadd.f32 %v1459, %v1533
    %1535 = vmatmul.bf16.gmra.mxu0 %v1489
    %v1536 = vpop.f32.mrf.mxu0
    %v1537 = vadd.f32 %v1459, %v1536
    %v1538 = vpop.f32.mrf.mxu0
    %v1539 = vadd.f32 %v1459, %v1538
    %1540 = vmatmul.bf16.gmra.mxu0 %v1491
    %v1541 = vpop.f32.mrf.mxu0
    %v1542 = vadd.f32 %v1459, %v1541
    %v1543 = vpop.f32.mrf.mxu0
    %v1544 = vadd.f32 %v1459, %v1543
    %1545 = vdwg.mxu0
    %v1546 = vmax.f32 %v1507, 0.0
    %v1547 = vmax.f32 %v1509, 0.0
    %v1548 = vmax.f32 %v1512, 0.0
    %v1549 = vmax.f32 %v1514, 0.0
    %v1550 = vmax.f32 %v1517, 0.0
    %v1551 = vmax.f32 %v1519, 0.0
    %v1552 = vmax.f32 %v1522, 0.0
    %v1553 = vmax.f32 %v1524, 0.0
    %v1554 = vmax.f32 %v1527, 0.0
    %v1555 = vmax.f32 %v1529, 0.0
    %v1556 = vmax.f32 %v1532, 0.0
    %v1557 = vmax.f32 %v1534, 0.0
    %v1558 = vmax.f32 %v1537, 0.0
    %v1559 = vmax.f32 %v1539, 0.0
    %v1560 = vmax.f32 %v1542, 0.0
    %v1561 = vmax.f32 %v1544, 0.0
    %v1562 = vpack.c.bf16 %v1546, %v1546
    %v1563 = vpack.c.bf16 %v1547, %v1547
    %v1564 = vpack.c.bf16 %v1548, %v1548
    %v1565 = vpack.c.bf16 %v1549, %v1549
    %v1566 = vpack.c.bf16 %v1550, %v1550
    %v1567 = vpack.c.bf16 %v1551, %v1551
    %v1568 = vpack.c.bf16 %v1552, %v1552
    %v1569 = vpack.c.bf16 %v1553, %v1553
    %v1570 = vpack.c.bf16 %v1554, %v1554
    %v1571 = vpack.c.bf16 %v1555, %v1555
    %v1572 = vpack.c.bf16 %v1556, %v1556
    %v1573 = vpack.c.bf16 %v1557, %v1557
    %v1574 = vpack.c.bf16 %v1558, %v1558
    %v1575 = vpack.c.bf16 %v1559, %v1559
    %v1576 = vpack.c.bf16 %v1560, %v1560
    %v1577 = vpack.c.bf16 %v1561, %v1561
    %1578 = vst [vmem:[#allocation2] sm:$0xf] 0
    %1579 = vst [vmem:[#allocation2 + $0x4] sm:$0x1] 0
    %1580 = vst [vmem:[#allocation2 + $0x50] sm:$0xf] 0
    %1581 = vst [vmem:[#allocation2 + $0x54] sm:$0x1] 0
    %s1582 = scalar_lea.vmem [#allocation2], 72
    %1583 = vst [vmem:[%s1582] sm:$0xf] 0
    %1584 = vst [vmem:[%s1582 + $0x4] sm:$0x1] 0
    %1585 = vst [vmem:[%s1582 + $0x50] sm:$0xf] 0
    %1586 = vst [vmem:[%s1582 + $0x54] sm:$0x1] 0
    %s1587 = scalar_lea.vmem [#allocation2], 8
    %vm1588 = vcmask 1040384
    %vm1589 = vsmask.f32 256
    %vm1590 = vmand %vm1588, %vm1589
    %v1591 = vld [vmem:[%s1587] sm:$0x1]
    %v1592 = vsel %vm1590, 0, %v1591
    %1593 = vst [vmem:[%s1587] sm:$0x1] %v1592
    %v1594 = vld [vmem:[%s1587 + $0x8] sm:$0x1]
    %v1595 = vsel %vm1590, 0, %v1594
    %1596 = vst [vmem:[%s1587 + $0x8] sm:$0x1] %v1595
    %v1597 = vld [vmem:[%s1587 + $0x10] sm:$0x1]
    %v1598 = vsel %vm1590, 0, %v1597
    %1599 = vst [vmem:[%s1587 + $0x10] sm:$0x1] %v1598
    %v1600 = vld [vmem:[%s1587 + $0x18] sm:$0x1]
    %v1601 = vsel %vm1590, 0, %v1600
    %1602 = vst [vmem:[%s1587 + $0x18] sm:$0x1] %v1601
    %v1603 = vld [vmem:[%s1587 + $0x20] sm:$0x1]
    %v1604 = vsel %vm1590, 0, %v1603
    %1605 = vst [vmem:[%s1587 + $0x20] sm:$0x1] %v1604
    %v1606 = vld [vmem:[%s1587 + $0x28] sm:$0x1]
    %v1607 = vsel %vm1590, 0, %v1606
    %1608 = vst [vmem:[%s1587 + $0x28] sm:$0x1] %v1607
    %v1609 = vld [vmem:[%s1587 + $0x30] sm:$0x1]
    %v1610 = vsel %vm1590, 0, %v1609
    %1611 = vst [vmem:[%s1587 + $0x30] sm:$0x1] %v1610
    %v1612 = vld [vmem:[%s1587 + $0x38] sm:$0x1]
    %v1613 = vsel %vm1590, 0, %v1612
    %1614 = vst [vmem:[%s1587 + $0x38] sm:$0x1] %v1613
    %v1615 = vld [vmem:[%s1587 + $0x50] sm:$0x1]
    %v1616 = vsel %vm1590, 0, %v1615
    %1617 = vst [vmem:[%s1587 + $0x50] sm:$0x1] %v1616
    %v1618 = vld [vmem:[%s1587 + $0x58] sm:$0x1]
    %v1619 = vsel %vm1590, 0, %v1618
    %1620 = vst [vmem:[%s1587 + $0x58] sm:$0x1] %v1619
    %v1621 = vld [vmem:[%s1587 + $0x60] sm:$0x1]
    %v1622 = vsel %vm1590, 0, %v1621
    %1623 = vst [vmem:[%s1587 + $0x60] sm:$0x1] %v1622
    %v1624 = vld [vmem:[%s1587 + $0x68] sm:$0x1]
    %v1625 = vsel %vm1590, 0, %v1624
    %1626 = vst [vmem:[%s1587 + $0x68] sm:$0x1] %v1625
    %v1627 = vld [vmem:[%s1587 + $0x70] sm:$0x1]
    %v1628 = vsel %vm1590, 0, %v1627
    %1629 = vst [vmem:[%s1587 + $0x70] sm:$0x1] %v1628
    %v1630 = vld [vmem:[%s1587 + $0x78] sm:$0x1]
    %v1631 = vsel %vm1590, 0, %v1630
    %1632 = vst [vmem:[%s1587 + $0x78] sm:$0x1] %v1631
    %v1633 = vld [vmem:[%s1587 + $0x80] sm:$0x1]
    %v1634 = vsel %vm1590, 0, %v1633
    %1635 = vst [vmem:[%s1587 + $0x80] sm:$0x1] %v1634
    %v1636 = vld [vmem:[%s1587 + $0x88] sm:$0x1]
    %v1637 = vsel %vm1590, 0, %v1636
    %1638 = vst [vmem:[%s1587 + $0x88] sm:$0x1] %v1637
    %vm1639 = vsmask.f32 7938
    %vm1640 = vmand %vm1588, %vm1639
    %v1641 = vld [vmem:[%s1587 + $0x4] sm:$0x1]
    %v1642 = vsel %vm1640, 0, %v1641
    %1643 = vst [vmem:[%s1587 + $0x4] sm:$0x1] %v1642
    %v1644 = vld [vmem:[%s1587 + $0xc] sm:$0x1]
    %v1645 = vsel %vm1640, 0, %v1644
    %1646 = vst [vmem:[%s1587 + $0xc] sm:$0x1] %v1645
    %v1647 = vld [vmem:[%s1587 + $0x14] sm:$0x1]
    %v1648 = vsel %vm1640, 0, %v1647
    %1649 = vst [vmem:[%s1587 + $0x14] sm:$0x1] %v1648
    %v1650 = vld [vmem:[%s1587 + $0x1c] sm:$0x1]
    %v1651 = vsel %vm1640, 0, %v1650
    %1652 = vst [vmem:[%s1587 + $0x1c] sm:$0x1] %v1651
    %v1653 = vld [vmem:[%s1587 + $0x24] sm:$0x1]
    %v1654 = vsel %vm1640, 0, %v1653
    %1655 = vst [vmem:[%s1587 + $0x24] sm:$0x1] %v1654
    %v1656 = vld [vmem:[%s1587 + $0x2c] sm:$0x1]
    %v1657 = vsel %vm1640, 0, %v1656
    %1658 = vst [vmem:[%s1587 + $0x2c] sm:$0x1] %v1657
    %v1659 = vld [vmem:[%s1587 + $0x34] sm:$0x1]
    %v1660 = vsel %vm1640, 0, %v1659
    %1661 = vst [vmem:[%s1587 + $0x34] sm:$0x1] %v1660
    %v1662 = vld [vmem:[%s1587 + $0x3c] sm:$0x1]
    %v1663 = vsel %vm1640, 0, %v1662
    %1664 = vst [vmem:[%s1587 + $0x3c] sm:$0x1] %v1663
    %v1665 = vld [vmem:[%s1587 + $0x54] sm:$0x1]
    %v1666 = vsel %vm1640, 0, %v1665
    %1667 = vst [vmem:[%s1587 + $0x54] sm:$0x1] %v1666
    %v1668 = vld [vmem:[%s1587 + $0x5c] sm:$0x1]
    %v1669 = vsel %vm1640, 0, %v1668
    %1670 = vst [vmem:[%s1587 + $0x5c] sm:$0x1] %v1669
    %v1671 = vld [vmem:[%s1587 + $0x64] sm:$0x1]
    %v1672 = vsel %vm1640, 0, %v1671
    %1673 = vst [vmem:[%s1587 + $0x64] sm:$0x1] %v1672
    %v1674 = vld [vmem:[%s1587 + $0x6c] sm:$0x1]
    %v1675 = vsel %vm1640, 0, %v1674
    %1676 = vst [vmem:[%s1587 + $0x6c] sm:$0x1] %v1675
    %v1677 = vld [vmem:[%s1587 + $0x74] sm:$0x1]
    %v1678 = vsel %vm1640, 0, %v1677
    %1679 = vst [vmem:[%s1587 + $0x74] sm:$0x1] %v1678
    %v1680 = vld [vmem:[%s1587 + $0x7c] sm:$0x1]
    %v1681 = vsel %vm1640, 0, %v1680
    %1682 = vst [vmem:[%s1587 + $0x7c] sm:$0x1] %v1681
    %v1683 = vld [vmem:[%s1587 + $0x84] sm:$0x1]
    %v1684 = vsel %vm1640, 0, %v1683
    %1685 = vst [vmem:[%s1587 + $0x84] sm:$0x1] %v1684
    %v1686 = vld [vmem:[%s1587 + $0x8c] sm:$0x1]
    %v1687 = vsel %vm1640, 0, %v1686
    %1688 = vst [vmem:[%s1587 + $0x8c] sm:$0x1] %v1687
    %v1690 = vshrl.u32 %v1562, 16
    %v1692 = vrot.slane %v1690, 7
    %v1693 = vshll.u32 %v1562, 16
    %v1695 = vor.u32 %v1692, %v1693
    %v1696 = vrot.slane %v1692, 4
    %v1698 = vshrl.u32 %v1563, 16
    %v1700 = vrot.slane %v1698, 7
    %v1701 = vshll.u32 %v1563, 16
    %v1703 = vor.u32 %v1700, %v1701
    %v1704 = vrot.slane %v1700, 4
    %v1706 = vshrl.u32 %v1564, 16
    %v1708 = vrot.slane %v1706, 7
    %v1709 = vshll.u32 %v1564, 16
    %v1711 = vor.u32 %v1708, %v1709
    %v1712 = vrot.slane %v1708, 4
    %v1714 = vshrl.u32 %v1565, 16
    %v1716 = vrot.slane %v1714, 7
    %v1717 = vshll.u32 %v1565, 16
    %v1719 = vor.u32 %v1716, %v1717
    %v1720 = vrot.slane %v1716, 4
    %v1722 = vshrl.u32 %v1566, 16
    %v1724 = vrot.slane %v1722, 7
    %v1725 = vshll.u32 %v1566, 16
    %v1727 = vor.u32 %v1724, %v1725
    %v1728 = vrot.slane %v1724, 4
    %v1730 = vshrl.u32 %v1567, 16
    %v1732 = vrot.slane %v1730, 7
    %v1733 = vshll.u32 %v1567, 16
    %v1735 = vor.u32 %v1732, %v1733
    %v1736 = vrot.slane %v1732, 4
    %v1738 = vshrl.u32 %v1568, 16
    %v1740 = vrot.slane %v1738, 7
    %v1741 = vshll.u32 %v1568, 16
    %v1743 = vor.u32 %v1740, %v1741
    %v1744 = vrot.slane %v1740, 4
    %v1746 = vshrl.u32 %v1569, 16
    %v1748 = vrot.slane %v1746, 7
    %v1749 = vshll.u32 %v1569, 16
    %v1751 = vor.u32 %v1748, %v1749
    %v1752 = vrot.slane %v1748, 4
    %v1754 = vshrl.u32 %v1570, 16
    %v1756 = vrot.slane %v1754, 7
    %v1757 = vshll.u32 %v1570, 16
    %v1759 = vor.u32 %v1756, %v1757
    %v1760 = vrot.slane %v1756, 4
    %v1762 = vshrl.u32 %v1571, 16
    %v1764 = vrot.slane %v1762, 7
    %v1765 = vshll.u32 %v1571, 16
    %v1767 = vor.u32 %v1764, %v1765
    %v1768 = vrot.slane %v1764, 4
    %v1770 = vshrl.u32 %v1572, 16
    %v1772 = vrot.slane %v1770, 7
    %v1773 = vshll.u32 %v1572, 16
    %v1775 = vor.u32 %v1772, %v1773
    %v1776 = vrot.slane %v1772, 4
    %v1778 = vshrl.u32 %v1573, 16
    %v1780 = vrot.slane %v1778, 7
    %v1781 = vshll.u32 %v1573, 16
    %v1783 = vor.u32 %v1780, %v1781
    %v1784 = vrot.slane %v1780, 4
    %v1786 = vshrl.u32 %v1574, 16
    %v1788 = vrot.slane %v1786, 7
    %v1789 = vshll.u32 %v1574, 16
    %v1791 = vor.u32 %v1788, %v1789
    %v1792 = vrot.slane %v1788, 4
    %v1794 = vshrl.u32 %v1575, 16
    %v1796 = vrot.slane %v1794, 7
    %v1797 = vshll.u32 %v1575, 16
    %v1799 = vor.u32 %v1796, %v1797
    %v1800 = vrot.slane %v1796, 4
    %v1802 = vshrl.u32 %v1576, 16
    %v1804 = vrot.slane %v1802, 7
    %v1805 = vshll.u32 %v1576, 16
    %v1807 = vor.u32 %v1804, %v1805
    %v1808 = vrot.slane %v1804, 4
    %v1810 = vshrl.u32 %v1577, 16
    %v1812 = vrot.slane %v1810, 7
    %v1813 = vshll.u32 %v1577, 16
    %v1815 = vor.u32 %v1812, %v1813
    %v1816 = vrot.slane %v1812, 4
    %vm1849 = vcmask 1043456
    %vm1850 = vmand %vm1849, %vm1639
    %v1851 = vld [vmem:[%s1587] sm:$0xf]
    %v1852 = vsel %vm1850, %v1695, %v1851
    %1853 = vst [vmem:[%s1587] sm:$0xf] %v1852
    %v1854 = vld [vmem:[%s1587 + $0x4] sm:$0x1]
    %v1855 = vsel %vm1590, %v1696, %v1854
    %1856 = vst [vmem:[%s1587 + $0x4] sm:$0x1] %v1855
    %v1857 = vld [vmem:[%s1587 + $0x8] sm:$0xf]
    %v1858 = vsel %vm1850, %v1703, %v1857
    %1859 = vst [vmem:[%s1587 + $0x8] sm:$0xf] %v1858
    %v1860 = vld [vmem:[%s1587 + $0xc] sm:$0x1]
    %v1861 = vsel %vm1590, %v1704, %v1860
    %1862 = vst [vmem:[%s1587 + $0xc] sm:$0x1] %v1861
    %v1863 = vld [vmem:[%s1587 + $0x10] sm:$0xf]
    %v1864 = vsel %vm1850, %v1711, %v1863
    %1865 = vst [vmem:[%s1587 + $0x10] sm:$0xf] %v1864
    %v1866 = vld [vmem:[%s1587 + $0x14] sm:$0x1]
    %v1867 = vsel %vm1590, %v1712, %v1866
    %1868 = vst [vmem:[%s1587 + $0x14] sm:$0x1] %v1867
    %v1869 = vld [vmem:[%s1587 + $0x18] sm:$0xf]
    %v1870 = vsel %vm1850, %v1719, %v1869
    %1871 = vst [vmem:[%s1587 + $0x18] sm:$0xf] %v1870
    %v1872 = vld [vmem:[%s1587 + $0x1c] sm:$0x1]
    %v1873 = vsel %vm1590, %v1720, %v1872
    %1874 = vst [vmem:[%s1587 + $0x1c] sm:$0x1] %v1873
    %v1875 = vld [vmem:[%s1587 + $0x20] sm:$0xf]
    %v1876 = vsel %vm1850, %v1727, %v1875
    %1877 = vst [vmem:[%s1587 + $0x20] sm:$0xf] %v1876
    %v1878 = vld [vmem:[%s1587 + $0x24] sm:$0x1]
    %v1879 = vsel %vm1590, %v1728, %v1878
    %1880 = vst [vmem:[%s1587 + $0x24] sm:$0x1] %v1879
    %v1881 = vld [vmem:[%s1587 + $0x28] sm:$0xf]
    %v1882 = vsel %vm1850, %v1735, %v1881
    %1883 = vst [vmem:[%s1587 + $0x28] sm:$0xf] %v1882
    %v1884 = vld [vmem:[%s1587 + $0x2c] sm:$0x1]
    %v1885 = vsel %vm1590, %v1736, %v1884
    %1886 = vst [vmem:[%s1587 + $0x2c] sm:$0x1] %v1885
    %v1887 = vld [vmem:[%s1587 + $0x30] sm:$0xf]
    %v1888 = vsel %vm1850, %v1743, %v1887
    %1889 = vst [vmem:[%s1587 + $0x30] sm:$0xf] %v1888
    %v1890 = vld [vmem:[%s1587 + $0x34] sm:$0x1]
    %v1891 = vsel %vm1590, %v1744, %v1890
    %1892 = vst [vmem:[%s1587 + $0x34] sm:$0x1] %v1891
    %v1893 = vld [vmem:[%s1587 + $0x38] sm:$0xf]
    %v1894 = vsel %vm1850, %v1751, %v1893
    %1895 = vst [vmem:[%s1587 + $0x38] sm:$0xf] %v1894
    %v1896 = vld [vmem:[%s1587 + $0x3c] sm:$0x1]
    %v1897 = vsel %vm1590, %v1752, %v1896
    %1898 = vst [vmem:[%s1587 + $0x3c] sm:$0x1] %v1897
    %v1899 = vld [vmem:[%s1587 + $0x50] sm:$0xf]
    %v1900 = vsel %vm1850, %v1759, %v1899
    %1901 = vst [vmem:[%s1587 + $0x50] sm:$0xf] %v1900
    %v1902 = vld [vmem:[%s1587 + $0x54] sm:$0x1]
    %v1903 = vsel %vm1590, %v1760, %v1902
    %1904 = vst [vmem:[%s1587 + $0x54] sm:$0x1] %v1903
    %v1905 = vld [vmem:[%s1587 + $0x58] sm:$0xf]
    %v1906 = vsel %vm1850, %v1767, %v1905
    %1907 = vst [vmem:[%s1587 + $0x58] sm:$0xf] %v1906
    %v1908 = vld [vmem:[%s1587 + $0x5c] sm:$0x1]
    %v1909 = vsel %vm1590, %v1768, %v1908
    %1910 = vst [vmem:[%s1587 + $0x5c] sm:$0x1] %v1909
    %v1911 = vld [vmem:[%s1587 + $0x60] sm:$0xf]
    %v1912 = vsel %vm1850, %v1775, %v1911
    %1913 = vst [vmem:[%s1587 + $0x60] sm:$0xf] %v1912
    %v1914 = vld [vmem:[%s1587 + $0x64] sm:$0x1]
    %v1915 = vsel %vm1590, %v1776, %v1914
    %1916 = vst [vmem:[%s1587 + $0x64] sm:$0x1] %v1915
    %v1917 = vld [vmem:[%s1587 + $0x68] sm:$0xf]
    %v1918 = vsel %vm1850, %v1783, %v1917
    %1919 = vst [vmem:[%s1587 + $0x68] sm:$0xf] %v1918
    %v1920 = vld [vmem:[%s1587 + $0x6c] sm:$0x1]
    %v1921 = vsel %vm1590, %v1784, %v1920
    %1922 = vst [vmem:[%s1587 + $0x6c] sm:$0x1] %v1921
    %v1923 = vld [vmem:[%s1587 + $0x70] sm:$0xf]
    %v1924 = vsel %vm1850, %v1791, %v1923
    %1925 = vst [vmem:[%s1587 + $0x70] sm:$0xf] %v1924
    %v1926 = vld [vmem:[%s1587 + $0x74] sm:$0x1]
    %v1927 = vsel %vm1590, %v1792, %v1926
    %1928 = vst [vmem:[%s1587 + $0x74] sm:$0x1] %v1927
    %v1929 = vld [vmem:[%s1587 + $0x78] sm:$0xf]
    %v1930 = vsel %vm1850, %v1799, %v1929
    %1931 = vst [vmem:[%s1587 + $0x78] sm:$0xf] %v1930
    %v1932 = vld [vmem:[%s1587 + $0x7c] sm:$0x1]
    %v1933 = vsel %vm1590, %v1800, %v1932
    %1934 = vst [vmem:[%s1587 + $0x7c] sm:$0x1] %v1933
    %v1935 = vld [vmem:[%s1587 + $0x80] sm:$0xf]
    %v1936 = vsel %vm1850, %v1807, %v1935
    %1937 = vst [vmem:[%s1587 + $0x80] sm:$0xf] %v1936
    %v1938 = vld [vmem:[%s1587 + $0x84] sm:$0x1]
    %v1939 = vsel %vm1590, %v1808, %v1938
    %1940 = vst [vmem:[%s1587 + $0x84] sm:$0x1] %v1939
    %v1941 = vld [vmem:[%s1587 + $0x88] sm:$0xf]
    %v1942 = vsel %vm1850, %v1815, %v1941
    %1943 = vst [vmem:[%s1587 + $0x88] sm:$0xf] %v1942
    %v1944 = vld [vmem:[%s1587 + $0x8c] sm:$0x1]
    %v1945 = vsel %vm1590, %v1816, %v1944
    %1946 = vst [vmem:[%s1587 + $0x8c] sm:$0x1] %v1945
    %v1947 = vld [vmem:[#allocation2] sm:$0xf]
    %v1948 = vld [vmem:[#allocation2 + $0x8] sm:$0xf]
    %v1949 = vld [vmem:[#allocation2 + $0x10] sm:$0xf]
    %v1950 = vld [vmem:[#allocation2 + $0x18] sm:$0xf]
    %v1951 = vld [vmem:[#allocation2 + $0x20] sm:$0xf]
    %v1952 = vld [vmem:[#allocation2 + $0x28] sm:$0xf]
    %v1953 = vld [vmem:[#allocation2 + $0x30] sm:$0xf]
    %v1954 = vld [vmem:[#allocation2 + $0x38] sm:$0xf]
    %v1955 = vld [vmem:[#allocation2 + $0x50] sm:$0xf]
    %v1956 = vld [vmem:[#allocation2 + $0x58] sm:$0xf]
    %v1957 = vld [vmem:[#allocation2 + $0x60] sm:$0xf]
    %v1958 = vld [vmem:[#allocation2 + $0x68] sm:$0xf]
    %v1959 = vld [vmem:[#allocation2 + $0x70] sm:$0xf]
    %v1960 = vld [vmem:[#allocation2 + $0x78] sm:$0xf]
    %v1961 = vld [vmem:[#allocation2 + $0x80] sm:$0xf]
    %v1962 = vld [vmem:[#allocation2 + $0x88] sm:$0xf]
    %v1963 = vld [vmem:[#allocation2 + $0x4] sm:$0x1]
    %v1964 = vld [vmem:[#allocation2 + $0xc] sm:$0x1]
    %v1965 = vld [vmem:[#allocation2 + $0x14] sm:$0x1]
    %v1966 = vld [vmem:[#allocation2 + $0x1c] sm:$0x1]
    %v1967 = vld [vmem:[#allocation2 + $0x24] sm:$0x1]
    %v1968 = vld [vmem:[#allocation2 + $0x2c] sm:$0x1]
    %v1969 = vld [vmem:[#allocation2 + $0x34] sm:$0x1]
    %v1970 = vld [vmem:[#allocation2 + $0x3c] sm:$0x1]
    %v1971 = vld [vmem:[#allocation2 + $0x54] sm:$0x1]
    %v1972 = vld [vmem:[#allocation2 + $0x5c] sm:$0x1]
    %v1973 = vld [vmem:[#allocation2 + $0x64] sm:$0x1]
    %v1974 = vld [vmem:[#allocation2 + $0x6c] sm:$0x1]
    %v1975 = vld [vmem:[#allocation2 + $0x74] sm:$0x1]
    %v1976 = vld [vmem:[#allocation2 + $0x7c] sm:$0x1]
    %v1977 = vld [vmem:[#allocation2 + $0x84] sm:$0x1]
    %v1978 = vld [vmem:[#allocation2 + $0x8c] sm:$0x1]
    %v1980 = vshrl.u32 %v1947, 16
    %v1982 = vrot.slane %v1980, 4
    %v1983 = vshll.u32 %v1947, 16
    %v1985 = vrot.slane %v1983, 5
    %v1986 = vor.u32 %v1982, %v1985
    %v1987 = vrot.slane %v1986, 4
    %v1989 = vshll.u32 %v1963, 16
    %v1991 = vrot.slane %v1989, 5
    %v1992 = vsel %vm97, %v1987, %v1991
    %v1994 = vshrl.u32 %v1948, 16
    %v1996 = vrot.slane %v1994, 4
    %v1997 = vshll.u32 %v1948, 16
    %v1999 = vrot.slane %v1997, 5
    %v2000 = vor.u32 %v1996, %v1999
    %v2001 = vrot.slane %v2000, 4
    %v2003 = vshll.u32 %v1964, 16
    %v2005 = vrot.slane %v2003, 5
    %v2006 = vsel %vm97, %v2001, %v2005
    %v2008 = vshrl.u32 %v1949, 16
    %v2010 = vrot.slane %v2008, 4
    %v2011 = vshll.u32 %v1949, 16
    %v2013 = vrot.slane %v2011, 5
    %v2014 = vor.u32 %v2010, %v2013
    %v2015 = vrot.slane %v2014, 4
    %v2017 = vshll.u32 %v1965, 16
    %v2019 = vrot.slane %v2017, 5
    %v2020 = vsel %vm97, %v2015, %v2019
    %v2022 = vshrl.u32 %v1950, 16
    %v2024 = vrot.slane %v2022, 4
    %v2025 = vshll.u32 %v1950, 16
    %v2027 = vrot.slane %v2025, 5
    %v2028 = vor.u32 %v2024, %v2027
    %v2029 = vrot.slane %v2028, 4
    %v2031 = vshll.u32 %v1966, 16
    %v2033 = vrot.slane %v2031, 5
    %v2034 = vsel %vm97, %v2029, %v2033
    %v2036 = vshrl.u32 %v1951, 16
    %v2038 = vrot.slane %v2036, 4
    %v2039 = vshll.u32 %v1951, 16
    %v2041 = vrot.slane %v2039, 5
    %v2042 = vor.u32 %v2038, %v2041
    %v2043 = vrot.slane %v2042, 4
    %v2045 = vshll.u32 %v1967, 16
    %v2047 = vrot.slane %v2045, 5
    %v2048 = vsel %vm97, %v2043, %v2047
    %v2050 = vshrl.u32 %v1952, 16
    %v2052 = vrot.slane %v2050, 4
    %v2053 = vshll.u32 %v1952, 16
    %v2055 = vrot.slane %v2053, 5
    %v2056 = vor.u32 %v2052, %v2055
    %v2057 = vrot.slane %v2056, 4
    %v2059 = vshll.u32 %v1968, 16
    %v2061 = vrot.slane %v2059, 5
    %v2062 = vsel %vm97, %v2057, %v2061
    %v2064 = vshrl.u32 %v1953, 16
    %v2066 = vrot.slane %v2064, 4
    %v2067 = vshll.u32 %v1953, 16
    %v2069 = vrot.slane %v2067, 5
    %v2070 = vor.u32 %v2066, %v2069
    %v2071 = vrot.slane %v2070, 4
    %v2073 = vshll.u32 %v1969, 16
    %v2075 = vrot.slane %v2073, 5
    %v2076 = vsel %vm97, %v2071, %v2075
    %v2078 = vshrl.u32 %v1954, 16
    %v2080 = vrot.slane %v2078, 4
    %v2081 = vshll.u32 %v1954, 16
    %v2083 = vrot.slane %v2081, 5
    %v2084 = vor.u32 %v2080, %v2083
    %v2085 = vrot.slane %v2084, 4
    %v2087 = vshll.u32 %v1970, 16
    %v2089 = vrot.slane %v2087, 5
    %v2090 = vsel %vm97, %v2085, %v2089
    %v2092 = vshrl.u32 %v1955, 16
    %v2094 = vrot.slane %v2092, 4
    %v2095 = vshll.u32 %v1955, 16
    %v2097 = vrot.slane %v2095, 5
    %v2098 = vor.u32 %v2094, %v2097
    %v2099 = vrot.slane %v2098, 4
    %v2101 = vshll.u32 %v1971, 16
    %v2103 = vrot.slane %v2101, 5
    %v2104 = vsel %vm97, %v2099, %v2103
    %v2106 = vshrl.u32 %v1956, 16
    %v2108 = vrot.slane %v2106, 4
    %v2109 = vshll.u32 %v1956, 16
    %v2111 = vrot.slane %v2109, 5
    %v2112 = vor.u32 %v2108, %v2111
    %v2113 = vrot.slane %v2112, 4
    %v2115 = vshll.u32 %v1972, 16
    %v2117 = vrot.slane %v2115, 5
    %v2118 = vsel %vm97, %v2113, %v2117
    %v2120 = vshrl.u32 %v1957, 16
    %v2122 = vrot.slane %v2120, 4
    %v2123 = vshll.u32 %v1957, 16
    %v2125 = vrot.slane %v2123, 5
    %v2126 = vor.u32 %v2122, %v2125
    %v2127 = vrot.slane %v2126, 4
    %v2129 = vshll.u32 %v1973, 16
    %v2131 = vrot.slane %v2129, 5
    %v2132 = vsel %vm97, %v2127, %v2131
    %v2134 = vshrl.u32 %v1958, 16
    %v2136 = vrot.slane %v2134, 4
    %v2137 = vshll.u32 %v1958, 16
    %v2139 = vrot.slane %v2137, 5
    %v2140 = vor.u32 %v2136, %v2139
    %v2141 = vrot.slane %v2140, 4
    %v2143 = vshll.u32 %v1974, 16
    %v2145 = vrot.slane %v2143, 5
    %v2146 = vsel %vm97, %v2141, %v2145
    %v2148 = vshrl.u32 %v1959, 16
    %v2150 = vrot.slane %v2148, 4
    %v2151 = vshll.u32 %v1959, 16
    %v2153 = vrot.slane %v2151, 5
    %v2154 = vor.u32 %v2150, %v2153
    %v2155 = vrot.slane %v2154, 4
    %v2157 = vshll.u32 %v1975, 16
    %v2159 = vrot.slane %v2157, 5
    %v2160 = vsel %vm97, %v2155, %v2159
    %v2162 = vshrl.u32 %v1960, 16
    %v2164 = vrot.slane %v2162, 4
    %v2165 = vshll.u32 %v1960, 16
    %v2167 = vrot.slane %v2165, 5
    %v2168 = vor.u32 %v2164, %v2167
    %v2169 = vrot.slane %v2168, 4
    %v2171 = vshll.u32 %v1976, 16
    %v2173 = vrot.slane %v2171, 5
    %v2174 = vsel %vm97, %v2169, %v2173
    %v2176 = vshrl.u32 %v1961, 16
    %v2178 = vrot.slane %v2176, 4
    %v2179 = vshll.u32 %v1961, 16
    %v2181 = vrot.slane %v2179, 5
    %v2182 = vor.u32 %v2178, %v2181
    %v2183 = vrot.slane %v2182, 4
    %v2185 = vshll.u32 %v1977, 16
    %v2187 = vrot.slane %v2185, 5
    %v2188 = vsel %vm97, %v2183, %v2187
    %v2190 = vshrl.u32 %v1962, 16
    %v2192 = vrot.slane %v2190, 4
    %v2193 = vshll.u32 %v1962, 16
    %v2195 = vrot.slane %v2193, 5
    %v2196 = vor.u32 %v2192, %v2195
    %v2197 = vrot.slane %v2196, 4
    %v2199 = vshll.u32 %v1978, 16
    %v2201 = vrot.slane %v2199, 5
    %v2202 = vsel %vm97, %v2197, %v2201
    %v2203 = vld [vmem:[#allocation2] sm:$0xe]
    %v2204 = vld [vmem:[#allocation2 + $0x8] sm:$0xe]
    %v2205 = vld [vmem:[#allocation2 + $0x10] sm:$0xe]
    %v2206 = vld [vmem:[#allocation2 + $0x18] sm:$0xe]
    %v2207 = vld [vmem:[#allocation2 + $0x20] sm:$0xe]
    %v2208 = vld [vmem:[#allocation2 + $0x28] sm:$0xe]
    %v2209 = vld [vmem:[#allocation2 + $0x30] sm:$0xe]
    %v2210 = vld [vmem:[#allocation2 + $0x38] sm:$0xe]
    %v2211 = vld [vmem:[#allocation2 + $0x50] sm:$0xe]
    %v2212 = vld [vmem:[#allocation2 + $0x58] sm:$0xe]
    %v2213 = vld [vmem:[#allocation2 + $0x60] sm:$0xe]
    %v2214 = vld [vmem:[#allocation2 + $0x68] sm:$0xe]
    %v2215 = vld [vmem:[#allocation2 + $0x70] sm:$0xe]
    %v2216 = vld [vmem:[#allocation2 + $0x78] sm:$0xe]
    %v2217 = vld [vmem:[#allocation2 + $0x80] sm:$0xe]
    %v2218 = vld [vmem:[#allocation2 + $0x88] sm:$0xe]
    %vm2251 = vcmask 1042432
    %vm2252 = vcmask 1046532
    %vm2253 = vmor %vm2251, %vm2252
    %v2254 = vrot.slane %v2203, 5
    %v2255 = vrot.slane %v2254, 4
    %v2256 = vrot.slane %v1963, 5
    %v2257 = vsel %vm2253, %v2255, %v2256
    %v2258 = vrot.slane %v2204, 5
    %v2259 = vrot.slane %v2258, 4
    %v2260 = vrot.slane %v1964, 5
    %v2261 = vsel %vm2253, %v2259, %v2260
    %v2262 = vrot.slane %v2205, 5
    %v2263 = vrot.slane %v2262, 4
    %v2264 = vrot.slane %v1965, 5
    %v2265 = vsel %vm2253, %v2263, %v2264
    %v2266 = vrot.slane %v2206, 5
    %v2267 = vrot.slane %v2266, 4
    %v2268 = vrot.slane %v1966, 5
    %v2269 = vsel %vm2253, %v2267, %v2268
    %v2270 = vrot.slane %v2207, 5
    %v2271 = vrot.slane %v2270, 4
    %v2272 = vrot.slane %v1967, 5
    %v2273 = vsel %vm2253, %v2271, %v2272
    %v2274 = vrot.slane %v2208, 5
    %v2275 = vrot.slane %v2274, 4
    %v2276 = vrot.slane %v1968, 5
    %v2277 = vsel %vm2253, %v2275, %v2276
    %v2278 = vrot.slane %v2209, 5
    %v2279 = vrot.slane %v2278, 4
    %v2280 = vrot.slane %v1969, 5
    %v2281 = vsel %vm2253, %v2279, %v2280
    %v2282 = vrot.slane %v2210, 5
    %v2283 = vrot.slane %v2282, 4
    %v2284 = vrot.slane %v1970, 5
    %v2285 = vsel %vm2253, %v2283, %v2284
    %v2286 = vrot.slane %v2211, 5
    %v2287 = vrot.slane %v2286, 4
    %v2288 = vrot.slane %v1971, 5
    %v2289 = vsel %vm2253, %v2287, %v2288
    %v2290 = vrot.slane %v2212, 5
    %v2291 = vrot.slane %v2290, 4
    %v2292 = vrot.slane %v1972, 5
    %v2293 = vsel %vm2253, %v2291, %v2292
    %v2294 = vrot.slane %v2213, 5
    %v2295 = vrot.slane %v2294, 4
    %v2296 = vrot.slane %v1973, 5
    %v2297 = vsel %vm2253, %v2295, %v2296
    %v2298 = vrot.slane %v2214, 5
    %v2299 = vrot.slane %v2298, 4
    %v2300 = vrot.slane %v1974, 5
    %v2301 = vsel %vm2253, %v2299, %v2300
    %v2302 = vrot.slane %v2215, 5
    %v2303 = vrot.slane %v2302, 4
    %v2304 = vrot.slane %v1975, 5
    %v2305 = vsel %vm2253, %v2303, %v2304
    %v2306 = vrot.slane %v2216, 5
    %v2307 = vrot.slane %v2306, 4
    %v2308 = vrot.slane %v1976, 5
    %v2309 = vsel %vm2253, %v2307, %v2308
    %v2310 = vrot.slane %v2217, 5
    %v2311 = vrot.slane %v2310, 4
    %v2312 = vrot.slane %v1977, 5
    %v2313 = vsel %vm2253, %v2311, %v2312
    %v2314 = vrot.slane %v2218, 5
    %v2315 = vrot.slane %v2314, 4
    %v2316 = vrot.slane %v1978, 5
    %v2317 = vsel %vm2253, %v2315, %v2316
    %v2318 = vld [vmem:[%s1587] sm:$0xf]
    %v2319 = vld [vmem:[%s1587 + $0x8] sm:$0xf]
    %v2320 = vld [vmem:[%s1587 + $0x10] sm:$0xf]
    %v2321 = vld [vmem:[%s1587 + $0x18] sm:$0xf]
    %v2322 = vld [vmem:[%s1587 + $0x20] sm:$0xf]
    %v2323 = vld [vmem:[%s1587 + $0x28] sm:$0xf]
    %v2324 = vld [vmem:[%s1587 + $0x30] sm:$0xf]
    %v2325 = vld [vmem:[%s1587 + $0x38] sm:$0xf]
    %v2326 = vld [vmem:[%s1587 + $0x50] sm:$0xf]
    %v2327 = vld [vmem:[%s1587 + $0x58] sm:$0xf]
    %v2328 = vld [vmem:[%s1587 + $0x60] sm:$0xf]
    %v2329 = vld [vmem:[%s1587 + $0x68] sm:$0xf]
    %v2330 = vld [vmem:[%s1587 + $0x70] sm:$0xf]
    %v2331 = vld [vmem:[%s1587 + $0x78] sm:$0xf]
    %v2332 = vld [vmem:[%s1587 + $0x80] sm:$0xf]
    %v2333 = vld [vmem:[%s1587 + $0x88] sm:$0xf]
    %v2334 = vld [vmem:[%s1587 + $0x4] sm:$0x1]
    %v2335 = vld [vmem:[%s1587 + $0xc] sm:$0x1]
    %v2336 = vld [vmem:[%s1587 + $0x14] sm:$0x1]
    %v2337 = vld [vmem:[%s1587 + $0x1c] sm:$0x1]
    %v2338 = vld [vmem:[%s1587 + $0x24] sm:$0x1]
    %v2339 = vld [vmem:[%s1587 + $0x2c] sm:$0x1]
    %v2340 = vld [vmem:[%s1587 + $0x34] sm:$0x1]
    %v2341 = vld [vmem:[%s1587 + $0x3c] sm:$0x1]
    %v2342 = vld [vmem:[%s1587 + $0x54] sm:$0x1]
    %v2343 = vld [vmem:[%s1587 + $0x5c] sm:$0x1]
    %v2344 = vld [vmem:[%s1587 + $0x64] sm:$0x1]
    %v2345 = vld [vmem:[%s1587 + $0x6c] sm:$0x1]
    %v2346 = vld [vmem:[%s1587 + $0x74] sm:$0x1]
    %v2347 = vld [vmem:[%s1587 + $0x7c] sm:$0x1]
    %v2348 = vld [vmem:[%s1587 + $0x84] sm:$0x1]
    %v2349 = vld [vmem:[%s1587 + $0x8c] sm:$0x1]
    %v2351 = vshrl.u32 %v2318, 16
    %v2353 = vrot.slane %v2351, 4
    %v2354 = vshll.u32 %v2318, 16
    %v2356 = vrot.slane %v2354, 5
    %v2357 = vor.u32 %v2353, %v2356
    %v2358 = vrot.slane %v2357, 4
    %v2360 = vshll.u32 %v2334, 16
    %v2362 = vrot.slane %v2360, 5
    %v2363 = vsel %vm97, %v2358, %v2362
    %v2365 = vshrl.u32 %v2319, 16
    %v2367 = vrot.slane %v2365, 4
    %v2368 = vshll.u32 %v2319, 16
    %v2370 = vrot.slane %v2368, 5
    %v2371 = vor.u32 %v2367, %v2370
    %v2372 = vrot.slane %v2371, 4
    %v2374 = vshll.u32 %v2335, 16
    %v2376 = vrot.slane %v2374, 5
    %v2377 = vsel %vm97, %v2372, %v2376
    %v2379 = vshrl.u32 %v2320, 16
    %v2381 = vrot.slane %v2379, 4
    %v2382 = vshll.u32 %v2320, 16
    %v2384 = vrot.slane %v2382, 5
    %v2385 = vor.u32 %v2381, %v2384
    %v2386 = vrot.slane %v2385, 4
    %v2388 = vshll.u32 %v2336, 16
    %v2390 = vrot.slane %v2388, 5
    %v2391 = vsel %vm97, %v2386, %v2390
    %v2393 = vshrl.u32 %v2321, 16
    %v2395 = vrot.slane %v2393, 4
    %v2396 = vshll.u32 %v2321, 16
    %v2398 = vrot.slane %v2396, 5
    %v2399 = vor.u32 %v2395, %v2398
    %v2400 = vrot.slane %v2399, 4
    %v2402 = vshll.u32 %v2337, 16
    %v2404 = vrot.slane %v2402, 5
    %v2405 = vsel %vm97, %v2400, %v2404
    %v2407 = vshrl.u32 %v2322, 16
    %v2409 = vrot.slane %v2407, 4
    %v2410 = vshll.u32 %v2322, 16
    %v2412 = vrot.slane %v2410, 5
    %v2413 = vor.u32 %v2409, %v2412
    %v2414 = vrot.slane %v2413, 4
    %v2416 = vshll.u32 %v2338, 16
    %v2418 = vrot.slane %v2416, 5
    %v2419 = vsel %vm97, %v2414, %v2418
    %v2421 = vshrl.u32 %v2323, 16
    %v2423 = vrot.slane %v2421, 4
    %v2424 = vshll.u32 %v2323, 16
    %v2426 = vrot.slane %v2424, 5
    %v2427 = vor.u32 %v2423, %v2426
    %v2428 = vrot.slane %v2427, 4
    %v2430 = vshll.u32 %v2339, 16
    %v2432 = vrot.slane %v2430, 5
    %v2433 = vsel %vm97, %v2428, %v2432
    %v2435 = vshrl.u32 %v2324, 16
    %v2437 = vrot.slane %v2435, 4
    %v2438 = vshll.u32 %v2324, 16
    %v2440 = vrot.slane %v2438, 5
    %v2441 = vor.u32 %v2437, %v2440
    %v2442 = vrot.slane %v2441, 4
    %v2444 = vshll.u32 %v2340, 16
    %v2446 = vrot.slane %v2444, 5
    %v2447 = vsel %vm97, %v2442, %v2446
    %v2449 = vshrl.u32 %v2325, 16
    %v2451 = vrot.slane %v2449, 4
    %v2452 = vshll.u32 %v2325, 16
    %v2454 = vrot.slane %v2452, 5
    %v2455 = vor.u32 %v2451, %v2454
    %v2456 = vrot.slane %v2455, 4
    %v2458 = vshll.u32 %v2341, 16
    %v2460 = vrot.slane %v2458, 5
    %v2461 = vsel %vm97, %v2456, %v2460
    %v2463 = vshrl.u32 %v2326, 16
    %v2465 = vrot.slane %v2463, 4
    %v2466 = vshll.u32 %v2326, 16
    %v2468 = vrot.slane %v2466, 5
    %v2469 = vor.u32 %v2465, %v2468
    %v2470 = vrot.slane %v2469, 4
    %v2472 = vshll.u32 %v2342, 16
    %v2474 = vrot.slane %v2472, 5
    %v2475 = vsel %vm97, %v2470, %v2474
    %v2477 = vshrl.u32 %v2327, 16
    %v2479 = vrot.slane %v2477, 4
    %v2480 = vshll.u32 %v2327, 16
    %v2482 = vrot.slane %v2480, 5
    %v2483 = vor.u32 %v2479, %v2482
    %v2484 = vrot.slane %v2483, 4
    %v2486 = vshll.u32 %v2343, 16
    %v2488 = vrot.slane %v2486, 5
    %v2489 = vsel %vm97, %v2484, %v2488
    %v2491 = vshrl.u32 %v2328, 16
    %v2493 = vrot.slane %v2491, 4
    %v2494 = vshll.u32 %v2328, 16
    %v2496 = vrot.slane %v2494, 5
    %v2497 = vor.u32 %v2493, %v2496
    %v2498 = vrot.slane %v2497, 4
    %v2500 = vshll.u32 %v2344, 16
    %v2502 = vrot.slane %v2500, 5
    %v2503 = vsel %vm97, %v2498, %v2502
    %v2505 = vshrl.u32 %v2329, 16
    %v2507 = vrot.slane %v2505, 4
    %v2508 = vshll.u32 %v2329, 16
    %v2510 = vrot.slane %v2508, 5
    %v2511 = vor.u32 %v2507, %v2510
    %v2512 = vrot.slane %v2511, 4
    %v2514 = vshll.u32 %v2345, 16
    %v2516 = vrot.slane %v2514, 5
    %v2517 = vsel %vm97, %v2512, %v2516
    %v2519 = vshrl.u32 %v2330, 16
    %v2521 = vrot.slane %v2519, 4
    %v2522 = vshll.u32 %v2330, 16
    %v2524 = vrot.slane %v2522, 5
    %v2525 = vor.u32 %v2521, %v2524
    %v2526 = vrot.slane %v2525, 4
    %v2528 = vshll.u32 %v2346, 16
    %v2530 = vrot.slane %v2528, 5
    %v2531 = vsel %vm97, %v2526, %v2530
    %v2533 = vshrl.u32 %v2331, 16
    %v2535 = vrot.slane %v2533, 4
    %v2536 = vshll.u32 %v2331, 16
    %v2538 = vrot.slane %v2536, 5
    %v2539 = vor.u32 %v2535, %v2538
    %v2540 = vrot.slane %v2539, 4
    %v2542 = vshll.u32 %v2347, 16
    %v2544 = vrot.slane %v2542, 5
    %v2545 = vsel %vm97, %v2540, %v2544
    %v2547 = vshrl.u32 %v2332, 16
    %v2549 = vrot.slane %v2547, 4
    %v2550 = vshll.u32 %v2332, 16
    %v2552 = vrot.slane %v2550, 5
    %v2553 = vor.u32 %v2549, %v2552
    %v2554 = vrot.slane %v2553, 4
    %v2556 = vshll.u32 %v2348, 16
    %v2558 = vrot.slane %v2556, 5
    %v2559 = vsel %vm97, %v2554, %v2558
    %v2561 = vshrl.u32 %v2333, 16
    %v2563 = vrot.slane %v2561, 4
    %v2564 = vshll.u32 %v2333, 16
    %v2566 = vrot.slane %v2564, 5
    %v2567 = vor.u32 %v2563, %v2566
    %v2568 = vrot.slane %v2567, 4
    %v2570 = vshll.u32 %v2349, 16
    %v2572 = vrot.slane %v2570, 5
    %v2573 = vsel %vm97, %v2568, %v2572
    %v2574 = vld [vmem:[%s1587] sm:$0xe]
    %v2575 = vld [vmem:[%s1587 + $0x8] sm:$0xe]
    %v2576 = vld [vmem:[%s1587 + $0x10] sm:$0xe]
    %v2577 = vld [vmem:[%s1587 + $0x18] sm:$0xe]
    %v2578 = vld [vmem:[%s1587 + $0x20] sm:$0xe]
    %v2579 = vld [vmem:[%s1587 + $0x28] sm:$0xe]
    %v2580 = vld [vmem:[%s1587 + $0x30] sm:$0xe]
    %v2581 = vld [vmem:[%s1587 + $0x38] sm:$0xe]
    %v2582 = vld [vmem:[%s1587 + $0x50] sm:$0xe]
    %v2583 = vld [vmem:[%s1587 + $0x58] sm:$0xe]
    %v2584 = vld [vmem:[%s1587 + $0x60] sm:$0xe]
    %v2585 = vld [vmem:[%s1587 + $0x68] sm:$0xe]
    %v2586 = vld [vmem:[%s1587 + $0x70] sm:$0xe]
    %v2587 = vld [vmem:[%s1587 + $0x78] sm:$0xe]
    %v2588 = vld [vmem:[%s1587 + $0x80] sm:$0xe]
    %v2589 = vld [vmem:[%s1587 + $0x88] sm:$0xe]
    %v2622 = vrot.slane %v2574, 5
    %v2623 = vrot.slane %v2622, 4
    %v2624 = vrot.slane %v2334, 5
    %v2625 = vsel %vm2253, %v2623, %v2624
    %v2626 = vrot.slane %v2575, 5
    %v2627 = vrot.slane %v2626, 4
    %v2628 = vrot.slane %v2335, 5
    %v2629 = vsel %vm2253, %v2627, %v2628
    %v2630 = vrot.slane %v2576, 5
    %v2631 = vrot.slane %v2630, 4
    %v2632 = vrot.slane %v2336, 5
    %v2633 = vsel %vm2253, %v2631, %v2632
    %v2634 = vrot.slane %v2577, 5
    %v2635 = vrot.slane %v2634, 4
    %v2636 = vrot.slane %v2337, 5
    %v2637 = vsel %vm2253, %v2635, %v2636
    %v2638 = vrot.slane %v2578, 5
    %v2639 = vrot.slane %v2638, 4
    %v2640 = vrot.slane %v2338, 5
    %v2641 = vsel %vm2253, %v2639, %v2640
    %v2642 = vrot.slane %v2579, 5
    %v2643 = vrot.slane %v2642, 4
    %v2644 = vrot.slane %v2339, 5
    %v2645 = vsel %vm2253, %v2643, %v2644
    %v2646 = vrot.slane %v2580, 5
    %v2647 = vrot.slane %v2646, 4
    %v2648 = vrot.slane %v2340, 5
    %v2649 = vsel %vm2253, %v2647, %v2648
    %v2650 = vrot.slane %v2581, 5
    %v2651 = vrot.slane %v2650, 4
    %v2652 = vrot.slane %v2341, 5
    %v2653 = vsel %vm2253, %v2651, %v2652
    %v2654 = vrot.slane %v2582, 5
    %v2655 = vrot.slane %v2654, 4
    %v2656 = vrot.slane %v2342, 5
    %v2657 = vsel %vm2253, %v2655, %v2656
    %v2658 = vrot.slane %v2583, 5
    %v2659 = vrot.slane %v2658, 4
    %v2660 = vrot.slane %v2343, 5
    %v2661 = vsel %vm2253, %v2659, %v2660
    %v2662 = vrot.slane %v2584, 5
    %v2663 = vrot.slane %v2662, 4
    %v2664 = vrot.slane %v2344, 5
    %v2665 = vsel %vm2253, %v2663, %v2664
    %v2666 = vrot.slane %v2585, 5
    %v2667 = vrot.slane %v2666, 4
    %v2668 = vrot.slane %v2345, 5
    %v2669 = vsel %vm2253, %v2667, %v2668
    %v2670 = vrot.slane %v2586, 5
    %v2671 = vrot.slane %v2670, 4
    %v2672 = vrot.slane %v2346, 5
    %v2673 = vsel %vm2253, %v2671, %v2672
    %v2674 = vrot.slane %v2587, 5
    %v2675 = vrot.slane %v2674, 4
    %v2676 = vrot.slane %v2347, 5
    %v2677 = vsel %vm2253, %v2675, %v2676
    %v2678 = vrot.slane %v2588, 5
    %v2679 = vrot.slane %v2678, 4
    %v2680 = vrot.slane %v2348, 5
    %v2681 = vsel %vm2253, %v2679, %v2680
    %v2682 = vrot.slane %v2589, 5
    %v2683 = vrot.slane %v2682, 4
    %v2684 = vrot.slane %v2349, 5
    %v2685 = vsel %vm2253, %v2683, %v2684
    %s2686 = scalar_lea.vmem [#allocation2], 16
    %v2687 = vld [vmem:[%s2686] sm:$0xf]
    %v2688 = vld [vmem:[%s2686 + $0x8] sm:$0xf]
    %v2689 = vld [vmem:[%s2686 + $0x10] sm:$0xf]
    %v2690 = vld [vmem:[%s2686 + $0x18] sm:$0xf]
    %v2691 = vld [vmem:[%s2686 + $0x20] sm:$0xf]
    %v2692 = vld [vmem:[%s2686 + $0x28] sm:$0xf]
    %v2693 = vld [vmem:[%s2686 + $0x30] sm:$0xf]
    %v2694 = vld [vmem:[%s2686 + $0x38] sm:$0xf]
    %v2695 = vld [vmem:[%s2686 + $0x50] sm:$0xf]
    %v2696 = vld [vmem:[%s2686 + $0x58] sm:$0xf]
    %v2697 = vld [vmem:[%s2686 + $0x60] sm:$0xf]
    %v2698 = vld [vmem:[%s2686 + $0x68] sm:$0xf]
    %v2699 = vld [vmem:[%s2686 + $0x70] sm:$0xf]
    %v2700 = vld [vmem:[%s2686 + $0x78] sm:$0xf]
    %v2701 = vld [vmem:[%s2686 + $0x80] sm:$0xf]
    %v2702 = vld [vmem:[%s2686 + $0x88] sm:$0xf]
    %v2703 = vld [vmem:[%s2686 + $0x4] sm:$0x1]
    %v2704 = vld [vmem:[%s2686 + $0xc] sm:$0x1]
    %v2705 = vld [vmem:[%s2686 + $0x14] sm:$0x1]
    %v2706 = vld [vmem:[%s2686 + $0x1c] sm:$0x1]
    %v2707 = vld [vmem:[%s2686 + $0x24] sm:$0x1]
    %v2708 = vld [vmem:[%s2686 + $0x2c] sm:$0x1]
    %v2709 = vld [vmem:[%s2686 + $0x34] sm:$0x1]
    %v2710 = vld [vmem:[%s2686 + $0x3c] sm:$0x1]
    %v2711 = vld [vmem:[%s2686 + $0x54] sm:$0x1]
    %v2712 = vld [vmem:[%s2686 + $0x5c] sm:$0x1]
    %v2713 = vld [vmem:[%s2686 + $0x64] sm:$0x1]
    %v2714 = vld [vmem:[%s2686 + $0x6c] sm:$0x1]
    %v2715 = vld [vmem:[%s2686 + $0x74] sm:$0x1]
    %v2716 = vld [vmem:[%s2686 + $0x7c] sm:$0x1]
    %v2717 = vld [vmem:[%s2686 + $0x84] sm:$0x1]
    %v2718 = vld [vmem:[%s2686 + $0x8c] sm:$0x1]
    %v2720 = vshrl.u32 %v2687, 16
    %v2722 = vrot.slane %v2720, 4
    %v2723 = vshll.u32 %v2687, 16
    %v2725 = vrot.slane %v2723, 5
    %v2726 = vor.u32 %v2722, %v2725
    %v2727 = vrot.slane %v2726, 4
    %v2729 = vshll.u32 %v2703, 16
    %v2731 = vrot.slane %v2729, 5
    %v2732 = vsel %vm97, %v2727, %v2731
    %v2734 = vshrl.u32 %v2688, 16
    %v2736 = vrot.slane %v2734, 4
    %v2737 = vshll.u32 %v2688, 16
    %v2739 = vrot.slane %v2737, 5
    %v2740 = vor.u32 %v2736, %v2739
    %v2741 = vrot.slane %v2740, 4
    %v2743 = vshll.u32 %v2704, 16
    %v2745 = vrot.slane %v2743, 5
    %v2746 = vsel %vm97, %v2741, %v2745
    %v2748 = vshrl.u32 %v2689, 16
    %v2750 = vrot.slane %v2748, 4
    %v2751 = vshll.u32 %v2689, 16
    %v2753 = vrot.slane %v2751, 5
    %v2754 = vor.u32 %v2750, %v2753
    %v2755 = vrot.slane %v2754, 4
    %v2757 = vshll.u32 %v2705, 16
    %v2759 = vrot.slane %v2757, 5
    %v2760 = vsel %vm97, %v2755, %v2759
    %v2762 = vshrl.u32 %v2690, 16
    %v2764 = vrot.slane %v2762, 4
    %v2765 = vshll.u32 %v2690, 16
    %v2767 = vrot.slane %v2765, 5
    %v2768 = vor.u32 %v2764, %v2767
    %v2769 = vrot.slane %v2768, 4
    %v2771 = vshll.u32 %v2706, 16
    %v2773 = vrot.slane %v2771, 5
    %v2774 = vsel %vm97, %v2769, %v2773
    %v2776 = vshrl.u32 %v2691, 16
    %v2778 = vrot.slane %v2776, 4
    %v2779 = vshll.u32 %v2691, 16
    %v2781 = vrot.slane %v2779, 5
    %v2782 = vor.u32 %v2778, %v2781
    %v2783 = vrot.slane %v2782, 4
    %v2785 = vshll.u32 %v2707, 16
    %v2787 = vrot.slane %v2785, 5
    %v2788 = vsel %vm97, %v2783, %v2787
    %v2790 = vshrl.u32 %v2692, 16
    %v2792 = vrot.slane %v2790, 4
    %v2793 = vshll.u32 %v2692, 16
    %v2795 = vrot.slane %v2793, 5
    %v2796 = vor.u32 %v2792, %v2795
    %v2797 = vrot.slane %v2796, 4
    %v2799 = vshll.u32 %v2708, 16
    %v2801 = vrot.slane %v2799, 5
    %v2802 = vsel %vm97, %v2797, %v2801
    %v2804 = vshrl.u32 %v2693, 16
    %v2806 = vrot.slane %v2804, 4
    %v2807 = vshll.u32 %v2693, 16
    %v2809 = vrot.slane %v2807, 5
    %v2810 = vor.u32 %v2806, %v2809
    %v2811 = vrot.slane %v2810, 4
    %v2813 = vshll.u32 %v2709, 16
    %v2815 = vrot.slane %v2813, 5
    %v2816 = vsel %vm97, %v2811, %v2815
    %v2818 = vshrl.u32 %v2694, 16
    %v2820 = vrot.slane %v2818, 4
    %v2821 = vshll.u32 %v2694, 16
    %v2823 = vrot.slane %v2821, 5
    %v2824 = vor.u32 %v2820, %v2823
    %v2825 = vrot.slane %v2824, 4
    %v2827 = vshll.u32 %v2710, 16
    %v2829 = vrot.slane %v2827, 5
    %v2830 = vsel %vm97, %v2825, %v2829
    %v2832 = vshrl.u32 %v2695, 16
    %v2834 = vrot.slane %v2832, 4
    %v2835 = vshll.u32 %v2695, 16
    %v2837 = vrot.slane %v2835, 5
    %v2838 = vor.u32 %v2834, %v2837
    %v2839 = vrot.slane %v2838, 4
    %v2841 = vshll.u32 %v2711, 16
    %v2843 = vrot.slane %v2841, 5
    %v2844 = vsel %vm97, %v2839, %v2843
    %v2846 = vshrl.u32 %v2696, 16
    %v2848 = vrot.slane %v2846, 4
    %v2849 = vshll.u32 %v2696, 16
    %v2851 = vrot.slane %v2849, 5
    %v2852 = vor.u32 %v2848, %v2851
    %v2853 = vrot.slane %v2852, 4
    %v2855 = vshll.u32 %v2712, 16
    %v2857 = vrot.slane %v2855, 5
    %v2858 = vsel %vm97, %v2853, %v2857
    %v2860 = vshrl.u32 %v2697, 16
    %v2862 = vrot.slane %v2860, 4
    %v2863 = vshll.u32 %v2697, 16
    %v2865 = vrot.slane %v2863, 5
    %v2866 = vor.u32 %v2862, %v2865
    %v2867 = vrot.slane %v2866, 4
    %v2869 = vshll.u32 %v2713, 16
    %v2871 = vrot.slane %v2869, 5
    %v2872 = vsel %vm97, %v2867, %v2871
    %v2874 = vshrl.u32 %v2698, 16
    %v2876 = vrot.slane %v2874, 4
    %v2877 = vshll.u32 %v2698, 16
    %v2879 = vrot.slane %v2877, 5
    %v2880 = vor.u32 %v2876, %v2879
    %v2881 = vrot.slane %v2880, 4
    %v2883 = vshll.u32 %v2714, 16
    %v2885 = vrot.slane %v2883, 5
    %v2886 = vsel %vm97, %v2881, %v2885
    %v2888 = vshrl.u32 %v2699, 16
    %v2890 = vrot.slane %v2888, 4
    %v2891 = vshll.u32 %v2699, 16
    %v2893 = vrot.slane %v2891, 5
    %v2894 = vor.u32 %v2890, %v2893
    %v2895 = vrot.slane %v2894, 4
    %v2897 = vshll.u32 %v2715, 16
    %v2899 = vrot.slane %v2897, 5
    %v2900 = vsel %vm97, %v2895, %v2899
    %v2902 = vshrl.u32 %v2700, 16
    %v2904 = vrot.slane %v2902, 4
    %v2905 = vshll.u32 %v2700, 16
    %v2907 = vrot.slane %v2905, 5
    %v2908 = vor.u32 %v2904, %v2907
    %v2909 = vrot.slane %v2908, 4
    %v2911 = vshll.u32 %v2716, 16
    %v2913 = vrot.slane %v2911, 5
    %v2914 = vsel %vm97, %v2909, %v2913
    %v2916 = vshrl.u32 %v2701, 16
    %v2918 = vrot.slane %v2916, 4
    %v2919 = vshll.u32 %v2701, 16
    %v2921 = vrot.slane %v2919, 5
    %v2922 = vor.u32 %v2918, %v2921
    %v2923 = vrot.slane %v2922, 4
    %v2925 = vshll.u32 %v2717, 16
    %v2927 = vrot.slane %v2925, 5
    %v2928 = vsel %vm97, %v2923, %v2927
    %v2930 = vshrl.u32 %v2702, 16
    %v2932 = vrot.slane %v2930, 4
    %v2933 = vshll.u32 %v2702, 16
    %v2935 = vrot.slane %v2933, 5
    %v2936 = vor.u32 %v2932, %v2935
    %v2937 = vrot.slane %v2936, 4
    %v2939 = vshll.u32 %v2718, 16
    %v2941 = vrot.slane %v2939, 5
    %v2942 = vsel %vm97, %v2937, %v2941
    %v2943 = vld [vmem:[%s2686] sm:$0xe]
    %v2944 = vld [vmem:[%s2686 + $0x8] sm:$0xe]
    %v2945 = vld [vmem:[%s2686 + $0x10] sm:$0xe]
    %v2946 = vld [vmem:[%s2686 + $0x18] sm:$0xe]
    %v2947 = vld [vmem:[%s2686 + $0x20] sm:$0xe]
    %v2948 = vld [vmem:[%s2686 + $0x28] sm:$0xe]
    %v2949 = vld [vmem:[%s2686 + $0x30] sm:$0xe]
    %v2950 = vld [vmem:[%s2686 + $0x38] sm:$0xe]
    %v2951 = vld [vmem:[%s2686 + $0x50] sm:$0xe]
    %v2952 = vld [vmem:[%s2686 + $0x58] sm:$0xe]
    %v2953 = vld [vmem:[%s2686 + $0x60] sm:$0xe]
    %v2954 = vld [vmem:[%s2686 + $0x68] sm:$0xe]
    %v2955 = vld [vmem:[%s2686 + $0x70] sm:$0xe]
    %v2956 = vld [vmem:[%s2686 + $0x78] sm:$0xe]
    %v2957 = vld [vmem:[%s2686 + $0x80] sm:$0xe]
    %v2958 = vld [vmem:[%s2686 + $0x88] sm:$0xe]
    %v2991 = vrot.slane %v2943, 5
    %v2992 = vrot.slane %v2991, 4
    %v2993 = vrot.slane %v2703, 5
    %v2994 = vsel %vm2253, %v2992, %v2993
    %v2995 = vrot.slane %v2944, 5
    %v2996 = vrot.slane %v2995, 4
    %v2997 = vrot.slane %v2704, 5
    %v2998 = vsel %vm2253, %v2996, %v2997
    %v2999 = vrot.slane %v2945, 5
    %v3000 = vrot.slane %v2999, 4
    %v3001 = vrot.slane %v2705, 5
    %v3002 = vsel %vm2253, %v3000, %v3001
    %v3003 = vrot.slane %v2946, 5
    %v3004 = vrot.slane %v3003, 4
    %v3005 = vrot.slane %v2706, 5
    %v3006 = vsel %vm2253, %v3004, %v3005
    %v3007 = vrot.slane %v2947, 5
    %v3008 = vrot.slane %v3007, 4
    %v3009 = vrot.slane %v2707, 5
    %v3010 = vsel %vm2253, %v3008, %v3009
    %v3011 = vrot.slane %v2948, 5
    %v3012 = vrot.slane %v3011, 4
    %v3013 = vrot.slane %v2708, 5
    %v3014 = vsel %vm2253, %v3012, %v3013
    %v3015 = vrot.slane %v2949, 5
    %v3016 = vrot.slane %v3015, 4
    %v3017 = vrot.slane %v2709, 5
    %v3018 = vsel %vm2253, %v3016, %v3017
    %v3019 = vrot.slane %v2950, 5
    %v3020 = vrot.slane %v3019, 4
    %v3021 = vrot.slane %v2710, 5
    %v3022 = vsel %vm2253, %v3020, %v3021
    %v3023 = vrot.slane %v2951, 5
    %v3024 = vrot.slane %v3023, 4
    %v3025 = vrot.slane %v2711, 5
    %v3026 = vsel %vm2253, %v3024, %v3025
    %v3027 = vrot.slane %v2952, 5
    %v3028 = vrot.slane %v3027, 4
    %v3029 = vrot.slane %v2712, 5
    %v3030 = vsel %vm2253, %v3028, %v3029
    %v3031 = vrot.slane %v2953, 5
    %v3032 = vrot.slane %v3031, 4
    %v3033 = vrot.slane %v2713, 5
    %v3034 = vsel %vm2253, %v3032, %v3033
    %v3035 = vrot.slane %v2954, 5
    %v3036 = vrot.slane %v3035, 4
    %v3037 = vrot.slane %v2714, 5
    %v3038 = vsel %vm2253, %v3036, %v3037
    %v3039 = vrot.slane %v2955, 5
    %v3040 = vrot.slane %v3039, 4
    %v3041 = vrot.slane %v2715, 5
    %v3042 = vsel %vm2253, %v3040, %v3041
    %v3043 = vrot.slane %v2956, 5
    %v3044 = vrot.slane %v3043, 4
    %v3045 = vrot.slane %v2716, 5
    %v3046 = vsel %vm2253, %v3044, %v3045
    %v3047 = vrot.slane %v2957, 5
    %v3048 = vrot.slane %v3047, 4
    %v3049 = vrot.slane %v2717, 5
    %v3050 = vsel %vm2253, %v3048, %v3049
    %v3051 = vrot.slane %v2958, 5
    %v3052 = vrot.slane %v3051, 4
    %v3053 = vrot.slane %v2718, 5
    %v3054 = vsel %vm2253, %v3052, %v3053
    %v3071 = vunpack.c.l.b16 %v1947
    %v3072 = vunpack.c.l.b16 %v1948
    %v3073 = vunpack.c.l.b16 %v1949
    %v3074 = vunpack.c.l.b16 %v1950
    %v3075 = vunpack.c.l.b16 %v1951
    %v3076 = vunpack.c.l.b16 %v1952
    %v3077 = vunpack.c.l.b16 %v1953
    %v3078 = vunpack.c.l.b16 %v1954
    %v3079 = vunpack.c.l.b16 %v1955
    %v3080 = vunpack.c.l.b16 %v1956
    %v3081 = vunpack.c.l.b16 %v1957
    %v3082 = vunpack.c.l.b16 %v1958
    %v3083 = vunpack.c.l.b16 %v1959
    %v3084 = vunpack.c.l.b16 %v1960
    %v3085 = vunpack.c.l.b16 %v1961
    %v3086 = vunpack.c.l.b16 %v1962
    %v3087 = vpack.c.b16 %v3072, %v3071
    %v3088 = vpack.c.b16 %v3074, %v3073
    %v3089 = vpack.c.b16 %v3076, %v3075
    %v3090 = vpack.c.b16 %v3078, %v3077
    %v3091 = vpack.c.b16 %v3080, %v3079
    %v3092 = vpack.c.b16 %v3082, %v3081
    %v3093 = vpack.c.b16 %v3084, %v3083
    %v3094 = vpack.c.b16 %v3086, %v3085
    %v3103 = vunpack.c.l.b16 %v1992
    %v3104 = vunpack.c.l.b16 %v2006
    %v3105 = vunpack.c.l.b16 %v2020
    %v3106 = vunpack.c.l.b16 %v2034
    %v3107 = vunpack.c.l.b16 %v2048
    %v3108 = vunpack.c.l.b16 %v2062
    %v3109 = vunpack.c.l.b16 %v2076
    %v3110 = vunpack.c.l.b16 %v2090
    %v3111 = vunpack.c.l.b16 %v2104
    %v3112 = vunpack.c.l.b16 %v2118
    %v3113 = vunpack.c.l.b16 %v2132
    %v3114 = vunpack.c.l.b16 %v2146
    %v3115 = vunpack.c.l.b16 %v2160
    %v3116 = vunpack.c.l.b16 %v2174
    %v3117 = vunpack.c.l.b16 %v2188
    %v3118 = vunpack.c.l.b16 %v2202
    %v3119 = vpack.c.b16 %v3104, %v3103
    %v3120 = vpack.c.b16 %v3106, %v3105
    %v3121 = vpack.c.b16 %v3108, %v3107
    %v3122 = vpack.c.b16 %v3110, %v3109
    %v3123 = vpack.c.b16 %v3112, %v3111
    %v3124 = vpack.c.b16 %v3114, %v3113
    %v3125 = vpack.c.b16 %v3116, %v3115
    %v3126 = vpack.c.b16 %v3118, %v3117
    %v3135 = vunpack.c.l.b16 %v2257
    %v3136 = vunpack.c.l.b16 %v2261
    %v3137 = vunpack.c.l.b16 %v2265
    %v3138 = vunpack.c.l.b16 %v2269
    %v3139 = vunpack.c.l.b16 %v2273
    %v3140 = vunpack.c.l.b16 %v2277
    %v3141 = vunpack.c.l.b16 %v2281
    %v3142 = vunpack.c.l.b16 %v2285
    %v3143 = vunpack.c.l.b16 %v2289
    %v3144 = vunpack.c.l.b16 %v2293
    %v3145 = vunpack.c.l.b16 %v2297
    %v3146 = vunpack.c.l.b16 %v2301
    %v3147 = vunpack.c.l.b16 %v2305
    %v3148 = vunpack.c.l.b16 %v2309
    %v3149 = vunpack.c.l.b16 %v2313
    %v3150 = vunpack.c.l.b16 %v2317
    %v3151 = vpack.c.b16 %v3136, %v3135
    %v3152 = vpack.c.b16 %v3138, %v3137
    %v3153 = vpack.c.b16 %v3140, %v3139
    %v3154 = vpack.c.b16 %v3142, %v3141
    %v3155 = vpack.c.b16 %v3144, %v3143
    %v3156 = vpack.c.b16 %v3146, %v3145
    %v3157 = vpack.c.b16 %v3148, %v3147
    %v3158 = vpack.c.b16 %v3150, %v3149
    %v3183 = vunpack.c.l.b16 %v2318
    %v3184 = vunpack.c.l.b16 %v2319
    %v3185 = vunpack.c.l.b16 %v2320
    %v3186 = vunpack.c.l.b16 %v2321
    %v3187 = vunpack.c.l.b16 %v2322
    %v3188 = vunpack.c.l.b16 %v2323
    %v3189 = vunpack.c.l.b16 %v2324
    %v3190 = vunpack.c.l.b16 %v2325
    %v3191 = vunpack.c.l.b16 %v2326
    %v3192 = vunpack.c.l.b16 %v2327
    %v3193 = vunpack.c.l.b16 %v2328
    %v3194 = vunpack.c.l.b16 %v2329
    %v3195 = vunpack.c.l.b16 %v2330
    %v3196 = vunpack.c.l.b16 %v2331
    %v3197 = vunpack.c.l.b16 %v2332
    %v3198 = vunpack.c.l.b16 %v2333
    %v3199 = vpack.c.b16 %v3184, %v3183
    %v3200 = vpack.c.b16 %v3186, %v3185
    %v3201 = vpack.c.b16 %v3188, %v3187
    %v3202 = vpack.c.b16 %v3190, %v3189
    %v3203 = vpack.c.b16 %v3192, %v3191
    %v3204 = vpack.c.b16 %v3194, %v3193
    %v3205 = vpack.c.b16 %v3196, %v3195
    %v3206 = vpack.c.b16 %v3198, %v3197
    %v3215 = vunpack.c.l.b16 %v2363
    %v3216 = vunpack.c.l.b16 %v2377
    %v3217 = vunpack.c.l.b16 %v2391
    %v3218 = vunpack.c.l.b16 %v2405
    %v3219 = vunpack.c.l.b16 %v2419
    %v3220 = vunpack.c.l.b16 %v2433
    %v3221 = vunpack.c.l.b16 %v2447
    %v3222 = vunpack.c.l.b16 %v2461
    %v3223 = vunpack.c.l.b16 %v2475
    %v3224 = vunpack.c.l.b16 %v2489
    %v3225 = vunpack.c.l.b16 %v2503
    %v3226 = vunpack.c.l.b16 %v2517
    %v3227 = vunpack.c.l.b16 %v2531
    %v3228 = vunpack.c.l.b16 %v2545
    %v3229 = vunpack.c.l.b16 %v2559
    %v3230 = vunpack.c.l.b16 %v2573
    %v3231 = vpack.c.b16 %v3216, %v3215
    %v3232 = vpack.c.b16 %v3218, %v3217
    %v3233 = vpack.c.b16 %v3220, %v3219
    %v3234 = vpack.c.b16 %v3222, %v3221
    %v3235 = vpack.c.b16 %v3224, %v3223
    %v3236 = vpack.c.b16 %v3226, %v3225
    %v3237 = vpack.c.b16 %v3228, %v3227
    %v3238 = vpack.c.b16 %v3230, %v3229
    %v3247 = vunpack.c.l.b16 %v2625
    %v3248 = vunpack.c.l.b16 %v2629
    %v3249 = vunpack.c.l.b16 %v2633
    %v3250 = vunpack.c.l.b16 %v2637
    %v3251 = vunpack.c.l.b16 %v2641
    %v3252 = vunpack.c.l.b16 %v2645
    %v3253 = vunpack.c.l.b16 %v2649
    %v3254 = vunpack.c.l.b16 %v2653
    %v3255 = vunpack.c.l.b16 %v2657
    %v3256 = vunpack.c.l.b16 %v2661
    %v3257 = vunpack.c.l.b16 %v2665
    %v3258 = vunpack.c.l.b16 %v2669
    %v3259 = vunpack.c.l.b16 %v2673
    %v3260 = vunpack.c.l.b16 %v2677
    %v3261 = vunpack.c.l.b16 %v2681
    %v3262 = vunpack.c.l.b16 %v2685
    %v3263 = vpack.c.b16 %v3248, %v3247
    %v3264 = vpack.c.b16 %v3250, %v3249
    %v3265 = vpack.c.b16 %v3252, %v3251
    %v3266 = vpack.c.b16 %v3254, %v3253
    %v3267 = vpack.c.b16 %v3256, %v3255
    %v3268 = vpack.c.b16 %v3258, %v3257
    %v3269 = vpack.c.b16 %v3260, %v3259
    %v3270 = vpack.c.b16 %v3262, %v3261
    %v3295 = vunpack.c.l.b16 %v2687
    %v3296 = vunpack.c.l.b16 %v2688
    %v3297 = vunpack.c.l.b16 %v2689
    %v3298 = vunpack.c.l.b16 %v2690
    %v3299 = vunpack.c.l.b16 %v2691
    %v3300 = vunpack.c.l.b16 %v2692
    %v3301 = vunpack.c.l.b16 %v2693
    %v3302 = vunpack.c.l.b16 %v2694
    %v3303 = vunpack.c.l.b16 %v2695
    %v3304 = vunpack.c.l.b16 %v2696
    %v3305 = vunpack.c.l.b16 %v2697
    %v3306 = vunpack.c.l.b16 %v2698
    %v3307 = vunpack.c.l.b16 %v2699
    %v3308 = vunpack.c.l.b16 %v2700
    %v3309 = vunpack.c.l.b16 %v2701
    %v3310 = vunpack.c.l.b16 %v2702
    %v3311 = vpack.c.b16 %v3296, %v3295
    %v3312 = vpack.c.b16 %v3298, %v3297
    %v3313 = vpack.c.b16 %v3300, %v3299
    %v3314 = vpack.c.b16 %v3302, %v3301
    %v3315 = vpack.c.b16 %v3304, %v3303
    %v3316 = vpack.c.b16 %v3306, %v3305
    %v3317 = vpack.c.b16 %v3308, %v3307
    %v3318 = vpack.c.b16 %v3310, %v3309
    %v3327 = vunpack.c.l.b16 %v2732
    %v3328 = vunpack.c.l.b16 %v2746
    %v3329 = vunpack.c.l.b16 %v2760
    %v3330 = vunpack.c.l.b16 %v2774
    %v3331 = vunpack.c.l.b16 %v2788
    %v3332 = vunpack.c.l.b16 %v2802
    %v3333 = vunpack.c.l.b16 %v2816
    %v3334 = vunpack.c.l.b16 %v2830
    %v3335 = vunpack.c.l.b16 %v2844
    %v3336 = vunpack.c.l.b16 %v2858
    %v3337 = vunpack.c.l.b16 %v2872
    %v3338 = vunpack.c.l.b16 %v2886
    %v3339 = vunpack.c.l.b16 %v2900
    %v3340 = vunpack.c.l.b16 %v2914
    %v3341 = vunpack.c.l.b16 %v2928
    %v3342 = vunpack.c.l.b16 %v2942
    %v3343 = vpack.c.b16 %v3328, %v3327
    %v3344 = vpack.c.b16 %v3330, %v3329
    %v3345 = vpack.c.b16 %v3332, %v3331
    %v3346 = vpack.c.b16 %v3334, %v3333
    %v3347 = vpack.c.b16 %v3336, %v3335
    %v3348 = vpack.c.b16 %v3338, %v3337
    %v3349 = vpack.c.b16 %v3340, %v3339
    %v3350 = vpack.c.b16 %v3342, %v3341
    %v3359 = vunpack.c.l.b16 %v2994
    %v3360 = vunpack.c.l.b16 %v2998
    %v3361 = vunpack.c.l.b16 %v3002
    %v3362 = vunpack.c.l.b16 %v3006
    %v3363 = vunpack.c.l.b16 %v3010
    %v3364 = vunpack.c.l.b16 %v3014
    %v3365 = vunpack.c.l.b16 %v3018
    %v3366 = vunpack.c.l.b16 %v3022
    %v3367 = vunpack.c.l.b16 %v3026
    %v3368 = vunpack.c.l.b16 %v3030
    %v3369 = vunpack.c.l.b16 %v3034
    %v3370 = vunpack.c.l.b16 %v3038
    %v3371 = vunpack.c.l.b16 %v3042
    %v3372 = vunpack.c.l.b16 %v3046
    %v3373 = vunpack.c.l.b16 %v3050
    %v3374 = vunpack.c.l.b16 %v3054
    %v3375 = vpack.c.b16 %v3360, %v3359
    %v3376 = vpack.c.b16 %v3362, %v3361
    %v3377 = vpack.c.b16 %v3364, %v3363
    %v3378 = vpack.c.b16 %v3366, %v3365
    %v3379 = vpack.c.b16 %v3368, %v3367
    %v3380 = vpack.c.b16 %v3370, %v3369
    %v3381 = vpack.c.b16 %v3372, %v3371
    %v3382 = vpack.c.b16 %v3374, %v3373
    %v3391 = vld [vmem:[#allocation3] sm:$0xf]
    %v3392 = vld [vmem:[#allocation3 + $0x4] sm:$0xf]
    %v3393 = vld [vmem:[#allocation3 + $0x8] sm:$0xf]
    %v3394 = vld [vmem:[#allocation3 + $0xc] sm:$0xf]
    %v3395 = vld [vmem:[#allocation3 + $0x10] sm:$0xf]
    %v3396 = vld [vmem:[#allocation3 + $0x14] sm:$0xf]
    %v3397 = vld [vmem:[#allocation3 + $0x18] sm:$0xf]
    %v3398 = vld [vmem:[#allocation3 + $0x1c] sm:$0xf]
    %v3399 = vld [vmem:[#allocation3 + $0x20] sm:$0xf]
    %v3400 = vld [vmem:[#allocation3 + $0x24] sm:$0xf]
    %v3401 = vld [vmem:[#allocation3 + $0x28] sm:$0xf]
    %v3402 = vld [vmem:[#allocation3 + $0x2c] sm:$0xf]
    %v3403 = vld [vmem:[#allocation3 + $0x30] sm:$0xf]
    %v3404 = vld [vmem:[#allocation3 + $0x34] sm:$0xf]
    %v3405 = vld [vmem:[#allocation3 + $0x38] sm:$0xf]
    %v3406 = vld [vmem:[#allocation3 + $0x3c] sm:$0xf]
    %v3407 = vld [vmem:[#allocation3 + $0x40] sm:$0xf]
    %v3408 = vld [vmem:[#allocation3 + $0x44] sm:$0xf]
    %v3409 = vld [vmem:[#allocation3 + $0x48] sm:$0xf]
    %v3410 = vld [vmem:[#allocation3 + $0x4c] sm:$0xf]
    %v3411 = vld [vmem:[#allocation3 + $0x50] sm:$0xf]
    %v3412 = vld [vmem:[#allocation3 + $0x54] sm:$0xf]
    %v3413 = vld [vmem:[#allocation3 + $0x58] sm:$0xf]
    %v3414 = vld [vmem:[#allocation3 + $0x5c] sm:$0xf]
    %v3415 = vld [vmem:[#allocation3 + $0x60] sm:$0xf]
    %v3416 = vld [vmem:[#allocation3 + $0x64] sm:$0xf]
    %v3417 = vld [vmem:[#allocation3 + $0x68] sm:$0xf]
    %v3418 = vld [vmem:[#allocation3 + $0x6c] sm:$0xf]
    %v3419 = vld [vmem:[#allocation3 + $0x70] sm:$0xf]
    %v3420 = vld [vmem:[#allocation3 + $0x74] sm:$0xf]
    %v3421 = vld [vmem:[#allocation3 + $0x78] sm:$0xf]
    %v3422 = vld [vmem:[#allocation3 + $0x7c] sm:$0xf]
    %v3423 = vld [vmem:[#allocation3 + $0x80] sm:$0xf]
    %v3424 = vld [vmem:[#allocation3 + $0x84] sm:$0xf]
    %v3425 = vld [vmem:[#allocation3 + $0x88] sm:$0xf]
    %v3426 = vld [vmem:[#allocation3 + $0x8c] sm:$0xf]
    %v3427 = vld [vmem:[#allocation3 + $0x90] sm:$0xf]
    %v3428 = vld [vmem:[#allocation3 + $0x94] sm:$0xf]
    %v3429 = vld [vmem:[#allocation3 + $0x98] sm:$0xf]
    %v3430 = vld [vmem:[#allocation3 + $0x9c] sm:$0xf]
    %v3431 = vld [vmem:[#allocation3 + $0xa0] sm:$0xf]
    %v3432 = vld [vmem:[#allocation3 + $0xa4] sm:$0xf]
    %v3433 = vld [vmem:[#allocation3 + $0xa8] sm:$0xf]
    %v3434 = vld [vmem:[#allocation3 + $0xac] sm:$0xf]
    %v3435 = vld [vmem:[#allocation3 + $0xb0] sm:$0xf]
    %v3436 = vld [vmem:[#allocation3 + $0xb4] sm:$0xf]
    %v3437 = vld [vmem:[#allocation3 + $0xb8] sm:$0xf]
    %v3438 = vld [vmem:[#allocation3 + $0xbc] sm:$0xf]
    %v3439 = vld [vmem:[#allocation3 + $0xc0] sm:$0xf]
    %v3440 = vld [vmem:[#allocation3 + $0xc4] sm:$0xf]
    %v3441 = vld [vmem:[#allocation3 + $0xc8] sm:$0xf]
    %v3442 = vld [vmem:[#allocation3 + $0xcc] sm:$0xf]
    %v3443 = vld [vmem:[#allocation3 + $0xd0] sm:$0xf]
    %v3444 = vld [vmem:[#allocation3 + $0xd4] sm:$0xf]
    %v3445 = vld [vmem:[#allocation3 + $0xd8] sm:$0xf]
    %v3446 = vld [vmem:[#allocation3 + $0xdc] sm:$0xf]
    %v3447 = vld [vmem:[#allocation3 + $0xe0] sm:$0xf]
    %v3448 = vld [vmem:[#allocation3 + $0xe4] sm:$0xf]
    %v3449 = vld [vmem:[#allocation3 + $0xe8] sm:$0xf]
    %v3450 = vld [vmem:[#allocation3 + $0xec] sm:$0xf]
    %v3451 = vld [vmem:[#allocation3 + $0xf0] sm:$0xf]
    %v3452 = vld [vmem:[#allocation3 + $0xf4] sm:$0xf]
    %v3453 = vld [vmem:[#allocation3 + $0xf8] sm:$0xf]
    %v3454 = vld [vmem:[#allocation3 + $0xfc] sm:$0xf]
    %v3455 = vld [vmem:[#allocation3 + $0x100] sm:$0xf]
    %v3456 = vld [vmem:[#allocation3 + $0x104] sm:$0xf]
    %v3457 = vld [vmem:[#allocation3 + $0x108] sm:$0xf]
    %v3458 = vld [vmem:[#allocation3 + $0x10c] sm:$0xf]
    %v3459 = vld [vmem:[#allocation3 + $0x110] sm:$0xf]
    %v3460 = vld [vmem:[#allocation3 + $0x114] sm:$0xf]
    %v3461 = vld [vmem:[#allocation3 + $0x118] sm:$0xf]
    %v3462 = vld [vmem:[#allocation3 + $0x11c] sm:$0xf]
    %v3463 = vld [vmem:[#allocation3 + $0x120] sm:$0xf]
    %v3464 = vld [vmem:[#allocation3 + $0x124] sm:$0xf]
    %v3465 = vld [vmem:[#allocation3 + $0x128] sm:$0xf]
    %v3466 = vld [vmem:[#allocation3 + $0x12c] sm:$0xf]
    %v3467 = vld [vmem:[#allocation3 + $0x130] sm:$0xf]
    %v3468 = vld [vmem:[#allocation3 + $0x134] sm:$0xf]
    %v3469 = vld [vmem:[#allocation3 + $0x138] sm:$0xf]
    %v3470 = vld [vmem:[#allocation3 + $0x13c] sm:$0xf]
    %v3471 = vld [vmem:[#allocation3 + $0x140] sm:$0xf]
    %v3472 = vld [vmem:[#allocation3 + $0x144] sm:$0xf]
    %v3473 = vld [vmem:[#allocation3 + $0x148] sm:$0xf]
    %v3474 = vld [vmem:[#allocation3 + $0x14c] sm:$0xf]
    %v3475 = vld [vmem:[#allocation3 + $0x150] sm:$0xf]
    %v3476 = vld [vmem:[#allocation3 + $0x154] sm:$0xf]
    %v3477 = vld [vmem:[#allocation3 + $0x158] sm:$0xf]
    %v3478 = vld [vmem:[#allocation3 + $0x15c] sm:$0xf]
    %v3479 = vld [vmem:[#allocation3 + $0x160] sm:$0xf]
    %v3480 = vld [vmem:[#allocation3 + $0x164] sm:$0xf]
    %v3481 = vld [vmem:[#allocation3 + $0x168] sm:$0xf]
    %v3482 = vld [vmem:[#allocation3 + $0x16c] sm:$0xf]
    %v3483 = vld [vmem:[#allocation3 + $0x170] sm:$0xf]
    %v3484 = vld [vmem:[#allocation3 + $0x174] sm:$0xf]
    %v3485 = vld [vmem:[#allocation3 + $0x178] sm:$0xf]
    %v3486 = vld [vmem:[#allocation3 + $0x17c] sm:$0xf]
    %v3487 = vld [vmem:[#allocation3 + $0x180] sm:$0xf]
    %v3488 = vld [vmem:[#allocation3 + $0x184] sm:$0xf]
    %v3489 = vld [vmem:[#allocation3 + $0x188] sm:$0xf]
    %v3490 = vld [vmem:[#allocation3 + $0x18c] sm:$0xf]
    %v3491 = vld [vmem:[#allocation3 + $0x190] sm:$0xf]
    %v3492 = vld [vmem:[#allocation3 + $0x194] sm:$0xf]
    %v3493 = vld [vmem:[#allocation3 + $0x198] sm:$0xf]
    %v3494 = vld [vmem:[#allocation3 + $0x19c] sm:$0xf]
    %v3495 = vld [vmem:[#allocation3 + $0x1a0] sm:$0xf]
    %v3496 = vld [vmem:[#allocation3 + $0x1a4] sm:$0xf]
    %v3497 = vld [vmem:[#allocation3 + $0x1a8] sm:$0xf]
    %v3498 = vld [vmem:[#allocation3 + $0x1ac] sm:$0xf]
    %v3499 = vld [vmem:[#allocation3 + $0x1b0] sm:$0xf]
    %v3500 = vld [vmem:[#allocation3 + $0x1b4] sm:$0xf]
    %v3501 = vld [vmem:[#allocation3 + $0x1b8] sm:$0xf]
    %v3502 = vld [vmem:[#allocation3 + $0x1bc] sm:$0xf]
    %v3503 = vld [vmem:[#allocation3 + $0x1c0] sm:$0xf]
    %v3504 = vld [vmem:[#allocation3 + $0x1c4] sm:$0xf]
    %v3505 = vld [vmem:[#allocation3 + $0x1c8] sm:$0xf]
    %v3506 = vld [vmem:[#allocation3 + $0x1cc] sm:$0xf]
    %v3507 = vld [vmem:[#allocation3 + $0x1d0] sm:$0xf]
    %v3508 = vld [vmem:[#allocation3 + $0x1d4] sm:$0xf]
    %v3509 = vld [vmem:[#allocation3 + $0x1d8] sm:$0xf]
    %v3510 = vld [vmem:[#allocation3 + $0x1dc] sm:$0xf]
    %v3511 = vld [vmem:[#allocation3 + $0x1e0] sm:$0xf]
    %v3512 = vld [vmem:[#allocation3 + $0x1e4] sm:$0xf]
    %v3513 = vld [vmem:[#allocation3 + $0x1e8] sm:$0xf]
    %v3514 = vld [vmem:[#allocation3 + $0x1ec] sm:$0xf]
    %v3515 = vld [vmem:[#allocation3 + $0x1f0] sm:$0xf]
    %v3516 = vld [vmem:[#allocation3 + $0x1f4] sm:$0xf]
    %v3517 = vld [vmem:[#allocation3 + $0x1f8] sm:$0xf]
    %v3518 = vld [vmem:[#allocation3 + $0x1fc] sm:$0xf]
    %v3519 = vld [vmem:[#allocation3 + $0x200] sm:$0xf]
    %v3520 = vld [vmem:[#allocation3 + $0x204] sm:$0xf]
    %v3521 = vld [vmem:[#allocation3 + $0x208] sm:$0xf]
    %v3522 = vld [vmem:[#allocation3 + $0x20c] sm:$0xf]
    %v3523 = vld [vmem:[#allocation3 + $0x210] sm:$0xf]
    %v3524 = vld [vmem:[#allocation3 + $0x214] sm:$0xf]
    %v3525 = vld [vmem:[#allocation3 + $0x218] sm:$0xf]
    %v3526 = vld [vmem:[#allocation3 + $0x21c] sm:$0xf]
    %v3527 = vld [vmem:[#allocation3 + $0x220] sm:$0xf]
    %v3528 = vld [vmem:[#allocation3 + $0x224] sm:$0xf]
    %v3529 = vld [vmem:[#allocation3 + $0x228] sm:$0xf]
    %v3530 = vld [vmem:[#allocation3 + $0x22c] sm:$0xf]
    %v3531 = vld [vmem:[#allocation3 + $0x230] sm:$0xf]
    %v3532 = vld [vmem:[#allocation3 + $0x234] sm:$0xf]
    %v3533 = vld [vmem:[#allocation3 + $0x238] sm:$0xf]
    %v3534 = vld [vmem:[#allocation3 + $0x23c] sm:$0xf]
    %v3535 = vld [vmem:[%s7] sm:$0x1]
    %v3537 = vperm.slane %v3535, 0
    %v3683 = vunpack.c.l.b16 %v3391
    %v3684 = vunpack.c.l.b16 %v3392
    %v3685 = vunpack.c.l.b16 %v3393
    %v3686 = vunpack.c.l.b16 %v3394
    %v3687 = vunpack.c.l.b16 %v3395
    %v3688 = vunpack.c.l.b16 %v3396
    %v3689 = vunpack.c.l.b16 %v3397
    %v3690 = vunpack.c.l.b16 %v3398
    %v3691 = vunpack.c.l.b16 %v3399
    %v3692 = vunpack.c.l.b16 %v3400
    %v3693 = vunpack.c.l.b16 %v3401
    %v3694 = vunpack.c.l.b16 %v3402
    %v3695 = vunpack.c.l.b16 %v3403
    %v3696 = vunpack.c.l.b16 %v3404
    %v3697 = vunpack.c.l.b16 %v3405
    %v3698 = vunpack.c.l.b16 %v3406
    %v3699 = vunpack.c.l.b16 %v3407
    %v3700 = vunpack.c.l.b16 %v3408
    %v3701 = vunpack.c.l.b16 %v3409
    %v3702 = vunpack.c.l.b16 %v3410
    %v3703 = vunpack.c.l.b16 %v3411
    %v3704 = vunpack.c.l.b16 %v3412
    %v3705 = vunpack.c.l.b16 %v3413
    %v3706 = vunpack.c.l.b16 %v3414
    %v3707 = vunpack.c.l.b16 %v3415
    %v3708 = vunpack.c.l.b16 %v3416
    %v3709 = vunpack.c.l.b16 %v3417
    %v3710 = vunpack.c.l.b16 %v3418
    %v3711 = vunpack.c.l.b16 %v3419
    %v3712 = vunpack.c.l.b16 %v3420
    %v3713 = vunpack.c.l.b16 %v3421
    %v3714 = vunpack.c.l.b16 %v3422
    %v3715 = vunpack.c.l.b16 %v3423
    %v3716 = vunpack.c.l.b16 %v3424
    %v3717 = vunpack.c.l.b16 %v3425
    %v3718 = vunpack.c.l.b16 %v3426
    %v3719 = vunpack.c.l.b16 %v3427
    %v3720 = vunpack.c.l.b16 %v3428
    %v3721 = vunpack.c.l.b16 %v3429
    %v3722 = vunpack.c.l.b16 %v3430
    %v3723 = vunpack.c.l.b16 %v3431
    %v3724 = vunpack.c.l.b16 %v3432
    %v3725 = vunpack.c.l.b16 %v3433
    %v3726 = vunpack.c.l.b16 %v3434
    %v3727 = vunpack.c.l.b16 %v3435
    %v3728 = vunpack.c.l.b16 %v3436
    %v3729 = vunpack.c.l.b16 %v3437
    %v3730 = vunpack.c.l.b16 %v3438
    %v3731 = vunpack.c.l.b16 %v3439
    %v3732 = vunpack.c.l.b16 %v3440
    %v3733 = vunpack.c.l.b16 %v3441
    %v3734 = vunpack.c.l.b16 %v3442
    %v3735 = vunpack.c.l.b16 %v3443
    %v3736 = vunpack.c.l.b16 %v3444
    %v3737 = vunpack.c.l.b16 %v3445
    %v3738 = vunpack.c.l.b16 %v3446
    %v3739 = vunpack.c.l.b16 %v3447
    %v3740 = vunpack.c.l.b16 %v3448
    %v3741 = vunpack.c.l.b16 %v3449
    %v3742 = vunpack.c.l.b16 %v3450
    %v3743 = vunpack.c.l.b16 %v3451
    %v3744 = vunpack.c.l.b16 %v3452
    %v3745 = vunpack.c.l.b16 %v3453
    %v3746 = vunpack.c.l.b16 %v3454
    %v3747 = vunpack.c.l.b16 %v3455
    %v3748 = vunpack.c.l.b16 %v3456
    %v3749 = vunpack.c.l.b16 %v3457
    %v3750 = vunpack.c.l.b16 %v3458
    %v3751 = vunpack.c.l.b16 %v3459
    %v3752 = vunpack.c.l.b16 %v3460
    %v3753 = vunpack.c.l.b16 %v3461
    %v3754 = vunpack.c.l.b16 %v3462
    %v3755 = vunpack.c.l.b16 %v3463
    %v3756 = vunpack.c.l.b16 %v3464
    %v3757 = vunpack.c.l.b16 %v3465
    %v3758 = vunpack.c.l.b16 %v3466
    %v3759 = vunpack.c.l.b16 %v3467
    %v3760 = vunpack.c.l.b16 %v3468
    %v3761 = vunpack.c.l.b16 %v3469
    %v3762 = vunpack.c.l.b16 %v3470
    %v3763 = vunpack.c.l.b16 %v3471
    %v3764 = vunpack.c.l.b16 %v3472
    %v3765 = vunpack.c.l.b16 %v3473
    %v3766 = vunpack.c.l.b16 %v3474
    %v3767 = vunpack.c.l.b16 %v3475
    %v3768 = vunpack.c.l.b16 %v3476
    %v3769 = vunpack.c.l.b16 %v3477
    %v3770 = vunpack.c.l.b16 %v3478
    %v3771 = vunpack.c.l.b16 %v3479
    %v3772 = vunpack.c.l.b16 %v3480
    %v3773 = vunpack.c.l.b16 %v3481
    %v3774 = vunpack.c.l.b16 %v3482
    %v3775 = vunpack.c.l.b16 %v3483
    %v3776 = vunpack.c.l.b16 %v3484
    %v3777 = vunpack.c.l.b16 %v3485
    %v3778 = vunpack.c.l.b16 %v3486
    %v3779 = vunpack.c.l.b16 %v3487
    %v3780 = vunpack.c.l.b16 %v3488
    %v3781 = vunpack.c.l.b16 %v3489
    %v3782 = vunpack.c.l.b16 %v3490
    %v3783 = vunpack.c.l.b16 %v3491
    %v3784 = vunpack.c.l.b16 %v3492
    %v3785 = vunpack.c.l.b16 %v3493
    %v3786 = vunpack.c.l.b16 %v3494
    %v3787 = vunpack.c.l.b16 %v3495
    %v3788 = vunpack.c.l.b16 %v3496
    %v3789 = vunpack.c.l.b16 %v3497
    %v3790 = vunpack.c.l.b16 %v3498
    %v3791 = vunpack.c.l.b16 %v3499
    %v3792 = vunpack.c.l.b16 %v3500
    %v3793 = vunpack.c.l.b16 %v3501
    %v3794 = vunpack.c.l.b16 %v3502
    %v3795 = vunpack.c.l.b16 %v3503
    %v3796 = vunpack.c.l.b16 %v3504
    %v3797 = vunpack.c.l.b16 %v3505
    %v3798 = vunpack.c.l.b16 %v3506
    %v3799 = vunpack.c.l.b16 %v3507
    %v3800 = vunpack.c.l.b16 %v3508
    %v3801 = vunpack.c.l.b16 %v3509
    %v3802 = vunpack.c.l.b16 %v3510
    %v3803 = vunpack.c.l.b16 %v3511
    %v3804 = vunpack.c.l.b16 %v3512
    %v3805 = vunpack.c.l.b16 %v3513
    %v3806 = vunpack.c.l.b16 %v3514
    %v3807 = vunpack.c.l.b16 %v3515
    %v3808 = vunpack.c.l.b16 %v3516
    %v3809 = vunpack.c.l.b16 %v3517
    %v3810 = vunpack.c.l.b16 %v3518
    %v3811 = vunpack.c.l.b16 %v3519
    %v3812 = vunpack.c.l.b16 %v3520
    %v3813 = vunpack.c.l.b16 %v3521
    %v3814 = vunpack.c.l.b16 %v3522
    %v3815 = vunpack.c.l.b16 %v3523
    %v3816 = vunpack.c.l.b16 %v3524
    %v3817 = vunpack.c.l.b16 %v3525
    %v3818 = vunpack.c.l.b16 %v3526
    %v3819 = vunpack.c.l.b16 %v3527
    %v3820 = vunpack.c.l.b16 %v3528
    %v3821 = vunpack.c.l.b16 %v3529
    %v3822 = vunpack.c.l.b16 %v3530
    %v3823 = vunpack.c.l.b16 %v3531
    %v3824 = vunpack.c.l.b16 %v3532
    %v3825 = vunpack.c.l.b16 %v3533
    %v3826 = vunpack.c.l.b16 %v3534
    %v3827 = vpack.c.b16 %v3684, %v3683
    %v3828 = vpack.c.b16 %v3686, %v3685
    %v3829 = vpack.c.b16 %v3688, %v3687
    %v3830 = vpack.c.b16 %v3690, %v3689
    %v3831 = vpack.c.b16 %v3692, %v3691
    %v3832 = vpack.c.b16 %v3694, %v3693
    %v3833 = vpack.c.b16 %v3696, %v3695
    %v3834 = vpack.c.b16 %v3698, %v3697
    %v3835 = vpack.c.b16 %v3700, %v3699
    %v3836 = vpack.c.b16 %v3702, %v3701
    %v3837 = vpack.c.b16 %v3704, %v3703
    %v3838 = vpack.c.b16 %v3706, %v3705
    %v3839 = vpack.c.b16 %v3708, %v3707
    %v3840 = vpack.c.b16 %v3710, %v3709
    %v3841 = vpack.c.b16 %v3712, %v3711
    %v3842 = vpack.c.b16 %v3714, %v3713
    %v3843 = vpack.c.b16 %v3716, %v3715
    %v3844 = vpack.c.b16 %v3718, %v3717
    %v3845 = vpack.c.b16 %v3720, %v3719
    %v3846 = vpack.c.b16 %v3722, %v3721
    %v3847 = vpack.c.b16 %v3724, %v3723
    %v3848 = vpack.c.b16 %v3726, %v3725
    %v3849 = vpack.c.b16 %v3728, %v3727
    %v3850 = vpack.c.b16 %v3730, %v3729
    %v3851 = vpack.c.b16 %v3732, %v3731
    %v3852 = vpack.c.b16 %v3734, %v3733
    %v3853 = vpack.c.b16 %v3736, %v3735
    %v3854 = vpack.c.b16 %v3738, %v3737
    %v3855 = vpack.c.b16 %v3740, %v3739
    %v3856 = vpack.c.b16 %v3742, %v3741
    %v3857 = vpack.c.b16 %v3744, %v3743
    %v3858 = vpack.c.b16 %v3746, %v3745
    %v3859 = vpack.c.b16 %v3748, %v3747
    %v3860 = vpack.c.b16 %v3750, %v3749
    %v3861 = vpack.c.b16 %v3752, %v3751
    %v3862 = vpack.c.b16 %v3754, %v3753
    %v3863 = vpack.c.b16 %v3756, %v3755
    %v3864 = vpack.c.b16 %v3758, %v3757
    %v3865 = vpack.c.b16 %v3760, %v3759
    %v3866 = vpack.c.b16 %v3762, %v3761
    %v3867 = vpack.c.b16 %v3764, %v3763
    %v3868 = vpack.c.b16 %v3766, %v3765
    %v3869 = vpack.c.b16 %v3768, %v3767
    %v3870 = vpack.c.b16 %v3770, %v3769
    %v3871 = vpack.c.b16 %v3772, %v3771
    %v3872 = vpack.c.b16 %v3774, %v3773
    %v3873 = vpack.c.b16 %v3776, %v3775
    %v3874 = vpack.c.b16 %v3778, %v3777
    %v3875 = vpack.c.b16 %v3780, %v3779
    %v3876 = vpack.c.b16 %v3782, %v3781
    %v3877 = vpack.c.b16 %v3784, %v3783
    %v3878 = vpack.c.b16 %v3786, %v3785
    %v3879 = vpack.c.b16 %v3788, %v3787
    %v3880 = vpack.c.b16 %v3790, %v3789
    %v3881 = vpack.c.b16 %v3792, %v3791
    %v3882 = vpack.c.b16 %v3794, %v3793
    %v3883 = vpack.c.b16 %v3796, %v3795
    %v3884 = vpack.c.b16 %v3798, %v3797
    %v3885 = vpack.c.b16 %v3800, %v3799
    %v3886 = vpack.c.b16 %v3802, %v3801
    %v3887 = vpack.c.b16 %v3804, %v3803
    %v3888 = vpack.c.b16 %v3806, %v3805
    %v3889 = vpack.c.b16 %v3808, %v3807
    %v3890 = vpack.c.b16 %v3810, %v3809
    %v3891 = vpack.c.b16 %v3812, %v3811
    %v3892 = vpack.c.b16 %v3814, %v3813
    %v3893 = vpack.c.b16 %v3816, %v3815
    %v3894 = vpack.c.b16 %v3818, %v3817
    %v3895 = vpack.c.b16 %v3820, %v3819
    %v3896 = vpack.c.b16 %v3822, %v3821
    %v3897 = vpack.c.b16 %v3824, %v3823
    %v3898 = vpack.c.b16 %v3826, %v3825
    %3971 = vmatpush.bf16.msra.mxu0 %v3834
    %3972 = vmatpush.bf16.msra.mxu0 %v3833
    %3973 = vmatpush.bf16.msra.mxu0 %v3832
    %3974 = vmatpush.bf16.msra.mxu0 %v3831
    %3975 = vmatpush.bf16.msra.mxu0 %v3830
    %3976 = vmatpush.bf16.msra.mxu0 %v3829
    %3977 = vmatpush.bf16.msra.mxu0 %v3828
    %3978 = vmatpush.bf16.msra.mxu0 %v3827
    %3979 = vmatmul.bf16.gmra.mxu0 %v3087
    %v3980 = vpop.f32.mrf.mxu0
    %v3981 = vadd.f32 %v3537, %v3980
    %v3982 = vpop.f32.mrf.mxu0
    %v3983 = vadd.f32 %v3537, %v3982
    %3984 = vmatmul.bf16.gmra.mxu0 %v3088
    %v3985 = vpop.f32.mrf.mxu0
    %v3986 = vadd.f32 %v3537, %v3985
    %v3987 = vpop.f32.mrf.mxu0
    %v3988 = vadd.f32 %v3537, %v3987
    %3989 = vmatmul.bf16.gmra.mxu0 %v3089
    %v3990 = vpop.f32.mrf.mxu0
    %v3991 = vadd.f32 %v3537, %v3990
    %v3992 = vpop.f32.mrf.mxu0
    %v3993 = vadd.f32 %v3537, %v3992
    %3994 = vmatmul.bf16.gmra.mxu0 %v3090
    %v3995 = vpop.f32.mrf.mxu0
    %v3996 = vadd.f32 %v3537, %v3995
    %v3997 = vpop.f32.mrf.mxu0
    %v3998 = vadd.f32 %v3537, %v3997
    %3999 = vmatmul.bf16.gmra.mxu0 %v3091
    %v4000 = vpop.f32.mrf.mxu0
    %v4001 = vadd.f32 %v3537, %v4000
    %v4002 = vpop.f32.mrf.mxu0
    %v4003 = vadd.f32 %v3537, %v4002
    %4004 = vmatmul.bf16.gmra.mxu0 %v3092
    %v4005 = vpop.f32.mrf.mxu0
    %v4006 = vadd.f32 %v3537, %v4005
    %v4007 = vpop.f32.mrf.mxu0
    %v4008 = vadd.f32 %v3537, %v4007
    %4009 = vmatmul.bf16.gmra.mxu0 %v3093
    %v4010 = vpop.f32.mrf.mxu0
    %v4011 = vadd.f32 %v3537, %v4010
    %v4012 = vpop.f32.mrf.mxu0
    %v4013 = vadd.f32 %v3537, %v4012
    %4014 = vmatmul.bf16.gmra.mxu0 %v3094
    %v4015 = vpop.f32.mrf.mxu0
    %v4016 = vadd.f32 %v3537, %v4015
    %v4017 = vpop.f32.mrf.mxu0
    %v4018 = vadd.f32 %v3537, %v4017
    %4019 = vdwg.mxu0
    %4020 = vmatpush.bf16.msra.mxu0 %v3842
    %4021 = vmatpush.bf16.msra.mxu0 %v3841
    %4022 = vmatpush.bf16.msra.mxu0 %v3840
    %4023 = vmatpush.bf16.msra.mxu0 %v3839
    %4024 = vmatpush.bf16.msra.mxu0 %v3838
    %4025 = vmatpush.bf16.msra.mxu0 %v3837
    %4026 = vmatpush.bf16.msra.mxu0 %v3836
    %4027 = vmatpush.bf16.msra.mxu0 %v3835
    %4028 = vmatmul.bf16.gmra.mxu0 %v3119
    %v4029 = vpop.f32.mrf.mxu0
    %v4030 = vadd.f32 %v3981, %v4029
    %v4031 = vpop.f32.mrf.mxu0
    %v4032 = vadd.f32 %v3983, %v4031
    %4033 = vmatmul.bf16.gmra.mxu0 %v3120
    %v4034 = vpop.f32.mrf.mxu0
    %v4035 = vadd.f32 %v3986, %v4034
    %v4036 = vpop.f32.mrf.mxu0
    %v4037 = vadd.f32 %v3988, %v4036
    %4038 = vmatmul.bf16.gmra.mxu0 %v3121
    %v4039 = vpop.f32.mrf.mxu0
    %v4040 = vadd.f32 %v3991, %v4039
    %v4041 = vpop.f32.mrf.mxu0
    %v4042 = vadd.f32 %v3993, %v4041
    %4043 = vmatmul.bf16.gmra.mxu0 %v3122
    %v4044 = vpop.f32.mrf.mxu0
    %v4045 = vadd.f32 %v3996, %v4044
    %v4046 = vpop.f32.mrf.mxu0
    %v4047 = vadd.f32 %v3998, %v4046
    %4048 = vmatmul.bf16.gmra.mxu0 %v3123
    %v4049 = vpop.f32.mrf.mxu0
    %v4050 = vadd.f32 %v4001, %v4049
    %v4051 = vpop.f32.mrf.mxu0
    %v4052 = vadd.f32 %v4003, %v4051
    %4053 = vmatmul.bf16.gmra.mxu0 %v3124
    %v4054 = vpop.f32.mrf.mxu0
    %v4055 = vadd.f32 %v4006, %v4054
    %v4056 = vpop.f32.mrf.mxu0
    %v4057 = vadd.f32 %v4008, %v4056
    %4058 = vmatmul.bf16.gmra.mxu0 %v3125
    %v4059 = vpop.f32.mrf.mxu0
    %v4060 = vadd.f32 %v4011, %v4059
    %v4061 = vpop.f32.mrf.mxu0
    %v4062 = vadd.f32 %v4013, %v4061
    %4063 = vmatmul.bf16.gmra.mxu0 %v3126
    %v4064 = vpop.f32.mrf.mxu0
    %v4065 = vadd.f32 %v4016, %v4064
    %v4066 = vpop.f32.mrf.mxu0
    %v4067 = vadd.f32 %v4018, %v4066
    %4068 = vdwg.mxu0
    %4069 = vmatpush.bf16.msra.mxu0 %v3850
    %4070 = vmatpush.bf16.msra.mxu0 %v3849
    %4071 = vmatpush.bf16.msra.mxu0 %v3848
    %4072 = vmatpush.bf16.msra.mxu0 %v3847
    %4073 = vmatpush.bf16.msra.mxu0 %v3846
    %4074 = vmatpush.bf16.msra.mxu0 %v3845
    %4075 = vmatpush.bf16.msra.mxu0 %v3844
    %4076 = vmatpush.bf16.msra.mxu0 %v3843
    %4077 = vmatmul.bf16.gmra.mxu0 %v3151
    %v4078 = vpop.f32.mrf.mxu0
    %v4079 = vadd.f32 %v4030, %v4078
    %v4080 = vpop.f32.mrf.mxu0
    %v4081 = vadd.f32 %v4032, %v4080
    %4082 = vmatmul.bf16.gmra.mxu0 %v3152
    %v4083 = vpop.f32.mrf.mxu0
    %v4084 = vadd.f32 %v4035, %v4083
    %v4085 = vpop.f32.mrf.mxu0
    %v4086 = vadd.f32 %v4037, %v4085
    %4087 = vmatmul.bf16.gmra.mxu0 %v3153
    %v4088 = vpop.f32.mrf.mxu0
    %v4089 = vadd.f32 %v4040, %v4088
    %v4090 = vpop.f32.mrf.mxu0
    %v4091 = vadd.f32 %v4042, %v4090
    %4092 = vmatmul.bf16.gmra.mxu0 %v3154
    %v4093 = vpop.f32.mrf.mxu0
    %v4094 = vadd.f32 %v4045, %v4093
    %v4095 = vpop.f32.mrf.mxu0
    %v4096 = vadd.f32 %v4047, %v4095
    %4097 = vmatmul.bf16.gmra.mxu0 %v3155
    %v4098 = vpop.f32.mrf.mxu0
    %v4099 = vadd.f32 %v4050, %v4098
    %v4100 = vpop.f32.mrf.mxu0
    %v4101 = vadd.f32 %v4052, %v4100
    %4102 = vmatmul.bf16.gmra.mxu0 %v3156
    %v4103 = vpop.f32.mrf.mxu0
    %v4104 = vadd.f32 %v4055, %v4103
    %v4105 = vpop.f32.mrf.mxu0
    %v4106 = vadd.f32 %v4057, %v4105
    %4107 = vmatmul.bf16.gmra.mxu0 %v3157
    %v4108 = vpop.f32.mrf.mxu0
    %v4109 = vadd.f32 %v4060, %v4108
    %v4110 = vpop.f32.mrf.mxu0
    %v4111 = vadd.f32 %v4062, %v4110
    %4112 = vmatmul.bf16.gmra.mxu0 %v3158
    %v4113 = vpop.f32.mrf.mxu0
    %v4114 = vadd.f32 %v4065, %v4113
    %v4115 = vpop.f32.mrf.mxu0
    %v4116 = vadd.f32 %v4067, %v4115
    %4117 = vdwg.mxu0
    %4118 = vmatpush.bf16.msra.mxu0 %v3858
    %4119 = vmatpush.bf16.msra.mxu0 %v3857
    %4120 = vmatpush.bf16.msra.mxu0 %v3856
    %4121 = vmatpush.bf16.msra.mxu0 %v3855
    %4122 = vmatpush.bf16.msra.mxu0 %v3854
    %4123 = vmatpush.bf16.msra.mxu0 %v3853
    %4124 = vmatpush.bf16.msra.mxu0 %v3852
    %4125 = vmatpush.bf16.msra.mxu0 %v3851
    %4126 = vmatmul.bf16.gmra.mxu0 %v3199
    %v4127 = vpop.f32.mrf.mxu0
    %v4128 = vadd.f32 %v4079, %v4127
    %v4129 = vpop.f32.mrf.mxu0
    %v4130 = vadd.f32 %v4081, %v4129
    %4131 = vmatmul.bf16.gmra.mxu0 %v3200
    %v4132 = vpop.f32.mrf.mxu0
    %v4133 = vadd.f32 %v4084, %v4132
    %v4134 = vpop.f32.mrf.mxu0
    %v4135 = vadd.f32 %v4086, %v4134
    %4136 = vmatmul.bf16.gmra.mxu0 %v3201
    %v4137 = vpop.f32.mrf.mxu0
    %v4138 = vadd.f32 %v4089, %v4137
    %v4139 = vpop.f32.mrf.mxu0
    %v4140 = vadd.f32 %v4091, %v4139
    %4141 = vmatmul.bf16.gmra.mxu0 %v3202
    %v4142 = vpop.f32.mrf.mxu0
    %v4143 = vadd.f32 %v4094, %v4142
    %v4144 = vpop.f32.mrf.mxu0
    %v4145 = vadd.f32 %v4096, %v4144
    %4146 = vmatmul.bf16.gmra.mxu0 %v3203
    %v4147 = vpop.f32.mrf.mxu0
    %v4148 = vadd.f32 %v4099, %v4147
    %v4149 = vpop.f32.mrf.mxu0
    %v4150 = vadd.f32 %v4101, %v4149
    %4151 = vmatmul.bf16.gmra.mxu0 %v3204
    %v4152 = vpop.f32.mrf.mxu0
    %v4153 = vadd.f32 %v4104, %v4152
    %v4154 = vpop.f32.mrf.mxu0
    %v4155 = vadd.f32 %v4106, %v4154
    %4156 = vmatmul.bf16.gmra.mxu0 %v3205
    %v4157 = vpop.f32.mrf.mxu0
    %v4158 = vadd.f32 %v4109, %v4157
    %v4159 = vpop.f32.mrf.mxu0
    %v4160 = vadd.f32 %v4111, %v4159
    %4161 = vmatmul.bf16.gmra.mxu0 %v3206
    %v4162 = vpop.f32.mrf.mxu0
    %v4163 = vadd.f32 %v4114, %v4162
    %v4164 = vpop.f32.mrf.mxu0
    %v4165 = vadd.f32 %v4116, %v4164
    %4166 = vdwg.mxu0
    %4167 = vmatpush.bf16.msra.mxu0 %v3866
    %4168 = vmatpush.bf16.msra.mxu0 %v3865
    %4169 = vmatpush.bf16.msra.mxu0 %v3864
    %4170 = vmatpush.bf16.msra.mxu0 %v3863
    %4171 = vmatpush.bf16.msra.mxu0 %v3862
    %4172 = vmatpush.bf16.msra.mxu0 %v3861
    %4173 = vmatpush.bf16.msra.mxu0 %v3860
    %4174 = vmatpush.bf16.msra.mxu0 %v3859
    %4175 = vmatmul.bf16.gmra.mxu0 %v3231
    %v4176 = vpop.f32.mrf.mxu0
    %v4177 = vadd.f32 %v4128, %v4176
    %v4178 = vpop.f32.mrf.mxu0
    %v4179 = vadd.f32 %v4130, %v4178
    %4180 = vmatmul.bf16.gmra.mxu0 %v3232
    %v4181 = vpop.f32.mrf.mxu0
    %v4182 = vadd.f32 %v4133, %v4181
    %v4183 = vpop.f32.mrf.mxu0
    %v4184 = vadd.f32 %v4135, %v4183
    %4185 = vmatmul.bf16.gmra.mxu0 %v3233
    %v4186 = vpop.f32.mrf.mxu0
    %v4187 = vadd.f32 %v4138, %v4186
    %v4188 = vpop.f32.mrf.mxu0
    %v4189 = vadd.f32 %v4140, %v4188
    %4190 = vmatmul.bf16.gmra.mxu0 %v3234
    %v4191 = vpop.f32.mrf.mxu0
    %v4192 = vadd.f32 %v4143, %v4191
    %v4193 = vpop.f32.mrf.mxu0
    %v4194 = vadd.f32 %v4145, %v4193
    %4195 = vmatmul.bf16.gmra.mxu0 %v3235
    %v4196 = vpop.f32.mrf.mxu0
    %v4197 = vadd.f32 %v4148, %v4196
    %v4198 = vpop.f32.mrf.mxu0
    %v4199 = vadd.f32 %v4150, %v4198
    %4200 = vmatmul.bf16.gmra.mxu0 %v3236
    %v4201 = vpop.f32.mrf.mxu0
    %v4202 = vadd.f32 %v4153, %v4201
    %v4203 = vpop.f32.mrf.mxu0
    %v4204 = vadd.f32 %v4155, %v4203
    %4205 = vmatmul.bf16.gmra.mxu0 %v3237
    %v4206 = vpop.f32.mrf.mxu0
    %v4207 = vadd.f32 %v4158, %v4206
    %v4208 = vpop.f32.mrf.mxu0
    %v4209 = vadd.f32 %v4160, %v4208
    %4210 = vmatmul.bf16.gmra.mxu0 %v3238
    %v4211 = vpop.f32.mrf.mxu0
    %v4212 = vadd.f32 %v4163, %v4211
    %v4213 = vpop.f32.mrf.mxu0
    %v4214 = vadd.f32 %v4165, %v4213
    %4215 = vdwg.mxu0
    %4216 = vmatpush.bf16.msra.mxu0 %v3874
    %4217 = vmatpush.bf16.msra.mxu0 %v3873
    %4218 = vmatpush.bf16.msra.mxu0 %v3872
    %4219 = vmatpush.bf16.msra.mxu0 %v3871
    %4220 = vmatpush.bf16.msra.mxu0 %v3870
    %4221 = vmatpush.bf16.msra.mxu0 %v3869
    %4222 = vmatpush.bf16.msra.mxu0 %v3868
    %4223 = vmatpush.bf16.msra.mxu0 %v3867
    %4224 = vmatmul.bf16.gmra.mxu0 %v3263
    %v4225 = vpop.f32.mrf.mxu0
    %v4226 = vadd.f32 %v4177, %v4225
    %v4227 = vpop.f32.mrf.mxu0
    %v4228 = vadd.f32 %v4179, %v4227
    %4229 = vmatmul.bf16.gmra.mxu0 %v3264
    %v4230 = vpop.f32.mrf.mxu0
    %v4231 = vadd.f32 %v4182, %v4230
    %v4232 = vpop.f32.mrf.mxu0
    %v4233 = vadd.f32 %v4184, %v4232
    %4234 = vmatmul.bf16.gmra.mxu0 %v3265
    %v4235 = vpop.f32.mrf.mxu0
    %v4236 = vadd.f32 %v4187, %v4235
    %v4237 = vpop.f32.mrf.mxu0
    %v4238 = vadd.f32 %v4189, %v4237
    %4239 = vmatmul.bf16.gmra.mxu0 %v3266
    %v4240 = vpop.f32.mrf.mxu0
    %v4241 = vadd.f32 %v4192, %v4240
    %v4242 = vpop.f32.mrf.mxu0
    %v4243 = vadd.f32 %v4194, %v4242
    %4244 = vmatmul.bf16.gmra.mxu0 %v3267
    %v4245 = vpop.f32.mrf.mxu0
    %v4246 = vadd.f32 %v4197, %v4245
    %v4247 = vpop.f32.mrf.mxu0
    %v4248 = vadd.f32 %v4199, %v4247
    %4249 = vmatmul.bf16.gmra.mxu0 %v3268
    %v4250 = vpop.f32.mrf.mxu0
    %v4251 = vadd.f32 %v4202, %v4250
    %v4252 = vpop.f32.mrf.mxu0
    %v4253 = vadd.f32 %v4204, %v4252
    %4254 = vmatmul.bf16.gmra.mxu0 %v3269
    %v4255 = vpop.f32.mrf.mxu0
    %v4256 = vadd.f32 %v4207, %v4255
    %v4257 = vpop.f32.mrf.mxu0
    %v4258 = vadd.f32 %v4209, %v4257
    %4259 = vmatmul.bf16.gmra.mxu0 %v3270
    %v4260 = vpop.f32.mrf.mxu0
    %v4261 = vadd.f32 %v4212, %v4260
    %v4262 = vpop.f32.mrf.mxu0
    %v4263 = vadd.f32 %v4214, %v4262
    %4264 = vdwg.mxu0
    %4265 = vmatpush.bf16.msra.mxu0 %v3882
    %4266 = vmatpush.bf16.msra.mxu0 %v3881
    %4267 = vmatpush.bf16.msra.mxu0 %v3880
    %4268 = vmatpush.bf16.msra.mxu0 %v3879
    %4269 = vmatpush.bf16.msra.mxu0 %v3878
    %4270 = vmatpush.bf16.msra.mxu0 %v3877
    %4271 = vmatpush.bf16.msra.mxu0 %v3876
    %4272 = vmatpush.bf16.msra.mxu0 %v3875
    %4273 = vmatmul.bf16.gmra.mxu0 %v3311
    %v4274 = vpop.f32.mrf.mxu0
    %v4275 = vadd.f32 %v4226, %v4274
    %v4276 = vpop.f32.mrf.mxu0
    %v4277 = vadd.f32 %v4228, %v4276
    %4278 = vmatmul.bf16.gmra.mxu0 %v3312
    %v4279 = vpop.f32.mrf.mxu0
    %v4280 = vadd.f32 %v4231, %v4279
    %v4281 = vpop.f32.mrf.mxu0
    %v4282 = vadd.f32 %v4233, %v4281
    %4283 = vmatmul.bf16.gmra.mxu0 %v3313
    %v4284 = vpop.f32.mrf.mxu0
    %v4285 = vadd.f32 %v4236, %v4284
    %v4286 = vpop.f32.mrf.mxu0
    %v4287 = vadd.f32 %v4238, %v4286
    %4288 = vmatmul.bf16.gmra.mxu0 %v3314
    %v4289 = vpop.f32.mrf.mxu0
    %v4290 = vadd.f32 %v4241, %v4289
    %v4291 = vpop.f32.mrf.mxu0
    %v4292 = vadd.f32 %v4243, %v4291
    %4293 = vmatmul.bf16.gmra.mxu0 %v3315
    %v4294 = vpop.f32.mrf.mxu0
    %v4295 = vadd.f32 %v4246, %v4294
    %v4296 = vpop.f32.mrf.mxu0
    %v4297 = vadd.f32 %v4248, %v4296
    %4298 = vmatmul.bf16.gmra.mxu0 %v3316
    %v4299 = vpop.f32.mrf.mxu0
    %v4300 = vadd.f32 %v4251, %v4299
    %v4301 = vpop.f32.mrf.mxu0
    %v4302 = vadd.f32 %v4253, %v4301
    %4303 = vmatmul.bf16.gmra.mxu0 %v3317
    %v4304 = vpop.f32.mrf.mxu0
    %v4305 = vadd.f32 %v4256, %v4304
    %v4306 = vpop.f32.mrf.mxu0
    %v4307 = vadd.f32 %v4258, %v4306
    %4308 = vmatmul.bf16.gmra.mxu0 %v3318
    %v4309 = vpop.f32.mrf.mxu0
    %v4310 = vadd.f32 %v4261, %v4309
    %v4311 = vpop.f32.mrf.mxu0
    %v4312 = vadd.f32 %v4263, %v4311
    %4313 = vdwg.mxu0
    %4314 = vmatpush.bf16.msra.mxu0 %v3890
    %4315 = vmatpush.bf16.msra.mxu0 %v3889
    %4316 = vmatpush.bf16.msra.mxu0 %v3888
    %4317 = vmatpush.bf16.msra.mxu0 %v3887
    %4318 = vmatpush.bf16.msra.mxu0 %v3886
    %4319 = vmatpush.bf16.msra.mxu0 %v3885
    %4320 = vmatpush.bf16.msra.mxu0 %v3884
    %4321 = vmatpush.bf16.msra.mxu0 %v3883
    %4322 = vmatmul.bf16.gmra.mxu0 %v3343
    %v4323 = vpop.f32.mrf.mxu0
    %v4324 = vadd.f32 %v4275, %v4323
    %v4325 = vpop.f32.mrf.mxu0
    %v4326 = vadd.f32 %v4277, %v4325
    %4327 = vmatmul.bf16.gmra.mxu0 %v3344
    %v4328 = vpop.f32.mrf.mxu0
    %v4329 = vadd.f32 %v4280, %v4328
    %v4330 = vpop.f32.mrf.mxu0
    %v4331 = vadd.f32 %v4282, %v4330
    %4332 = vmatmul.bf16.gmra.mxu0 %v3345
    %v4333 = vpop.f32.mrf.mxu0
    %v4334 = vadd.f32 %v4285, %v4333
    %v4335 = vpop.f32.mrf.mxu0
    %v4336 = vadd.f32 %v4287, %v4335
    %4337 = vmatmul.bf16.gmra.mxu0 %v3346
    %v4338 = vpop.f32.mrf.mxu0
    %v4339 = vadd.f32 %v4290, %v4338
    %v4340 = vpop.f32.mrf.mxu0
    %v4341 = vadd.f32 %v4292, %v4340
    %4342 = vmatmul.bf16.gmra.mxu0 %v3347
    %v4343 = vpop.f32.mrf.mxu0
    %v4344 = vadd.f32 %v4295, %v4343
    %v4345 = vpop.f32.mrf.mxu0
    %v4346 = vadd.f32 %v4297, %v4345
    %4347 = vmatmul.bf16.gmra.mxu0 %v3348
    %v4348 = vpop.f32.mrf.mxu0
    %v4349 = vadd.f32 %v4300, %v4348
    %v4350 = vpop.f32.mrf.mxu0
    %v4351 = vadd.f32 %v4302, %v4350
    %4352 = vmatmul.bf16.gmra.mxu0 %v3349
    %v4353 = vpop.f32.mrf.mxu0
    %v4354 = vadd.f32 %v4305, %v4353
    %v4355 = vpop.f32.mrf.mxu0
    %v4356 = vadd.f32 %v4307, %v4355
    %4357 = vmatmul.bf16.gmra.mxu0 %v3350
    %v4358 = vpop.f32.mrf.mxu0
    %v4359 = vadd.f32 %v4310, %v4358
    %v4360 = vpop.f32.mrf.mxu0
    %v4361 = vadd.f32 %v4312, %v4360
    %4362 = vdwg.mxu0
    %4363 = vmatpush.bf16.msra.mxu0 %v3898
    %4364 = vmatpush.bf16.msra.mxu0 %v3897
    %4365 = vmatpush.bf16.msra.mxu0 %v3896
    %4366 = vmatpush.bf16.msra.mxu0 %v3895
    %4367 = vmatpush.bf16.msra.mxu0 %v3894
    %4368 = vmatpush.bf16.msra.mxu0 %v3893
    %4369 = vmatpush.bf16.msra.mxu0 %v3892
    %4370 = vmatpush.bf16.msra.mxu0 %v3891
    %4371 = vmatmul.bf16.gmra.mxu0 %v3375
    %v4372 = vpop.f32.mrf.mxu0
    %v4373 = vadd.f32 %v4324, %v4372
    %v4374 = vpop.f32.mrf.mxu0
    %v4375 = vadd.f32 %v4326, %v4374
    %4376 = vmatmul.bf16.gmra.mxu0 %v3376
    %v4377 = vpop.f32.mrf.mxu0
    %v4378 = vadd.f32 %v4329, %v4377
    %v4379 = vpop.f32.mrf.mxu0
    %v4380 = vadd.f32 %v4331, %v4379
    %4381 = vmatmul.bf16.gmra.mxu0 %v3377
    %v4382 = vpop.f32.mrf.mxu0
    %v4383 = vadd.f32 %v4334, %v4382
    %v4384 = vpop.f32.mrf.mxu0
    %v4385 = vadd.f32 %v4336, %v4384
    %4386 = vmatmul.bf16.gmra.mxu0 %v3378
    %v4387 = vpop.f32.mrf.mxu0
    %v4388 = vadd.f32 %v4339, %v4387
    %v4389 = vpop.f32.mrf.mxu0
    %v4390 = vadd.f32 %v4341, %v4389
    %4391 = vmatmul.bf16.gmra.mxu0 %v3379
    %v4392 = vpop.f32.mrf.mxu0
    %v4393 = vadd.f32 %v4344, %v4392
    %v4394 = vpop.f32.mrf.mxu0
    %v4395 = vadd.f32 %v4346, %v4394
    %4396 = vmatmul.bf16.gmra.mxu0 %v3380
    %v4397 = vpop.f32.mrf.mxu0
    %v4398 = vadd.f32 %v4349, %v4397
    %v4399 = vpop.f32.mrf.mxu0
    %v4400 = vadd.f32 %v4351, %v4399
    %4401 = vmatmul.bf16.gmra.mxu0 %v3381
    %v4402 = vpop.f32.mrf.mxu0
    %v4403 = vadd.f32 %v4354, %v4402
    %v4404 = vpop.f32.mrf.mxu0
    %v4405 = vadd.f32 %v4356, %v4404
    %4406 = vmatmul.bf16.gmra.mxu0 %v3382
    %v4407 = vpop.f32.mrf.mxu0
    %v4408 = vadd.f32 %v4359, %v4407
    %v4409 = vpop.f32.mrf.mxu0
    %v4410 = vadd.f32 %v4361, %v4409
    %4411 = vdwg.mxu0
    %v4412 = vld [vmem:[%s3] sm:$0xf]
    %v4413 = vld [vmem:[%s3 + $0x8] sm:$0xf]
    %v4414 = vld [vmem:[%s3 + $0x10] sm:$0xf]
    %v4415 = vld [vmem:[%s3 + $0x18] sm:$0xf]
    %v4416 = vld [vmem:[%s3 + $0x20] sm:$0xf]
    %v4417 = vld [vmem:[%s3 + $0x28] sm:$0xf]
    %v4418 = vld [vmem:[%s3 + $0x30] sm:$0xf]
    %v4419 = vld [vmem:[%s3 + $0x38] sm:$0xf]
    %v4420 = vld [vmem:[%s3 + $0x48] sm:$0xf]
    %v4421 = vld [vmem:[%s3 + $0x50] sm:$0xf]
    %v4422 = vld [vmem:[%s3 + $0x58] sm:$0xf]
    %v4423 = vld [vmem:[%s3 + $0x60] sm:$0xf]
    %v4424 = vld [vmem:[%s3 + $0x68] sm:$0xf]
    %v4425 = vld [vmem:[%s3 + $0x70] sm:$0xf]
    %v4426 = vld [vmem:[%s3 + $0x78] sm:$0xf]
    %v4427 = vld [vmem:[%s3 + $0x80] sm:$0xf]
    %v4428 = vunpack.c.l.bf16 %v4412
    %v4429 = vunpack.c.l.bf16 %v4413
    %v4430 = vunpack.c.l.bf16 %v4414
    %v4431 = vunpack.c.l.bf16 %v4415
    %v4432 = vunpack.c.l.bf16 %v4416
    %v4433 = vunpack.c.l.bf16 %v4417
    %v4434 = vunpack.c.l.bf16 %v4418
    %v4435 = vunpack.c.l.bf16 %v4419
    %v4436 = vunpack.c.l.bf16 %v4420
    %v4437 = vunpack.c.l.bf16 %v4421
    %v4438 = vunpack.c.l.bf16 %v4422
    %v4439 = vunpack.c.l.bf16 %v4423
    %v4440 = vunpack.c.l.bf16 %v4424
    %v4441 = vunpack.c.l.bf16 %v4425
    %v4442 = vunpack.c.l.bf16 %v4426
    %v4443 = vunpack.c.l.bf16 %v4427
    %4460 = vrot.lane.b32.xlu0 %v4428, 2
    %v4461 = vpop.permute.xlu0 %4460
    %4462 = vrot.lane.b32.xlu0 %v4429, 2
    %v4463 = vpop.permute.xlu0 %4462
    %4464 = vrot.lane.b32.xlu0 %v4430, 2
    %v4465 = vpop.permute.xlu0 %4464
    %4466 = vrot.lane.b32.xlu0 %v4431, 2
    %v4467 = vpop.permute.xlu0 %4466
    %4468 = vrot.lane.b32.xlu0 %v4432, 2
    %v4469 = vpop.permute.xlu0 %4468
    %4470 = vrot.lane.b32.xlu0 %v4433, 2
    %v4471 = vpop.permute.xlu0 %4470
    %4472 = vrot.lane.b32.xlu0 %v4434, 2
    %v4473 = vpop.permute.xlu0 %4472
    %4474 = vrot.lane.b32.xlu0 %v4435, 2
    %v4475 = vpop.permute.xlu0 %4474
    %4476 = vrot.lane.b32.xlu0 %v4436, 2
    %v4477 = vpop.permute.xlu0 %4476
    %4478 = vrot.lane.b32.xlu0 %v4437, 2
    %v4479 = vpop.permute.xlu0 %4478
    %4480 = vrot.lane.b32.xlu0 %v4438, 2
    %v4481 = vpop.permute.xlu0 %4480
    %4482 = vrot.lane.b32.xlu0 %v4439, 2
    %v4483 = vpop.permute.xlu0 %4482
    %4484 = vrot.lane.b32.xlu0 %v4440, 2
    %v4485 = vpop.permute.xlu0 %4484
    %4486 = vrot.lane.b32.xlu0 %v4441, 2
    %v4487 = vpop.permute.xlu0 %4486
    %4488 = vrot.lane.b32.xlu0 %v4442, 2
    %v4489 = vpop.permute.xlu0 %4488
    %4490 = vrot.lane.b32.xlu0 %v4443, 2
    %v4491 = vpop.permute.xlu0 %4490
    %vm4508 = vcmask 15360
    %v4509 = vsel %vm4508, 0.0, %v4461
    %v4510 = vsel %vm4508, 0.0, %v4463
    %v4511 = vsel %vm4508, 0.0, %v4465
    %v4512 = vsel %vm4508, 0.0, %v4467
    %v4513 = vsel %vm4508, 0.0, %v4469
    %v4514 = vsel %vm4508, 0.0, %v4471
    %v4515 = vsel %vm4508, 0.0, %v4473
    %v4516 = vsel %vm4508, 0.0, %v4475
    %v4517 = vsel %vm4508, 0.0, %v4477
    %v4518 = vsel %vm4508, 0.0, %v4479
    %v4519 = vsel %vm4508, 0.0, %v4481
    %v4520 = vsel %vm4508, 0.0, %v4483
    %v4521 = vsel %vm4508, 0.0, %v4485
    %v4522 = vsel %vm4508, 0.0, %v4487
    %v4523 = vsel %vm4508, 0.0, %v4489
    %v4524 = vsel %vm4508, 0.0, %v4491
    %vm4525 = vcmask 48128
    %v4526 = vsel %vm4525, %v4509, 0.0
    %v4527 = vsel %vm4525, %v4510, 0.0
    %v4528 = vsel %vm4525, %v4511, 0.0
    %v4529 = vsel %vm4525, %v4512, 0.0
    %v4530 = vsel %vm4525, %v4513, 0.0
    %v4531 = vsel %vm4525, %v4514, 0.0
    %v4532 = vsel %vm4525, %v4515, 0.0
    %v4533 = vsel %vm4525, %v4516, 0.0
    %v4534 = vsel %vm4525, %v4517, 0.0
    %v4535 = vsel %vm4525, %v4518, 0.0
    %v4536 = vsel %vm4525, %v4519, 0.0
    %v4537 = vsel %vm4525, %v4520, 0.0
    %v4538 = vsel %vm4525, %v4521, 0.0
    %v4539 = vsel %vm4525, %v4522, 0.0
    %v4540 = vsel %vm4525, %v4523, 0.0
    %v4541 = vsel %vm4525, %v4524, 0.0
    %v4542 = vadd.f32 %v4373, %v4526
    %v4543 = vadd.f32 %v4375, %v4527
    %v4544 = vadd.f32 %v4378, %v4528
    %v4545 = vadd.f32 %v4380, %v4529
    %v4546 = vadd.f32 %v4383, %v4530
    %v4547 = vadd.f32 %v4385, %v4531
    %v4548 = vadd.f32 %v4388, %v4532
    %v4549 = vadd.f32 %v4390, %v4533
    %v4550 = vadd.f32 %v4393, %v4534
    %v4551 = vadd.f32 %v4395, %v4535
    %v4552 = vadd.f32 %v4398, %v4536
    %v4553 = vadd.f32 %v4400, %v4537
    %v4554 = vadd.f32 %v4403, %v4538
    %v4555 = vadd.f32 %v4405, %v4539
    %v4556 = vadd.f32 %v4408, %v4540
    %v4557 = vadd.f32 %v4410, %v4541
    %v4558 = vmax.f32 %v4542, 0.0
    %v4559 = vmax.f32 %v4543, 0.0
    %v4560 = vmax.f32 %v4544, 0.0
    %v4561 = vmax.f32 %v4545, 0.0
    %v4562 = vmax.f32 %v4546, 0.0
    %v4563 = vmax.f32 %v4547, 0.0
    %v4564 = vmax.f32 %v4548, 0.0
    %v4565 = vmax.f32 %v4549, 0.0
    %v4566 = vmax.f32 %v4550, 0.0
    %v4567 = vmax.f32 %v4551, 0.0
    %v4568 = vmax.f32 %v4552, 0.0
    %v4569 = vmax.f32 %v4553, 0.0
    %v4570 = vmax.f32 %v4554, 0.0
    %v4571 = vmax.f32 %v4555, 0.0
    %v4572 = vmax.f32 %v4556, 0.0
    %v4573 = vmax.f32 %v4557, 0.0
    %v4574 = vpack.c.bf16 %v4558, %v4558
    %v4575 = vpack.c.bf16 %v4559, %v4559
    %v4576 = vpack.c.bf16 %v4560, %v4560
    %v4577 = vpack.c.bf16 %v4561, %v4561
    %v4578 = vpack.c.bf16 %v4562, %v4562
    %v4579 = vpack.c.bf16 %v4563, %v4563
    %v4580 = vpack.c.bf16 %v4564, %v4564
    %v4581 = vpack.c.bf16 %v4565, %v4565
    %v4582 = vpack.c.bf16 %v4566, %v4566
    %v4583 = vpack.c.bf16 %v4567, %v4567
    %v4584 = vpack.c.bf16 %v4568, %v4568
    %v4585 = vpack.c.bf16 %v4569, %v4569
    %v4586 = vpack.c.bf16 %v4570, %v4570
    %v4587 = vpack.c.bf16 %v4571, %v4571
    %v4588 = vpack.c.bf16 %v4572, %v4572
    %v4589 = vpack.c.bf16 %v4573, %v4573
    %4590 = vst [vmem:[#allocation6] sm:$0xf] %v4574
    %4591 = vst [vmem:[#allocation6 + $0x4] sm:$0xf] %v4575
    %4592 = vst [vmem:[#allocation6 + $0x8] sm:$0xf] %v4576
    %4593 = vst [vmem:[#allocation6 + $0xc] sm:$0xf] %v4577
    %4594 = vst [vmem:[#allocation6 + $0x10] sm:$0xf] %v4578
    %4595 = vst [vmem:[#allocation6 + $0x14] sm:$0xf] %v4579
    %4596 = vst [vmem:[#allocation6 + $0x18] sm:$0xf] %v4580
    %4597 = vst [vmem:[#allocation6 + $0x1c] sm:$0xf] %v4581
    %4598 = vst [vmem:[#allocation6 + $0x20] sm:$0xf] %v4582
    %4599 = vst [vmem:[#allocation6 + $0x24] sm:$0xf] %v4583
    %4600 = vst [vmem:[#allocation6 + $0x28] sm:$0xf] %v4584
    %4601 = vst [vmem:[#allocation6 + $0x2c] sm:$0xf] %v4585
    %4602 = vst [vmem:[#allocation6 + $0x30] sm:$0xf] %v4586
    %4603 = vst [vmem:[#allocation6 + $0x34] sm:$0xf] %v4587
    %4604 = vst [vmem:[#allocation6 + $0x38] sm:$0xf] %v4588
    %4605 = vst [vmem:[#allocation6 + $0x3c] sm:$0xf] %v4589
    // Predicated region
    $region38: #{tpu_custom_call.1} parent=1 // pred_check
      _
    $region39: #{tpu_custom_call.1} parent=1 // pred_check_branch
      %4607 = sbr.rel (0) target = $region41
    $region40: #{tpu_custom_call.1} parent=1 // pred_region
      %4609 = vsyncadd [#allocation5], 0
      %s4610 = sshll.u32 [#allocation6], 4
      %s4611 = int_to_ptr.vmem [resolvable:$true] %s4610
      %s4612 = sshll.u32 %s8, 4
      %s4613 = int_to_ptr.hbm [resolvable:$true] %s4612
      %4618 = dma.vmem_to_hbm [thread:$0]  %s4611, 1024, %s4613, [#allocation5], 64, 64, 4
    $region41: #{tpu_custom_call.1} parent=1 // pred_fallthru
      _
    // Predicated region
    $region42: #{tpu_custom_call.1} parent=1 // pred_check
      _
    $region43: #{tpu_custom_call.1} parent=1 // pred_check_branch
      %4620 = sbr.rel (0) target = $region45
    $region44: #{tpu_custom_call.1} parent=1 // pred_region
      %4622 = dma.done [#allocation5], 1024
    $region45: #{tpu_custom_call.1} parent=1 // pred_fallthru
      _
    %4623 = vsyncpa [#allocation4], 1
    %4624 = vsyncpa [#allocation5], 1

</llo_original>
